<compile_context>
chip_gen: v5e
topology: v5e:2x2
jax: 0.10.0
libtpu: 0.0.40
codegen_flags: <defaults>
</compile_context>

<pallas_src>
import functools

import jax
import jax.numpy as jnp
from jax.experimental import pallas as pl
from jax.experimental.pallas import tpu as pltpu


# --------------------------------------------------------------------------
# Fused Linear (+ optional elementwise pre-multiply, + optional ReLU) kernel.
#   y = act((x [* x_j]) @ W_t + b)      W_t is (K, N)  (already transposed)
# Grid: (M//TM, N//TN, K//TK); K is the reduction axis ("arbitrary").
# --------------------------------------------------------------------------
def _linear_kernel(*refs, apply_relu: bool, fuse_mul: bool):
    if fuse_mul:
        x_ref, xj_ref, w_ref, b_ref, o_ref, acc_ref = refs
    else:
        x_ref, w_ref, b_ref, o_ref, acc_ref = refs
        xj_ref = None

    k = pl.program_id(2)
    nk = pl.num_programs(2)

    @pl.when(k == 0)
    def _init():
        acc_ref[...] = jnp.zeros_like(acc_ref)

    xv = x_ref[...]
    if fuse_mul:
        xv = xv * xj_ref[...]

    # bf16 MXU operands, f32 accumulation.
    acc_ref[...] += jnp.dot(
        xv.astype(jnp.bfloat16),
        w_ref[...].astype(jnp.bfloat16),
        preferred_element_type=jnp.float32,
    )

    @pl.when(k == nk - 1)
    def _finalize():
        y = acc_ref[...] + b_ref[...]          # (TM,TN) + (1,TN)
        if apply_relu:
            y = jnp.maximum(y, 0.0)
        o_ref[...] = y.astype(o_ref.dtype)


def _pick_tile(dim: int, pref: int) -> int:
    """Use the preferred tile if it evenly divides `dim`, else the full dim."""
    return pref if (dim >= pref and dim % pref == 0) else dim


def _linear_pallas(x, w_t, b, *, x_j=None, apply_relu: bool):
    """x: (M,K) f32, w_t: (K,N) f32 (pre-transposed), b: (N,) f32."""
    M, K = x.shape
    Kw, N = w_t.shape
    assert K == Kw

    TM = _pick_tile(M, 256)
    TN = _pick_tile(N, 256)
    TK = _pick_tile(K, 512)
    grid = (M // TM, N // TN, K // TK)

    b2 = b.reshape(1, N)

    in_specs = [pl.BlockSpec((TM, TK), lambda i, j, k: (i, k))]
    inputs = [x]
    if x_j is not None:
        in_specs.append(pl.BlockSpec((TM, TK), lambda i, j, k: (i, k)))
        inputs.append(x_j)
    in_specs += [
        pl.BlockSpec((TK, TN), lambda i, j, k: (k, j)),
        pl.BlockSpec((1, TN), lambda i, j, k: (0, j)),
    ]
    inputs += [w_t, b2]

    kernel = functools.partial(
        _linear_kernel, apply_relu=apply_relu, fuse_mul=x_j is not None
    )

    return pl.pallas_call(
        kernel,
        out_shape=jax.ShapeDtypeStruct((M, N), jnp.float32),
        grid_spec=pltpu.PrefetchScalarGridSpec(
            num_scalar_prefetch=0,
            grid=grid,
            in_specs=in_specs,
            out_specs=pl.BlockSpec((TM, TN), lambda i, j, k: (i, j)),
            scratch_shapes=[pltpu.VMEM((TM, TN), jnp.float32)],
        ),
        compiler_params=pltpu.CompilerParams(
            dimension_semantics=("parallel", "parallel", "arbitrary"),
            vmem_limit_bytes=64 * 1024 * 1024,
        ),
    )(*inputs)


# --------------------------------------------------------------------------
# MLP forward (inference).  params = [(W_l (out,in), b_l (out,)), ...]
# --------------------------------------------------------------------------
def mlp_forward(params, x, x_j=None):
    n = len(params)
    h = x
    for idx, (w, b) in enumerate(params):
        w_t = jnp.transpose(w)                      # (in, out), once, outside kernel
        is_last = idx == n - 1
        h = _linear_pallas(
            h, w_t, b,
            x_j=(x_j if idx == 0 else None),        # fuse x*x_j into first layer
            apply_relu=not is_last,
        )
        # TODO(synk): F.dropout in training mode not implemented (eval-mode
        # forward => identity); could be added with pltpu.prng_seed /
        # pltpu.prng_random_bits inside the finalize phase.
    return h


# --------------------------------------------------------------------------
# Pure-JAX f32 reference.
# --------------------------------------------------------------------------
def _reference(params, x, x_j=None):
    h = x if x_j is None else x * x_j
    for idx, (w, b) in enumerate(params):
        h = h @ w.T + b
        if idx < len(params) - 1:
            h = jnp.maximum(h, 0.0)
    return h


def _init_linear(key, fan_in, fan_out):
    kw, kb = jax.random.split(key)
    bound = 1.0 / float(fan_in) ** 0.5
    w = jax.random.uniform(kw, (fan_out, fan_in), minval=-bound, maxval=bound,
                           dtype=jnp.float32)
    b = jax.random.uniform(kb, (fan_out,), minval=-bound, maxval=bound,
                           dtype=jnp.float32)
    return w, b


if __name__ == "__main__":
    key = jax.random.PRNGKey(0)

    # Small, tile-friendly shapes: batch=256, in=128, hidden=256, out=128,
    # num_layers=3 (Linear-ReLU-Linear-ReLU-Linear with dropout no-op in eval).
    batch, in_ch, hid_ch, out_ch, num_layers = 256, 128, 256, 128, 3

    k_x, k_xj, *k_layers = jax.random.split(key, 2 + num_layers)

    x = jax.random.normal(k_x, (batch, in_ch), dtype=jnp.float32)
    x_j = jax.random.normal(k_xj, (batch, in_ch), dtype=jnp.float32)

    dims = [in_ch] + [hid_ch] * (num_layers - 1) + [out_ch]
    params = [_init_linear(k_layers[i], dims[i], dims[i + 1])
              for i in range(num_layers)]

    fwd = jax.jit(lambda p, a, aj: mlp_forward(p, a, aj))
    out = jax.block_until_ready(fwd(params, x, x_j))

    ref = _reference(params, x, x_j)
    assert out.shape == (batch, out_ch), out.shape
    # bf16 MXU operands => loosened tolerance vs the f32 reference.
    assert jnp.allclose(out, ref, atol=3e-2, rtol=3e-2), (
        float(jnp.max(jnp.abs(out - ref))))

    print("KERNEL_OK")
</pallas_src>

<mosaic_0001>
module attributes {stable_mosaic.version = 11 : i64} {
  func.func @_linear_kernel(%arg0: i32, %arg1: i32, %arg2: i32, %arg3: memref<256x128xf32, #tpu.memory_space<vmem>>, %arg4: memref<256x128xf32, #tpu.memory_space<vmem>>, %arg5: memref<128x256xf32, #tpu.memory_space<vmem>>, %arg6: memref<1x256xf32, #tpu.memory_space<vmem>>, %arg7: memref<256x256xf32, #tpu.memory_space<vmem>>, %arg8: memref<256x256xf32, #tpu.memory_space<vmem>>) attributes {dimension_semantics = [#tpu.dimension_semantics<parallel>, #tpu.dimension_semantics<parallel>, #tpu.dimension_semantics<arbitrary>], iteration_bounds = array<i64: 1, 1, 1>, scalar_prefetch = 0 : i64, scratch_operands = 1 : i64, tpu.core_type = #tpu.core_type<tc>, window_params = [{transform_indices = @transform_0, window_bounds = array<i64: 256, 128>}, {transform_indices = @transform_1, window_bounds = array<i64: 256, 128>}, {transform_indices = @transform_2, window_bounds = array<i64: 128, 256>}, {transform_indices = @transform_3, window_bounds = array<i64: 1, 256>}, {transform_indices = @transform_4, window_bounds = array<i64: 256, 256>}]} {
    %c0_i32 = arith.constant 0 : i32
    %0 = arith.cmpi eq, %arg2, %c0_i32 : i32
    %1 = arith.extui %0 : i1 to i32
    %c0_i32_0 = arith.constant 0 : i32
    %2 = arith.cmpi ne, %1, %c0_i32_0 : i32
    scf.if %2 {
      %cst_12 = arith.constant 0.000000e+00 : f32
      %16 = vector.broadcast %cst_12 : f32 to vector<256x256xf32>
      %c0_13 = arith.constant 0 : index
      %c0_14 = arith.constant 0 : index
      %17 = vector.load %arg8[%c0_13, %c0_14] : memref<256x256xf32, #tpu.memory_space<vmem>>, vector<256x256xf32>
      tpu.vector_store %arg8[%c0_13, %c0_14], %16 {strides = array<i32>} : memref<256x256xf32, #tpu.memory_space<vmem>>, vector<256x256xf32>,
    } else {
    }
    %c0 = arith.constant 0 : index
    %c0_1 = arith.constant 0 : index
    %3 = vector.load %arg3[%c0, %c0_1] : memref<256x128xf32, #tpu.memory_space<vmem>>, vector<256x128xf32>
    %c0_2 = arith.constant 0 : index
    %c0_3 = arith.constant 0 : index
    %4 = vector.load %arg4[%c0_2, %c0_3] : memref<256x128xf32, #tpu.memory_space<vmem>>, vector<256x128xf32>
    %5 = arith.mulf %3, %4 : vector<256x128xf32>
    %c0_4 = arith.constant 0 : index
    %c0_5 = arith.constant 0 : index
    %6 = vector.load %arg8[%c0_4, %c0_5] : memref<256x256xf32, #tpu.memory_space<vmem>>, vector<256x256xf32>
    %7 = arith.truncf %5 : vector<256x128xf32> to vector<256x128xbf16>
    %c0_6 = arith.constant 0 : index
    %c0_7 = arith.constant 0 : index
    %8 = vector.load %arg5[%c0_6, %c0_7] : memref<128x256xf32, #tpu.memory_space<vmem>>, vector<128x256xf32>
    %9 = arith.truncf %8 : vector<128x256xf32> to vector<128x256xbf16>
    %cst = arith.constant dense<0.000000e+00> : vector<256x256xf32>
    %10 = tpu.matmul %7, %9, %cst {dimension_numbers = #tpu.dot_dimension_numbers<[1], [0], [0], [1], [0, 0, 1, 1], [], []>} : vector<256x128xbf16>, vector<128x256xbf16>, vector<256x256xf32> -> vector<256x256xf32>
    %11 = arith.addf %6, %10 : vector<256x256xf32>
    %c0_8 = arith.constant 0 : index
    %c0_9 = arith.constant 0 : index
    %12 = vector.load %arg8[%c0_8, %c0_9] : memref<256x256xf32, #tpu.memory_space<vmem>>, vector<256x256xf32>
    tpu.vector_store %arg8[%c0_8, %c0_9], %11 {strides = array<i32>} : memref<256x256xf32, #tpu.memory_space<vmem>>, vector<256x256xf32>,
    %c0_i32_10 = arith.constant 0 : i32
    %13 = arith.cmpi eq, %arg2, %c0_i32_10 : i32
    %14 = arith.extui %13 : i1 to i32
    %c0_i32_11 = arith.constant 0 : i32
    %15 = arith.cmpi ne, %14, %c0_i32_11 : i32
    scf.if %15 {
      %c0_12 = arith.constant 0 : index
      %c0_13 = arith.constant 0 : index
      %16 = vector.load %arg8[%c0_12, %c0_13] : memref<256x256xf32, #tpu.memory_space<vmem>>, vector<256x256xf32>
      %c0_14 = arith.constant 0 : index
      %c0_15 = arith.constant 0 : index
      %17 = vector.load %arg6[%c0_14, %c0_15] : memref<1x256xf32, #tpu.memory_space<vmem>>, vector<1x256xf32>
      %18 = vector.broadcast %17 : vector<1x256xf32> to vector<256x256xf32>
      %19 = arith.addf %16, %18 : vector<256x256xf32>
      %cst_16 = arith.constant 0.000000e+00 : f32
      %20 = vector.broadcast %cst_16 : f32 to vector<256x256xf32>
      %21 = arith.maximumf %19, %20 : vector<256x256xf32>
      %c0_17 = arith.constant 0 : index
      %c0_18 = arith.constant 0 : index
      %22 = vector.load %arg7[%c0_17, %c0_18] : memref<256x256xf32, #tpu.memory_space<vmem>>, vector<256x256xf32>
      tpu.vector_store %arg7[%c0_17, %c0_18], %21 {strides = array<i32>} : memref<256x256xf32, #tpu.memory_space<vmem>>, vector<256x256xf32>,
    } else {
    }
    return
  }
  func.func @transform_0(%arg0: i32, %arg1: i32, %arg2: i32) -> (i32, i32) {
    %c0_i32 = arith.constant 0 : i32
    return %arg0, %arg2 : i32, i32
  }
  func.func @transform_1(%arg0: i32, %arg1: i32, %arg2: i32) -> (i32, i32) {
    %c0_i32 = arith.constant 0 : i32
    return %arg0, %arg2 : i32, i32
  }
  func.func @transform_2(%arg0: i32, %arg1: i32, %arg2: i32) -> (i32, i32) {
    %c0_i32 = arith.constant 0 : i32
    return %arg2, %arg1 : i32, i32
  }
  func.func @transform_3(%arg0: i32, %arg1: i32, %arg2: i32) -> (i32, i32) {
    %c0_i32 = arith.constant 0 : i32
    %c0_i32_0 = arith.constant 0 : i32
    return %c0_i32, %arg1 : i32, i32
  }
  func.func @transform_4(%arg0: i32, %arg1: i32, %arg2: i32) -> (i32, i32) {
    %c0_i32 = arith.constant 0 : i32
    return %arg0, %arg1 : i32, i32
  }
}

module attributes {stable_mosaic.version = 11 : i64} {
  func.func @_linear_kernel(%arg0: i32, %arg1: i32, %arg2: i32, %arg3: memref<256x256xf32, #tpu.memory_space<vmem>>, %arg4: memref<256x256xf32, #tpu.memory_space<vmem>>, %arg5: memref<1x256xf32, #tpu.memory_space<vmem>>, %arg6: memref<256x256xf32, #tpu.memory_space<vmem>>, %arg7: memref<256x256xf32, #tpu.memory_space<vmem>>) attributes {dimension_semantics = [#tpu.dimension_semantics<parallel>, #tpu.dimension_semantics<parallel>, #tpu.dimension_semantics<arbitrary>], iteration_bounds = array<i64: 1, 1, 1>, scalar_prefetch = 0 : i64, scratch_operands = 1 : i64, tpu.core_type = #tpu.core_type<tc>, window_params = [{transform_indices = @transform_0, window_bounds = array<i64: 256, 256>}, {transform_indices = @transform_1, window_bounds = array<i64: 256, 256>}, {transform_indices = @transform_2, window_bounds = array<i64: 1, 256>}, {transform_indices = @transform_3, window_bounds = array<i64: 256, 256>}]} {
    %c0_i32 = arith.constant 0 : i32
    %0 = arith.cmpi eq, %arg2, %c0_i32 : i32
    %1 = arith.extui %0 : i1 to i32
    %c0_i32_0 = arith.constant 0 : i32
    %2 = arith.cmpi ne, %1, %c0_i32_0 : i32
    scf.if %2 {
      %cst_10 = arith.constant 0.000000e+00 : f32
      %14 = vector.broadcast %cst_10 : f32 to vector<256x256xf32>
      %c0_11 = arith.constant 0 : index
      %c0_12 = arith.constant 0 : index
      %15 = vector.load %arg7[%c0_11, %c0_12] : memref<256x256xf32, #tpu.memory_space<vmem>>, vector<256x256xf32>
      tpu.vector_store %arg7[%c0_11, %c0_12], %14 {strides = array<i32>} : memref<256x256xf32, #tpu.memory_space<vmem>>, vector<256x256xf32>,
    } else {
    }
    %c0 = arith.constant 0 : index
    %c0_1 = arith.constant 0 : index
    %3 = vector.load %arg3[%c0, %c0_1] : memref<256x256xf32, #tpu.memory_space<vmem>>, vector<256x256xf32>
    %c0_2 = arith.constant 0 : index
    %c0_3 = arith.constant 0 : index
    %4 = vector.load %arg7[%c0_2, %c0_3] : memref<256x256xf32, #tpu.memory_space<vmem>>, vector<256x256xf32>
    %5 = arith.truncf %3 : vector<256x256xf32> to vector<256x256xbf16>
    %c0_4 = arith.constant 0 : index
    %c0_5 = arith.constant 0 : index
    %6 = vector.load %arg4[%c0_4, %c0_5] : memref<256x256xf32, #tpu.memory_space<vmem>>, vector<256x256xf32>
    %7 = arith.truncf %6 : vector<256x256xf32> to vector<256x256xbf16>
    %cst = arith.constant dense<0.000000e+00> : vector<256x256xf32>
    %8 = tpu.matmul %5, %7, %cst {dimension_numbers = #tpu.dot_dimension_numbers<[1], [0], [0], [1], [0, 0, 1, 1], [], []>} : vector<256x256xbf16>, vector<256x256xbf16>, vector<256x256xf32> -> vector<256x256xf32>
    %9 = arith.addf %4, %8 : vector<256x256xf32>
    %c0_6 = arith.constant 0 : index
    %c0_7 = arith.constant 0 : index
    %10 = vector.load %arg7[%c0_6, %c0_7] : memref<256x256xf32, #tpu.memory_space<vmem>>, vector<256x256xf32>
    tpu.vector_store %arg7[%c0_6, %c0_7], %9 {strides = array<i32>} : memref<256x256xf32, #tpu.memory_space<vmem>>, vector<256x256xf32>,
    %c0_i32_8 = arith.constant 0 : i32
    %11 = arith.cmpi eq, %arg2, %c0_i32_8 : i32
    %12 = arith.extui %11 : i1 to i32
    %c0_i32_9 = arith.constant 0 : i32
    %13 = arith.cmpi ne, %12, %c0_i32_9 : i32
    scf.if %13 {
      %c0_10 = arith.constant 0 : index
      %c0_11 = arith.constant 0 : index
      %14 = vector.load %arg7[%c0_10, %c0_11] : memref<256x256xf32, #tpu.memory_space<vmem>>, vector<256x256xf32>
      %c0_12 = arith.constant 0 : index
      %c0_13 = arith.constant 0 : index
      %15 = vector.load %arg5[%c0_12, %c0_13] : memref<1x256xf32, #tpu.memory_space<vmem>>, vector<1x256xf32>
      %16 = vector.broadcast %15 : vector<1x256xf32> to vector<256x256xf32>
      %17 = arith.addf %14, %16 : vector<256x256xf32>
      %cst_14 = arith.constant 0.000000e+00 : f32
      %18 = vector.broadcast %cst_14 : f32 to vector<256x256xf32>
      %19 = arith.maximumf %17, %18 : vector<256x256xf32>
      %c0_15 = arith.constant 0 : index
      %c0_16 = arith.constant 0 : index
      %20 = vector.load %arg6[%c0_15, %c0_16] : memref<256x256xf32, #tpu.memory_space<vmem>>, vector<256x256xf32>
      tpu.vector_store %arg6[%c0_15, %c0_16], %19 {strides = array<i32>} : memref<256x256xf32, #tpu.memory_space<vmem>>, vector<256x256xf32>,
    } else {
    }
    return
  }
  func.func @transform_0(%arg0: i32, %arg1: i32, %arg2: i32) -> (i32, i32) {
    %c0_i32 = arith.constant 0 : i32
    return %arg0, %arg2 : i32, i32
  }
  func.func @transform_1(%arg0: i32, %arg1: i32, %arg2: i32) -> (i32, i32) {
    %c0_i32 = arith.constant 0 : i32
    return %arg2, %arg1 : i32, i32
  }
  func.func @transform_2(%arg0: i32, %arg1: i32, %arg2: i32) -> (i32, i32) {
    %c0_i32 = arith.constant 0 : i32
    %c0_i32_0 = arith.constant 0 : i32
    return %c0_i32, %arg1 : i32, i32
  }
  func.func @transform_3(%arg0: i32, %arg1: i32, %arg2: i32) -> (i32, i32) {
    %c0_i32 = arith.constant 0 : i32
    return %arg0, %arg1 : i32, i32
  }
}

module attributes {stable_mosaic.version = 11 : i64} {
  func.func @_linear_kernel(%arg0: i32, %arg1: i32, %arg2: i32, %arg3: memref<256x256xf32, #tpu.memory_space<vmem>>, %arg4: memref<256x128xf32, #tpu.memory_space<vmem>>, %arg5: memref<1x128xf32, #tpu.memory_space<vmem>>, %arg6: memref<256x128xf32, #tpu.memory_space<vmem>>, %arg7: memref<256x128xf32, #tpu.memory_space<vmem>>) attributes {dimension_semantics = [#tpu.dimension_semantics<parallel>, #tpu.dimension_semantics<parallel>, #tpu.dimension_semantics<arbitrary>], iteration_bounds = array<i64: 1, 1, 1>, scalar_prefetch = 0 : i64, scratch_operands = 1 : i64, tpu.core_type = #tpu.core_type<tc>, window_params = [{transform_indices = @transform_0, window_bounds = array<i64: 256, 256>}, {transform_indices = @transform_1, window_bounds = array<i64: 256, 128>}, {transform_indices = @transform_2, window_bounds = array<i64: 1, 128>}, {transform_indices = @transform_3, window_bounds = array<i64: 256, 128>}]} {
    %c0_i32 = arith.constant 0 : i32
    %0 = arith.cmpi eq, %arg2, %c0_i32 : i32
    %1 = arith.extui %0 : i1 to i32
    %c0_i32_0 = arith.constant 0 : i32
    %2 = arith.cmpi ne, %1, %c0_i32_0 : i32
    scf.if %2 {
      %cst_10 = arith.constant 0.000000e+00 : f32
      %14 = vector.broadcast %cst_10 : f32 to vector<256x128xf32>
      %c0_11 = arith.constant 0 : index
      %c0_12 = arith.constant 0 : index
      %15 = vector.load %arg7[%c0_11, %c0_12] : memref<256x128xf32, #tpu.memory_space<vmem>>, vector<256x128xf32>
      tpu.vector_store %arg7[%c0_11, %c0_12], %14 {strides = array<i32>} : memref<256x128xf32, #tpu.memory_space<vmem>>, vector<256x128xf32>,
    } else {
    }
    %c0 = arith.constant 0 : index
    %c0_1 = arith.constant 0 : index
    %3 = vector.load %arg3[%c0, %c0_1] : memref<256x256xf32, #tpu.memory_space<vmem>>, vector<256x256xf32>
    %c0_2 = arith.constant 0 : index
    %c0_3 = arith.constant 0 : index
    %4 = vector.load %arg7[%c0_2, %c0_3] : memref<256x128xf32, #tpu.memory_space<vmem>>, vector<256x128xf32>
    %5 = arith.truncf %3 : vector<256x256xf32> to vector<256x256xbf16>
    %c0_4 = arith.constant 0 : index
    %c0_5 = arith.constant 0 : index
    %6 = vector.load %arg4[%c0_4, %c0_5] : memref<256x128xf32, #tpu.memory_space<vmem>>, vector<256x128xf32>
    %7 = arith.truncf %6 : vector<256x128xf32> to vector<256x128xbf16>
    %cst = arith.constant dense<0.000000e+00> : vector<256x128xf32>
    %8 = tpu.matmul %5, %7, %cst {dimension_numbers = #tpu.dot_dimension_numbers<[1], [0], [0], [1], [0, 0, 1, 1], [], []>} : vector<256x256xbf16>, vector<256x128xbf16>, vector<256x128xf32> -> vector<256x128xf32>
    %9 = arith.addf %4, %8 : vector<256x128xf32>
    %c0_6 = arith.constant 0 : index
    %c0_7 = arith.constant 0 : index
    %10 = vector.load %arg7[%c0_6, %c0_7] : memref<256x128xf32, #tpu.memory_space<vmem>>, vector<256x128xf32>
    tpu.vector_store %arg7[%c0_6, %c0_7], %9 {strides = array<i32>} : memref<256x128xf32, #tpu.memory_space<vmem>>, vector<256x128xf32>,
    %c0_i32_8 = arith.constant 0 : i32
    %11 = arith.cmpi eq, %arg2, %c0_i32_8 : i32
    %12 = arith.extui %11 : i1 to i32
    %c0_i32_9 = arith.constant 0 : i32
    %13 = arith.cmpi ne, %12, %c0_i32_9 : i32
    scf.if %13 {
      %c0_10 = arith.constant 0 : index
      %c0_11 = arith.constant 0 : index
      %14 = vector.load %arg7[%c0_10, %c0_11] : memref<256x128xf32, #tpu.memory_space<vmem>>, vector<256x128xf32>
      %c0_12 = arith.constant 0 : index
      %c0_13 = arith.constant 0 : index
      %15 = vector.load %arg5[%c0_12, %c0_13] : memref<1x128xf32, #tpu.memory_space<vmem>>, vector<1x128xf32>
      %16 = vector.broadcast %15 : vector<1x128xf32> to vector<256x128xf32>
      %17 = arith.addf %14, %16 : vector<256x128xf32>
      %c0_14 = arith.constant 0 : index
      %c0_15 = arith.constant 0 : index
      %18 = vector.load %arg6[%c0_14, %c0_15] : memref<256x128xf32, #tpu.memory_space<vmem>>, vector<256x128xf32>
      tpu.vector_store %arg6[%c0_14, %c0_15], %17 {strides = array<i32>} : memref<256x128xf32, #tpu.memory_space<vmem>>, vector<256x128xf32>,
    } else {
    }
    return
  }
  func.func @transform_0(%arg0: i32, %arg1: i32, %arg2: i32) -> (i32, i32) {
    %c0_i32 = arith.constant 0 : i32
    return %arg0, %arg2 : i32, i32
  }
  func.func @transform_1(%arg0: i32, %arg1: i32, %arg2: i32) -> (i32, i32) {
    %c0_i32 = arith.constant 0 : i32
    return %arg2, %arg1 : i32, i32
  }
  func.func @transform_2(%arg0: i32, %arg1: i32, %arg2: i32) -> (i32, i32) {
    %c0_i32 = arith.constant 0 : i32
    %c0_i32_0 = arith.constant 0 : i32
    return %c0_i32, %arg1 : i32, i32
  }
  func.func @transform_3(%arg0: i32, %arg1: i32, %arg2: i32) -> (i32, i32) {
    %c0_i32 = arith.constant 0 : i32
    return %arg0, %arg1 : i32, i32
  }
}

</mosaic_0001>

<llo_original>
// kernel: _lambda_.5
$region0: #{_lambda_.5}
  #allocation0 [shape = 'u32[]', space=smem, size = 0x4, offset = 0x4, fixed_abs, tag = 'smem constant byte address 0x4 - core index']
  #allocation1 [shape = 'u32[72,128]{1,0:T(1,128)}', space=vmem, size = 0x9000, scoped, tag = 'internal scratch']
  #allocation2 [shape = 'f32[256,128]{1,0:T(8,128)}', space=vmem, size = 0x20000, scoped, tag = 'scratch operand']
  %s0 = inlined_call_operand.vmem [shape: f32[256,256], index: 0, kind: input, shape index: {}]
  %s1 = inlined_call_operand.vmem [shape: f32[256,128], index: 1, kind: input, shape index: {}]
  %s2 = inlined_call_operand.vmem [shape: f32[1,128], index: 2, kind: input, shape index: {}]
  %s3 = inlined_call_operand.hbm [shape: f32[256,128], index: 3, kind: output, shape index: {}]
  %s4 = sld [smem:[#allocation0]]
  $region30: #{_lambda_.5} parent=0
    _
  %s6 = ssub.s32 1, %s4
  %s7 = scalar_select 0, %s6, %s4
  $region1: #{_lambda_.5} parent=0
    #allocation3 [shape = 'u8[131072]{0}', space=vmem, size = 0x20000, scoped, tag = 'output window, operand 0, single buffered']
    #allocation4 [shape = 's32[1]{0}', space=sflag, size = 0x4, scoped, tag = 'scoped memory for _lambda_.5']
    %8 = vsyncpa [#allocation4], 0
    // Predicated region
    $region2: #{_lambda_.5} parent=1 // pred_check
      _
    $region3: #{_lambda_.5} parent=1 // pred_check_branch
      %10 = sbr.rel (0) target = $region5
    $region4: #{_lambda_.5} parent=1 // pred_region
      _
    $region5: #{_lambda_.5} parent=1 // pred_fallthru
      _
    // Predicated region
    $region6: #{_lambda_.5} parent=1 // pred_check
      _
    $region7: #{_lambda_.5} parent=1 // pred_check_branch
      %12 = sbr.rel (0) target = $region9
    $region8: #{_lambda_.5} parent=1 // pred_region
      _
    $region9: #{_lambda_.5} parent=1 // pred_fallthru
      _
    // Predicated region
    $region10: #{_lambda_.5} parent=1 // pred_check
      _
    $region11: #{_lambda_.5} parent=1 // pred_check_branch
      %14 = sbr.rel (0) target = $region13
    $region12: #{_lambda_.5} parent=1 // pred_region
      _
    $region13: #{_lambda_.5} parent=1 // pred_fallthru
      _
    %p15 = scmp.eq.s32.totalorder 0, 0
    // Predicated region
    $region14: #{_lambda_.5} parent=1 // pred_check
      %p16 = pneg %p15
    $region15: #{_lambda_.5} parent=1 // pred_check_branch
      %18 = sbr.rel (%p16) target = $region17
    $region16: #{_lambda_.5} parent=1 // pred_region
      %19 = vst [vmem:[#allocation2] sm:$0xff] 0.0
      %20 = vst [vmem:[#allocation2 + $0x8] sm:$0xff] 0.0
      %21 = vst [vmem:[#allocation2 + $0x10] sm:$0xff] 0.0
      %22 = vst [vmem:[#allocation2 + $0x18] sm:$0xff] 0.0
      %23 = vst [vmem:[#allocation2 + $0x20] sm:$0xff] 0.0
      %24 = vst [vmem:[#allocation2 + $0x28] sm:$0xff] 0.0
      %25 = vst [vmem:[#allocation2 + $0x30] sm:$0xff] 0.0
      %26 = vst [vmem:[#allocation2 + $0x38] sm:$0xff] 0.0
      %27 = vst [vmem:[#allocation2 + $0x40] sm:$0xff] 0.0
      %28 = vst [vmem:[#allocation2 + $0x48] sm:$0xff] 0.0
      %29 = vst [vmem:[#allocation2 + $0x50] sm:$0xff] 0.0
      %30 = vst [vmem:[#allocation2 + $0x58] sm:$0xff] 0.0
      %31 = vst [vmem:[#allocation2 + $0x60] sm:$0xff] 0.0
      %32 = vst [vmem:[#allocation2 + $0x68] sm:$0xff] 0.0
      %33 = vst [vmem:[#allocation2 + $0x70] sm:$0xff] 0.0
      %34 = vst [vmem:[#allocation2 + $0x78] sm:$0xff] 0.0
      %35 = vst [vmem:[#allocation2 + $0x80] sm:$0xff] 0.0
      %36 = vst [vmem:[#allocation2 + $0x88] sm:$0xff] 0.0
      %37 = vst [vmem:[#allocation2 + $0x90] sm:$0xff] 0.0
      %38 = vst [vmem:[#allocation2 + $0x98] sm:$0xff] 0.0
      %39 = vst [vmem:[#allocation2 + $0xa0] sm:$0xff] 0.0
      %40 = vst [vmem:[#allocation2 + $0xa8] sm:$0xff] 0.0
      %41 = vst [vmem:[#allocation2 + $0xb0] sm:$0xff] 0.0
      %42 = vst [vmem:[#allocation2 + $0xb8] sm:$0xff] 0.0
      %43 = vst [vmem:[#allocation2 + $0xc0] sm:$0xff] 0.0
      %44 = vst [vmem:[#allocation2 + $0xc8] sm:$0xff] 0.0
      %45 = vst [vmem:[#allocation2 + $0xd0] sm:$0xff] 0.0
      %46 = vst [vmem:[#allocation2 + $0xd8] sm:$0xff] 0.0
      %47 = vst [vmem:[#allocation2 + $0xe0] sm:$0xff] 0.0
      %48 = vst [vmem:[#allocation2 + $0xe8] sm:$0xff] 0.0
      %49 = vst [vmem:[#allocation2 + $0xf0] sm:$0xff] 0.0
      %50 = vst [vmem:[#allocation2 + $0xf8] sm:$0xff] 0.0
    $region17: #{_lambda_.5} parent=1 // pred_fallthru
      _
    %v51 = vld [vmem:[%s0] sm:$0xff]
    %v52 = vld [vmem:[%s0 + $0x8] sm:$0xff]
    %v53 = vld [vmem:[%s0 + $0x10] sm:$0xff]
    %v54 = vld [vmem:[%s0 + $0x18] sm:$0xff]
    %v55 = vld [vmem:[%s0 + $0x20] sm:$0xff]
    %v56 = vld [vmem:[%s0 + $0x28] sm:$0xff]
    %v57 = vld [vmem:[%s0 + $0x30] sm:$0xff]
    %v58 = vld [vmem:[%s0 + $0x38] sm:$0xff]
    %v59 = vld [vmem:[%s0 + $0x40] sm:$0xff]
    %v60 = vld [vmem:[%s0 + $0x48] sm:$0xff]
    %v61 = vld [vmem:[%s0 + $0x50] sm:$0xff]
    %v62 = vld [vmem:[%s0 + $0x58] sm:$0xff]
    %v63 = vld [vmem:[%s0 + $0x60] sm:$0xff]
    %v64 = vld [vmem:[%s0 + $0x68] sm:$0xff]
    %v65 = vld [vmem:[%s0 + $0x70] sm:$0xff]
    %v66 = vld [vmem:[%s0 + $0x78] sm:$0xff]
    %v67 = vld [vmem:[%s0 + $0x80] sm:$0xff]
    %v68 = vld [vmem:[%s0 + $0x88] sm:$0xff]
    %v69 = vld [vmem:[%s0 + $0x90] sm:$0xff]
    %v70 = vld [vmem:[%s0 + $0x98] sm:$0xff]
    %v71 = vld [vmem:[%s0 + $0xa0] sm:$0xff]
    %v72 = vld [vmem:[%s0 + $0xa8] sm:$0xff]
    %v73 = vld [vmem:[%s0 + $0xb0] sm:$0xff]
    %v74 = vld [vmem:[%s0 + $0xb8] sm:$0xff]
    %v75 = vld [vmem:[%s0 + $0xc0] sm:$0xff]
    %v76 = vld [vmem:[%s0 + $0xc8] sm:$0xff]
    %v77 = vld [vmem:[%s0 + $0xd0] sm:$0xff]
    %v78 = vld [vmem:[%s0 + $0xd8] sm:$0xff]
    %v79 = vld [vmem:[%s0 + $0xe0] sm:$0xff]
    %v80 = vld [vmem:[%s0 + $0xe8] sm:$0xff]
    %v81 = vld [vmem:[%s0 + $0xf0] sm:$0xff]
    %v82 = vld [vmem:[%s0 + $0xf8] sm:$0xff]
    %v83 = vld [vmem:[%s0 + $0x100] sm:$0xff]
    %v84 = vld [vmem:[%s0 + $0x108] sm:$0xff]
    %v85 = vld [vmem:[%s0 + $0x110] sm:$0xff]
    %v86 = vld [vmem:[%s0 + $0x118] sm:$0xff]
    %v87 = vld [vmem:[%s0 + $0x120] sm:$0xff]
    %v88 = vld [vmem:[%s0 + $0x128] sm:$0xff]
    %v89 = vld [vmem:[%s0 + $0x130] sm:$0xff]
    %v90 = vld [vmem:[%s0 + $0x138] sm:$0xff]
    %v91 = vld [vmem:[%s0 + $0x140] sm:$0xff]
    %v92 = vld [vmem:[%s0 + $0x148] sm:$0xff]
    %v93 = vld [vmem:[%s0 + $0x150] sm:$0xff]
    %v94 = vld [vmem:[%s0 + $0x158] sm:$0xff]
    %v95 = vld [vmem:[%s0 + $0x160] sm:$0xff]
    %v96 = vld [vmem:[%s0 + $0x168] sm:$0xff]
    %v97 = vld [vmem:[%s0 + $0x170] sm:$0xff]
    %v98 = vld [vmem:[%s0 + $0x178] sm:$0xff]
    %v99 = vld [vmem:[%s0 + $0x180] sm:$0xff]
    %v100 = vld [vmem:[%s0 + $0x188] sm:$0xff]
    %v101 = vld [vmem:[%s0 + $0x190] sm:$0xff]
    %v102 = vld [vmem:[%s0 + $0x198] sm:$0xff]
    %v103 = vld [vmem:[%s0 + $0x1a0] sm:$0xff]
    %v104 = vld [vmem:[%s0 + $0x1a8] sm:$0xff]
    %v105 = vld [vmem:[%s0 + $0x1b0] sm:$0xff]
    %v106 = vld [vmem:[%s0 + $0x1b8] sm:$0xff]
    %v107 = vld [vmem:[%s0 + $0x1c0] sm:$0xff]
    %v108 = vld [vmem:[%s0 + $0x1c8] sm:$0xff]
    %v109 = vld [vmem:[%s0 + $0x1d0] sm:$0xff]
    %v110 = vld [vmem:[%s0 + $0x1d8] sm:$0xff]
    %v111 = vld [vmem:[%s0 + $0x1e0] sm:$0xff]
    %v112 = vld [vmem:[%s0 + $0x1e8] sm:$0xff]
    %v113 = vld [vmem:[%s0 + $0x1f0] sm:$0xff]
    %v114 = vld [vmem:[%s0 + $0x1f8] sm:$0xff]
    %v115 = vld [vmem:[#allocation2] sm:$0xff]
    %v116 = vld [vmem:[#allocation2 + $0x8] sm:$0xff]
    %v117 = vld [vmem:[#allocation2 + $0x10] sm:$0xff]
    %v118 = vld [vmem:[#allocation2 + $0x18] sm:$0xff]
    %v119 = vld [vmem:[#allocation2 + $0x20] sm:$0xff]
    %v120 = vld [vmem:[#allocation2 + $0x28] sm:$0xff]
    %v121 = vld [vmem:[#allocation2 + $0x30] sm:$0xff]
    %v122 = vld [vmem:[#allocation2 + $0x38] sm:$0xff]
    %v123 = vld [vmem:[#allocation2 + $0x40] sm:$0xff]
    %v124 = vld [vmem:[#allocation2 + $0x48] sm:$0xff]
    %v125 = vld [vmem:[#allocation2 + $0x50] sm:$0xff]
    %v126 = vld [vmem:[#allocation2 + $0x58] sm:$0xff]
    %v127 = vld [vmem:[#allocation2 + $0x60] sm:$0xff]
    %v128 = vld [vmem:[#allocation2 + $0x68] sm:$0xff]
    %v129 = vld [vmem:[#allocation2 + $0x70] sm:$0xff]
    %v130 = vld [vmem:[#allocation2 + $0x78] sm:$0xff]
    %v131 = vld [vmem:[#allocation2 + $0x80] sm:$0xff]
    %v132 = vld [vmem:[#allocation2 + $0x88] sm:$0xff]
    %v133 = vld [vmem:[#allocation2 + $0x90] sm:$0xff]
    %v134 = vld [vmem:[#allocation2 + $0x98] sm:$0xff]
    %v135 = vld [vmem:[#allocation2 + $0xa0] sm:$0xff]
    %v136 = vld [vmem:[#allocation2 + $0xa8] sm:$0xff]
    %v137 = vld [vmem:[#allocation2 + $0xb0] sm:$0xff]
    %v138 = vld [vmem:[#allocation2 + $0xb8] sm:$0xff]
    %v139 = vld [vmem:[#allocation2 + $0xc0] sm:$0xff]
    %v140 = vld [vmem:[#allocation2 + $0xc8] sm:$0xff]
    %v141 = vld [vmem:[#allocation2 + $0xd0] sm:$0xff]
    %v142 = vld [vmem:[#allocation2 + $0xd8] sm:$0xff]
    %v143 = vld [vmem:[#allocation2 + $0xe0] sm:$0xff]
    %v144 = vld [vmem:[#allocation2 + $0xe8] sm:$0xff]
    %v145 = vld [vmem:[#allocation2 + $0xf0] sm:$0xff]
    %v146 = vld [vmem:[#allocation2 + $0xf8] sm:$0xff]
    %v147 = vpack.c.bf16 %v53, %v51
    %v148 = vpack.c.bf16 %v54, %v52
    %v149 = vpack.c.bf16 %v57, %v55
    %v150 = vpack.c.bf16 %v58, %v56
    %v151 = vpack.c.bf16 %v61, %v59
    %v152 = vpack.c.bf16 %v62, %v60
    %v153 = vpack.c.bf16 %v65, %v63
    %v154 = vpack.c.bf16 %v66, %v64
    %v155 = vpack.c.bf16 %v69, %v67
    %v156 = vpack.c.bf16 %v70, %v68
    %v157 = vpack.c.bf16 %v73, %v71
    %v158 = vpack.c.bf16 %v74, %v72
    %v159 = vpack.c.bf16 %v77, %v75
    %v160 = vpack.c.bf16 %v78, %v76
    %v161 = vpack.c.bf16 %v81, %v79
    %v162 = vpack.c.bf16 %v82, %v80
    %v163 = vpack.c.bf16 %v85, %v83
    %v164 = vpack.c.bf16 %v86, %v84
    %v165 = vpack.c.bf16 %v89, %v87
    %v166 = vpack.c.bf16 %v90, %v88
    %v167 = vpack.c.bf16 %v93, %v91
    %v168 = vpack.c.bf16 %v94, %v92
    %v169 = vpack.c.bf16 %v97, %v95
    %v170 = vpack.c.bf16 %v98, %v96
    %v171 = vpack.c.bf16 %v101, %v99
    %v172 = vpack.c.bf16 %v102, %v100
    %v173 = vpack.c.bf16 %v105, %v103
    %v174 = vpack.c.bf16 %v106, %v104
    %v175 = vpack.c.bf16 %v109, %v107
    %v176 = vpack.c.bf16 %v110, %v108
    %v177 = vpack.c.bf16 %v113, %v111
    %v178 = vpack.c.bf16 %v114, %v112
    %v179 = vld [vmem:[%s1] sm:$0xff]
    %v180 = vld [vmem:[%s1 + $0x8] sm:$0xff]
    %v181 = vld [vmem:[%s1 + $0x10] sm:$0xff]
    %v182 = vld [vmem:[%s1 + $0x18] sm:$0xff]
    %v183 = vld [vmem:[%s1 + $0x20] sm:$0xff]
    %v184 = vld [vmem:[%s1 + $0x28] sm:$0xff]
    %v185 = vld [vmem:[%s1 + $0x30] sm:$0xff]
    %v186 = vld [vmem:[%s1 + $0x38] sm:$0xff]
    %v187 = vld [vmem:[%s1 + $0x40] sm:$0xff]
    %v188 = vld [vmem:[%s1 + $0x48] sm:$0xff]
    %v189 = vld [vmem:[%s1 + $0x50] sm:$0xff]
    %v190 = vld [vmem:[%s1 + $0x58] sm:$0xff]
    %v191 = vld [vmem:[%s1 + $0x60] sm:$0xff]
    %v192 = vld [vmem:[%s1 + $0x68] sm:$0xff]
    %v193 = vld [vmem:[%s1 + $0x70] sm:$0xff]
    %v194 = vld [vmem:[%s1 + $0x78] sm:$0xff]
    %v195 = vld [vmem:[%s1 + $0x80] sm:$0xff]
    %v196 = vld [vmem:[%s1 + $0x88] sm:$0xff]
    %v197 = vld [vmem:[%s1 + $0x90] sm:$0xff]
    %v198 = vld [vmem:[%s1 + $0x98] sm:$0xff]
    %v199 = vld [vmem:[%s1 + $0xa0] sm:$0xff]
    %v200 = vld [vmem:[%s1 + $0xa8] sm:$0xff]
    %v201 = vld [vmem:[%s1 + $0xb0] sm:$0xff]
    %v202 = vld [vmem:[%s1 + $0xb8] sm:$0xff]
    %v203 = vld [vmem:[%s1 + $0xc0] sm:$0xff]
    %v204 = vld [vmem:[%s1 + $0xc8] sm:$0xff]
    %v205 = vld [vmem:[%s1 + $0xd0] sm:$0xff]
    %v206 = vld [vmem:[%s1 + $0xd8] sm:$0xff]
    %v207 = vld [vmem:[%s1 + $0xe0] sm:$0xff]
    %v208 = vld [vmem:[%s1 + $0xe8] sm:$0xff]
    %v209 = vld [vmem:[%s1 + $0xf0] sm:$0xff]
    %v210 = vld [vmem:[%s1 + $0xf8] sm:$0xff]
    %v211 = vpack.c.bf16 %v180, %v179
    %v212 = vpack.c.bf16 %v182, %v181
    %v213 = vpack.c.bf16 %v184, %v183
    %v214 = vpack.c.bf16 %v186, %v185
    %v215 = vpack.c.bf16 %v188, %v187
    %v216 = vpack.c.bf16 %v190, %v189
    %v217 = vpack.c.bf16 %v192, %v191
    %v218 = vpack.c.bf16 %v194, %v193
    %v219 = vpack.c.bf16 %v196, %v195
    %v220 = vpack.c.bf16 %v198, %v197
    %v221 = vpack.c.bf16 %v200, %v199
    %v222 = vpack.c.bf16 %v202, %v201
    %v223 = vpack.c.bf16 %v204, %v203
    %v224 = vpack.c.bf16 %v206, %v205
    %v225 = vpack.c.bf16 %v208, %v207
    %v226 = vpack.c.bf16 %v210, %v209
    %227 = vmatpush.bf16.msra.mxu0 %v218
    %228 = vmatpush.bf16.msra.mxu0 %v217
    %229 = vmatpush.bf16.msra.mxu0 %v216
    %230 = vmatpush.bf16.msra.mxu0 %v215
    %231 = vmatpush.bf16.msra.mxu0 %v214
    %232 = vmatpush.bf16.msra.mxu0 %v213
    %233 = vmatpush.bf16.msra.mxu0 %v212
    %234 = vmatpush.bf16.msra.mxu0 %v211
    %235 = vmatmul.bf16.gmra.mxu0 %v147
    %v236 = vpop.f32.mrf.mxu0
    %v237 = vadd.f32 0.0, %v236
    %v238 = vpop.f32.mrf.mxu0
    %v239 = vadd.f32 0.0, %v238
    %240 = vmatmul.bf16.gmra.mxu0 %v149
    %v241 = vpop.f32.mrf.mxu0
    %v242 = vadd.f32 0.0, %v241
    %v243 = vpop.f32.mrf.mxu0
    %v244 = vadd.f32 0.0, %v243
    %245 = vmatmul.bf16.gmra.mxu0 %v151
    %v246 = vpop.f32.mrf.mxu0
    %v247 = vadd.f32 0.0, %v246
    %v248 = vpop.f32.mrf.mxu0
    %v249 = vadd.f32 0.0, %v248
    %250 = vmatmul.bf16.gmra.mxu0 %v153
    %v251 = vpop.f32.mrf.mxu0
    %v252 = vadd.f32 0.0, %v251
    %v253 = vpop.f32.mrf.mxu0
    %v254 = vadd.f32 0.0, %v253
    %255 = vmatmul.bf16.gmra.mxu0 %v155
    %v256 = vpop.f32.mrf.mxu0
    %v257 = vadd.f32 0.0, %v256
    %v258 = vpop.f32.mrf.mxu0
    %v259 = vadd.f32 0.0, %v258
    %260 = vmatmul.bf16.gmra.mxu0 %v157
    %v261 = vpop.f32.mrf.mxu0
    %v262 = vadd.f32 0.0, %v261
    %v263 = vpop.f32.mrf.mxu0
    %v264 = vadd.f32 0.0, %v263
    %265 = vmatmul.bf16.gmra.mxu0 %v159
    %v266 = vpop.f32.mrf.mxu0
    %v267 = vadd.f32 0.0, %v266
    %v268 = vpop.f32.mrf.mxu0
    %v269 = vadd.f32 0.0, %v268
    %270 = vmatmul.bf16.gmra.mxu0 %v161
    %v271 = vpop.f32.mrf.mxu0
    %v272 = vadd.f32 0.0, %v271
    %v273 = vpop.f32.mrf.mxu0
    %v274 = vadd.f32 0.0, %v273
    %275 = vmatmul.bf16.gmra.mxu0 %v163
    %v276 = vpop.f32.mrf.mxu0
    %v277 = vadd.f32 0.0, %v276
    %v278 = vpop.f32.mrf.mxu0
    %v279 = vadd.f32 0.0, %v278
    %280 = vmatmul.bf16.gmra.mxu0 %v165
    %v281 = vpop.f32.mrf.mxu0
    %v282 = vadd.f32 0.0, %v281
    %v283 = vpop.f32.mrf.mxu0
    %v284 = vadd.f32 0.0, %v283
    %285 = vmatmul.bf16.gmra.mxu0 %v167
    %v286 = vpop.f32.mrf.mxu0
    %v287 = vadd.f32 0.0, %v286
    %v288 = vpop.f32.mrf.mxu0
    %v289 = vadd.f32 0.0, %v288
    %290 = vmatmul.bf16.gmra.mxu0 %v169
    %v291 = vpop.f32.mrf.mxu0
    %v292 = vadd.f32 0.0, %v291
    %v293 = vpop.f32.mrf.mxu0
    %v294 = vadd.f32 0.0, %v293
    %295 = vmatmul.bf16.gmra.mxu0 %v171
    %v296 = vpop.f32.mrf.mxu0
    %v297 = vadd.f32 0.0, %v296
    %v298 = vpop.f32.mrf.mxu0
    %v299 = vadd.f32 0.0, %v298
    %300 = vmatmul.bf16.gmra.mxu0 %v173
    %v301 = vpop.f32.mrf.mxu0
    %v302 = vadd.f32 0.0, %v301
    %v303 = vpop.f32.mrf.mxu0
    %v304 = vadd.f32 0.0, %v303
    %305 = vmatmul.bf16.gmra.mxu0 %v175
    %v306 = vpop.f32.mrf.mxu0
    %v307 = vadd.f32 0.0, %v306
    %v308 = vpop.f32.mrf.mxu0
    %v309 = vadd.f32 0.0, %v308
    %310 = vmatmul.bf16.gmra.mxu0 %v177
    %v311 = vpop.f32.mrf.mxu0
    %v312 = vadd.f32 0.0, %v311
    %v313 = vpop.f32.mrf.mxu0
    %v314 = vadd.f32 0.0, %v313
    %315 = vdwg.mxu0
    %316 = vmatpush.bf16.msra.mxu0 %v226
    %317 = vmatpush.bf16.msra.mxu0 %v225
    %318 = vmatpush.bf16.msra.mxu0 %v224
    %319 = vmatpush.bf16.msra.mxu0 %v223
    %320 = vmatpush.bf16.msra.mxu0 %v222
    %321 = vmatpush.bf16.msra.mxu0 %v221
    %322 = vmatpush.bf16.msra.mxu0 %v220
    %323 = vmatpush.bf16.msra.mxu0 %v219
    %324 = vmatmul.bf16.gmra.mxu0 %v148
    %v325 = vpop.f32.mrf.mxu0
    %v326 = vadd.f32 %v237, %v325
    %v327 = vpop.f32.mrf.mxu0
    %v328 = vadd.f32 %v239, %v327
    %329 = vmatmul.bf16.gmra.mxu0 %v150
    %v330 = vpop.f32.mrf.mxu0
    %v331 = vadd.f32 %v242, %v330
    %v332 = vpop.f32.mrf.mxu0
    %v333 = vadd.f32 %v244, %v332
    %334 = vmatmul.bf16.gmra.mxu0 %v152
    %v335 = vpop.f32.mrf.mxu0
    %v336 = vadd.f32 %v247, %v335
    %v337 = vpop.f32.mrf.mxu0
    %v338 = vadd.f32 %v249, %v337
    %339 = vmatmul.bf16.gmra.mxu0 %v154
    %v340 = vpop.f32.mrf.mxu0
    %v341 = vadd.f32 %v252, %v340
    %v342 = vpop.f32.mrf.mxu0
    %v343 = vadd.f32 %v254, %v342
    %344 = vmatmul.bf16.gmra.mxu0 %v156
    %v345 = vpop.f32.mrf.mxu0
    %v346 = vadd.f32 %v257, %v345
    %v347 = vpop.f32.mrf.mxu0
    %v348 = vadd.f32 %v259, %v347
    %349 = vmatmul.bf16.gmra.mxu0 %v158
    %v350 = vpop.f32.mrf.mxu0
    %v351 = vadd.f32 %v262, %v350
    %v352 = vpop.f32.mrf.mxu0
    %v353 = vadd.f32 %v264, %v352
    %354 = vmatmul.bf16.gmra.mxu0 %v160
    %v355 = vpop.f32.mrf.mxu0
    %v356 = vadd.f32 %v267, %v355
    %v357 = vpop.f32.mrf.mxu0
    %v358 = vadd.f32 %v269, %v357
    %359 = vmatmul.bf16.gmra.mxu0 %v162
    %v360 = vpop.f32.mrf.mxu0
    %v361 = vadd.f32 %v272, %v360
    %v362 = vpop.f32.mrf.mxu0
    %v363 = vadd.f32 %v274, %v362
    %364 = vmatmul.bf16.gmra.mxu0 %v164
    %v365 = vpop.f32.mrf.mxu0
    %v366 = vadd.f32 %v277, %v365
    %v367 = vpop.f32.mrf.mxu0
    %v368 = vadd.f32 %v279, %v367
    %369 = vmatmul.bf16.gmra.mxu0 %v166
    %v370 = vpop.f32.mrf.mxu0
    %v371 = vadd.f32 %v282, %v370
    %v372 = vpop.f32.mrf.mxu0
    %v373 = vadd.f32 %v284, %v372
    %374 = vmatmul.bf16.gmra.mxu0 %v168
    %v375 = vpop.f32.mrf.mxu0
    %v376 = vadd.f32 %v287, %v375
    %v377 = vpop.f32.mrf.mxu0
    %v378 = vadd.f32 %v289, %v377
    %379 = vmatmul.bf16.gmra.mxu0 %v170
    %v380 = vpop.f32.mrf.mxu0
    %v381 = vadd.f32 %v292, %v380
    %v382 = vpop.f32.mrf.mxu0
    %v383 = vadd.f32 %v294, %v382
    %384 = vmatmul.bf16.gmra.mxu0 %v172
    %v385 = vpop.f32.mrf.mxu0
    %v386 = vadd.f32 %v297, %v385
    %v387 = vpop.f32.mrf.mxu0
    %v388 = vadd.f32 %v299, %v387
    %389 = vmatmul.bf16.gmra.mxu0 %v174
    %v390 = vpop.f32.mrf.mxu0
    %v391 = vadd.f32 %v302, %v390
    %v392 = vpop.f32.mrf.mxu0
    %v393 = vadd.f32 %v304, %v392
    %394 = vmatmul.bf16.gmra.mxu0 %v176
    %v395 = vpop.f32.mrf.mxu0
    %v396 = vadd.f32 %v307, %v395
    %v397 = vpop.f32.mrf.mxu0
    %v398 = vadd.f32 %v309, %v397
    %399 = vmatmul.bf16.gmra.mxu0 %v178
    %v400 = vpop.f32.mrf.mxu0
    %v401 = vadd.f32 %v312, %v400
    %v402 = vpop.f32.mrf.mxu0
    %v403 = vadd.f32 %v314, %v402
    %404 = vdwg.mxu0
    %v405 = vadd.f32 %v115, %v326
    %v406 = vadd.f32 %v116, %v328
    %v407 = vadd.f32 %v117, %v331
    %v408 = vadd.f32 %v118, %v333
    %v409 = vadd.f32 %v119, %v336
    %v410 = vadd.f32 %v120, %v338
    %v411 = vadd.f32 %v121, %v341
    %v412 = vadd.f32 %v122, %v343
    %v413 = vadd.f32 %v123, %v346
    %v414 = vadd.f32 %v124, %v348
    %v415 = vadd.f32 %v125, %v351
    %v416 = vadd.f32 %v126, %v353
    %v417 = vadd.f32 %v127, %v356
    %v418 = vadd.f32 %v128, %v358
    %v419 = vadd.f32 %v129, %v361
    %v420 = vadd.f32 %v130, %v363
    %v421 = vadd.f32 %v131, %v366
    %v422 = vadd.f32 %v132, %v368
    %v423 = vadd.f32 %v133, %v371
    %v424 = vadd.f32 %v134, %v373
    %v425 = vadd.f32 %v135, %v376
    %v426 = vadd.f32 %v136, %v378
    %v427 = vadd.f32 %v137, %v381
    %v428 = vadd.f32 %v138, %v383
    %v429 = vadd.f32 %v139, %v386
    %v430 = vadd.f32 %v140, %v388
    %v431 = vadd.f32 %v141, %v391
    %v432 = vadd.f32 %v142, %v393
    %v433 = vadd.f32 %v143, %v396
    %v434 = vadd.f32 %v144, %v398
    %v435 = vadd.f32 %v145, %v401
    %v436 = vadd.f32 %v146, %v403
    %437 = vst [vmem:[#allocation2] sm:$0xff] %v405
    %438 = vst [vmem:[#allocation2 + $0x8] sm:$0xff] %v406
    %439 = vst [vmem:[#allocation2 + $0x10] sm:$0xff] %v407
    %440 = vst [vmem:[#allocation2 + $0x18] sm:$0xff] %v408
    %441 = vst [vmem:[#allocation2 + $0x20] sm:$0xff] %v409
    %442 = vst [vmem:[#allocation2 + $0x28] sm:$0xff] %v410
    %443 = vst [vmem:[#allocation2 + $0x30] sm:$0xff] %v411
    %444 = vst [vmem:[#allocation2 + $0x38] sm:$0xff] %v412
    %445 = vst [vmem:[#allocation2 + $0x40] sm:$0xff] %v413
    %446 = vst [vmem:[#allocation2 + $0x48] sm:$0xff] %v414
    %447 = vst [vmem:[#allocation2 + $0x50] sm:$0xff] %v415
    %448 = vst [vmem:[#allocation2 + $0x58] sm:$0xff] %v416
    %449 = vst [vmem:[#allocation2 + $0x60] sm:$0xff] %v417
    %450 = vst [vmem:[#allocation2 + $0x68] sm:$0xff] %v418
    %451 = vst [vmem:[#allocation2 + $0x70] sm:$0xff] %v419
    %452 = vst [vmem:[#allocation2 + $0x78] sm:$0xff] %v420
    %453 = vst [vmem:[#allocation2 + $0x80] sm:$0xff] %v421
    %454 = vst [vmem:[#allocation2 + $0x88] sm:$0xff] %v422
    %455 = vst [vmem:[#allocation2 + $0x90] sm:$0xff] %v423
    %456 = vst [vmem:[#allocation2 + $0x98] sm:$0xff] %v424
    %457 = vst [vmem:[#allocation2 + $0xa0] sm:$0xff] %v425
    %458 = vst [vmem:[#allocation2 + $0xa8] sm:$0xff] %v426
    %459 = vst [vmem:[#allocation2 + $0xb0] sm:$0xff] %v427
    %460 = vst [vmem:[#allocation2 + $0xb8] sm:$0xff] %v428
    %461 = vst [vmem:[#allocation2 + $0xc0] sm:$0xff] %v429
    %462 = vst [vmem:[#allocation2 + $0xc8] sm:$0xff] %v430
    %463 = vst [vmem:[#allocation2 + $0xd0] sm:$0xff] %v431
    %464 = vst [vmem:[#allocation2 + $0xd8] sm:$0xff] %v432
    %465 = vst [vmem:[#allocation2 + $0xe0] sm:$0xff] %v433
    %466 = vst [vmem:[#allocation2 + $0xe8] sm:$0xff] %v434
    %467 = vst [vmem:[#allocation2 + $0xf0] sm:$0xff] %v435
    %468 = vst [vmem:[#allocation2 + $0xf8] sm:$0xff] %v436
    // Predicated region
    $region18: #{_lambda_.5} parent=1 // pred_check
      %p469 = pneg %p15
    $region19: #{_lambda_.5} parent=1 // pred_check_branch
      %471 = sbr.rel (%p469) target = $region21
    $region20: #{_lambda_.5} parent=1 // pred_region
      %v472 = vld [vmem:[#allocation2] sm:$0xff]
      %v473 = vld [vmem:[#allocation2 + $0x8] sm:$0xff]
      %v474 = vld [vmem:[#allocation2 + $0x10] sm:$0xff]
      %v475 = vld [vmem:[#allocation2 + $0x18] sm:$0xff]
      %v476 = vld [vmem:[#allocation2 + $0x20] sm:$0xff]
      %v477 = vld [vmem:[#allocation2 + $0x28] sm:$0xff]
      %v478 = vld [vmem:[#allocation2 + $0x30] sm:$0xff]
      %v479 = vld [vmem:[#allocation2 + $0x38] sm:$0xff]
      %v480 = vld [vmem:[#allocation2 + $0x40] sm:$0xff]
      %v481 = vld [vmem:[#allocation2 + $0x48] sm:$0xff]
      %v482 = vld [vmem:[#allocation2 + $0x50] sm:$0xff]
      %v483 = vld [vmem:[#allocation2 + $0x58] sm:$0xff]
      %v484 = vld [vmem:[#allocation2 + $0x60] sm:$0xff]
      %v485 = vld [vmem:[#allocation2 + $0x68] sm:$0xff]
      %v486 = vld [vmem:[#allocation2 + $0x70] sm:$0xff]
      %v487 = vld [vmem:[#allocation2 + $0x78] sm:$0xff]
      %v488 = vld [vmem:[#allocation2 + $0x80] sm:$0xff]
      %v489 = vld [vmem:[#allocation2 + $0x88] sm:$0xff]
      %v490 = vld [vmem:[#allocation2 + $0x90] sm:$0xff]
      %v491 = vld [vmem:[#allocation2 + $0x98] sm:$0xff]
      %v492 = vld [vmem:[#allocation2 + $0xa0] sm:$0xff]
      %v493 = vld [vmem:[#allocation2 + $0xa8] sm:$0xff]
      %v494 = vld [vmem:[#allocation2 + $0xb0] sm:$0xff]
      %v495 = vld [vmem:[#allocation2 + $0xb8] sm:$0xff]
      %v496 = vld [vmem:[#allocation2 + $0xc0] sm:$0xff]
      %v497 = vld [vmem:[#allocation2 + $0xc8] sm:$0xff]
      %v498 = vld [vmem:[#allocation2 + $0xd0] sm:$0xff]
      %v499 = vld [vmem:[#allocation2 + $0xd8] sm:$0xff]
      %v500 = vld [vmem:[#allocation2 + $0xe0] sm:$0xff]
      %v501 = vld [vmem:[#allocation2 + $0xe8] sm:$0xff]
      %v502 = vld [vmem:[#allocation2 + $0xf0] sm:$0xff]
      %v503 = vld [vmem:[#allocation2 + $0xf8] sm:$0xff]
      %v504 = vld [vmem:[%s2] sm:$0x1]
      %v506 = vperm.slane %v504, 0
      %v508 = vadd.f32 %v472, %v506
      %v509 = vadd.f32 %v473, %v506
      %v510 = vadd.f32 %v474, %v506
      %v511 = vadd.f32 %v475, %v506
      %v512 = vadd.f32 %v476, %v506
      %v513 = vadd.f32 %v477, %v506
      %v514 = vadd.f32 %v478, %v506
      %v515 = vadd.f32 %v479, %v506
      %v516 = vadd.f32 %v480, %v506
      %v517 = vadd.f32 %v481, %v506
      %v518 = vadd.f32 %v482, %v506
      %v519 = vadd.f32 %v483, %v506
      %v520 = vadd.f32 %v484, %v506
      %v521 = vadd.f32 %v485, %v506
      %v522 = vadd.f32 %v486, %v506
      %v523 = vadd.f32 %v487, %v506
      %v524 = vadd.f32 %v488, %v506
      %v525 = vadd.f32 %v489, %v506
      %v526 = vadd.f32 %v490, %v506
      %v527 = vadd.f32 %v491, %v506
      %v528 = vadd.f32 %v492, %v506
      %v529 = vadd.f32 %v493, %v506
      %v530 = vadd.f32 %v494, %v506
      %v531 = vadd.f32 %v495, %v506
      %v532 = vadd.f32 %v496, %v506
      %v533 = vadd.f32 %v497, %v506
      %v534 = vadd.f32 %v498, %v506
      %v535 = vadd.f32 %v499, %v506
      %v536 = vadd.f32 %v500, %v506
      %v537 = vadd.f32 %v501, %v506
      %v538 = vadd.f32 %v502, %v506
      %v539 = vadd.f32 %v503, %v506
      %540 = vst [vmem:[#allocation3] sm:$0xff] %v508
      %541 = vst [vmem:[#allocation3 + $0x8] sm:$0xff] %v509
      %542 = vst [vmem:[#allocation3 + $0x10] sm:$0xff] %v510
      %543 = vst [vmem:[#allocation3 + $0x18] sm:$0xff] %v511
      %544 = vst [vmem:[#allocation3 + $0x20] sm:$0xff] %v512
      %545 = vst [vmem:[#allocation3 + $0x28] sm:$0xff] %v513
      %546 = vst [vmem:[#allocation3 + $0x30] sm:$0xff] %v514
      %547 = vst [vmem:[#allocation3 + $0x38] sm:$0xff] %v515
      %548 = vst [vmem:[#allocation3 + $0x40] sm:$0xff] %v516
      %549 = vst [vmem:[#allocation3 + $0x48] sm:$0xff] %v517
      %550 = vst [vmem:[#allocation3 + $0x50] sm:$0xff] %v518
      %551 = vst [vmem:[#allocation3 + $0x58] sm:$0xff] %v519
      %552 = vst [vmem:[#allocation3 + $0x60] sm:$0xff] %v520
      %553 = vst [vmem:[#allocation3 + $0x68] sm:$0xff] %v521
      %554 = vst [vmem:[#allocation3 + $0x70] sm:$0xff] %v522
      %555 = vst [vmem:[#allocation3 + $0x78] sm:$0xff] %v523
      %556 = vst [vmem:[#allocation3 + $0x80] sm:$0xff] %v524
      %557 = vst [vmem:[#allocation3 + $0x88] sm:$0xff] %v525
      %558 = vst [vmem:[#allocation3 + $0x90] sm:$0xff] %v526
      %559 = vst [vmem:[#allocation3 + $0x98] sm:$0xff] %v527
      %560 = vst [vmem:[#allocation3 + $0xa0] sm:$0xff] %v528
      %561 = vst [vmem:[#allocation3 + $0xa8] sm:$0xff] %v529
      %562 = vst [vmem:[#allocation3 + $0xb0] sm:$0xff] %v530
      %563 = vst [vmem:[#allocation3 + $0xb8] sm:$0xff] %v531
      %564 = vst [vmem:[#allocation3 + $0xc0] sm:$0xff] %v532
      %565 = vst [vmem:[#allocation3 + $0xc8] sm:$0xff] %v533
      %566 = vst [vmem:[#allocation3 + $0xd0] sm:$0xff] %v534
      %567 = vst [vmem:[#allocation3 + $0xd8] sm:$0xff] %v535
      %568 = vst [vmem:[#allocation3 + $0xe0] sm:$0xff] %v536
      %569 = vst [vmem:[#allocation3 + $0xe8] sm:$0xff] %v537
      %570 = vst [vmem:[#allocation3 + $0xf0] sm:$0xff] %v538
      %571 = vst [vmem:[#allocation3 + $0xf8] sm:$0xff] %v539
    $region21: #{_lambda_.5} parent=1 // pred_fallthru
      _
    // Predicated region
    $region22: #{_lambda_.5} parent=1 // pred_check
      _
    $region23: #{_lambda_.5} parent=1 // pred_check_branch
      %573 = sbr.rel (0) target = $region25
    $region24: #{_lambda_.5} parent=1 // pred_region
      %575 = vsyncadd [#allocation4], 0
      %s576 = sshll.u32 [#allocation3], 4
      %s577 = int_to_ptr.vmem [resolvable:$true] %s576
      %s578 = sshll.u32 %s3, 4
      %s579 = int_to_ptr.hbm [resolvable:$true] %s578
      %584 = dma.vmem_to_hbm [thread:$0]  %s577, 4096, %s579, [#allocation4], 128, 128, 8
    $region25: #{_lambda_.5} parent=1 // pred_fallthru
      _
    // Predicated region
    $region26: #{_lambda_.5} parent=1 // pred_check
      _
    $region27: #{_lambda_.5} parent=1 // pred_check_branch
      %586 = sbr.rel (0) target = $region29
    $region28: #{_lambda_.5} parent=1 // pred_region
      %588 = dma.done [#allocation4], 4096
    $region29: #{_lambda_.5} parent=1 // pred_fallthru
      _
    %589 = vsyncpa [#allocation4], 1

// kernel: _lambda_.4
$region0: #{_lambda_.4}
  #allocation0 [shape = 'u32[]', space=smem, size = 0x4, offset = 0x4, fixed_abs, tag = 'smem constant byte address 0x4 - core index']
  #allocation1 [shape = 'u32[72,128]{1,0:T(1,128)}', space=vmem, size = 0x9000, scoped, tag = 'internal scratch']
  #allocation2 [shape = 'f32[256,256]{1,0:T(8,128)}', space=vmem, size = 0x40000, scoped, tag = 'scratch operand']
  %s0 = inlined_call_operand.vmem [shape: f32[256,256], index: 0, kind: input, shape index: {}]
  %s1 = inlined_call_operand.vmem [shape: f32[256,256], index: 1, kind: input, shape index: {}]
  %s2 = inlined_call_operand.vmem [shape: f32[1,256], index: 2, kind: input, shape index: {}]
  %s3 = inlined_call_operand.vmem [shape: f32[256,256], index: 3, kind: output, shape index: {}]
  %s4 = sld [smem:[#allocation0]]
  $region30: #{_lambda_.4} parent=0
    _
  %s6 = ssub.s32 1, %s4
  %s7 = scalar_select 0, %s6, %s4
  // Predicated region
  $region2: #{_lambda_.4} parent=0 // pred_check
    _
  $region3: #{_lambda_.4} parent=0 // pred_check_branch
    %9 = sbr.rel (0) target = $region5
  $region4: #{_lambda_.4} parent=0 // pred_region
    _
  $region5: #{_lambda_.4} parent=0 // pred_fallthru
    _
  // Predicated region
  $region6: #{_lambda_.4} parent=0 // pred_check
    _
  $region7: #{_lambda_.4} parent=0 // pred_check_branch
    %11 = sbr.rel (0) target = $region9
  $region8: #{_lambda_.4} parent=0 // pred_region
    _
  $region9: #{_lambda_.4} parent=0 // pred_fallthru
    _
  // Predicated region
  $region10: #{_lambda_.4} parent=0 // pred_check
    _
  $region11: #{_lambda_.4} parent=0 // pred_check_branch
    %13 = sbr.rel (0) target = $region13
  $region12: #{_lambda_.4} parent=0 // pred_region
    _
  $region13: #{_lambda_.4} parent=0 // pred_fallthru
    _
  %p14 = scmp.eq.s32.totalorder 0, 0
  // Predicated region
  $region14: #{_lambda_.4} parent=0 // pred_check
    %p15 = pneg %p14
  $region15: #{_lambda_.4} parent=0 // pred_check_branch
    %17 = sbr.rel (%p15) target = $region17
  $region16: #{_lambda_.4} parent=0 // pred_region
    %18 = vst [vmem:[#allocation2] sm:$0xff] 0.0
    %19 = vst [vmem:[#allocation2 + $0x8] sm:$0xff] 0.0
    %20 = vst [vmem:[#allocation2 + $0x10] sm:$0xff] 0.0
    %21 = vst [vmem:[#allocation2 + $0x18] sm:$0xff] 0.0
    %22 = vst [vmem:[#allocation2 + $0x20] sm:$0xff] 0.0
    %23 = vst [vmem:[#allocation2 + $0x28] sm:$0xff] 0.0
    %24 = vst [vmem:[#allocation2 + $0x30] sm:$0xff] 0.0
    %25 = vst [vmem:[#allocation2 + $0x38] sm:$0xff] 0.0
    %26 = vst [vmem:[#allocation2 + $0x40] sm:$0xff] 0.0
    %27 = vst [vmem:[#allocation2 + $0x48] sm:$0xff] 0.0
    %28 = vst [vmem:[#allocation2 + $0x50] sm:$0xff] 0.0
    %29 = vst [vmem:[#allocation2 + $0x58] sm:$0xff] 0.0
    %30 = vst [vmem:[#allocation2 + $0x60] sm:$0xff] 0.0
    %31 = vst [vmem:[#allocation2 + $0x68] sm:$0xff] 0.0
    %32 = vst [vmem:[#allocation2 + $0x70] sm:$0xff] 0.0
    %33 = vst [vmem:[#allocation2 + $0x78] sm:$0xff] 0.0
    %34 = vst [vmem:[#allocation2 + $0x80] sm:$0xff] 0.0
    %35 = vst [vmem:[#allocation2 + $0x88] sm:$0xff] 0.0
    %36 = vst [vmem:[#allocation2 + $0x90] sm:$0xff] 0.0
    %37 = vst [vmem:[#allocation2 + $0x98] sm:$0xff] 0.0
    %38 = vst [vmem:[#allocation2 + $0xa0] sm:$0xff] 0.0
    %39 = vst [vmem:[#allocation2 + $0xa8] sm:$0xff] 0.0
    %40 = vst [vmem:[#allocation2 + $0xb0] sm:$0xff] 0.0
    %41 = vst [vmem:[#allocation2 + $0xb8] sm:$0xff] 0.0
    %42 = vst [vmem:[#allocation2 + $0xc0] sm:$0xff] 0.0
    %43 = vst [vmem:[#allocation2 + $0xc8] sm:$0xff] 0.0
    %44 = vst [vmem:[#allocation2 + $0xd0] sm:$0xff] 0.0
    %45 = vst [vmem:[#allocation2 + $0xd8] sm:$0xff] 0.0
    %46 = vst [vmem:[#allocation2 + $0xe0] sm:$0xff] 0.0
    %47 = vst [vmem:[#allocation2 + $0xe8] sm:$0xff] 0.0
    %48 = vst [vmem:[#allocation2 + $0xf0] sm:$0xff] 0.0
    %49 = vst [vmem:[#allocation2 + $0xf8] sm:$0xff] 0.0
    %50 = vst [vmem:[#allocation2 + $0x100] sm:$0xff] 0.0
    %51 = vst [vmem:[#allocation2 + $0x108] sm:$0xff] 0.0
    %52 = vst [vmem:[#allocation2 + $0x110] sm:$0xff] 0.0
    %53 = vst [vmem:[#allocation2 + $0x118] sm:$0xff] 0.0
    %54 = vst [vmem:[#allocation2 + $0x120] sm:$0xff] 0.0
    %55 = vst [vmem:[#allocation2 + $0x128] sm:$0xff] 0.0
    %56 = vst [vmem:[#allocation2 + $0x130] sm:$0xff] 0.0
    %57 = vst [vmem:[#allocation2 + $0x138] sm:$0xff] 0.0
    %58 = vst [vmem:[#allocation2 + $0x140] sm:$0xff] 0.0
    %59 = vst [vmem:[#allocation2 + $0x148] sm:$0xff] 0.0
    %60 = vst [vmem:[#allocation2 + $0x150] sm:$0xff] 0.0
    %61 = vst [vmem:[#allocation2 + $0x158] sm:$0xff] 0.0
    %62 = vst [vmem:[#allocation2 + $0x160] sm:$0xff] 0.0
    %63 = vst [vmem:[#allocation2 + $0x168] sm:$0xff] 0.0
    %64 = vst [vmem:[#allocation2 + $0x170] sm:$0xff] 0.0
    %65 = vst [vmem:[#allocation2 + $0x178] sm:$0xff] 0.0
    %66 = vst [vmem:[#allocation2 + $0x180] sm:$0xff] 0.0
    %67 = vst [vmem:[#allocation2 + $0x188] sm:$0xff] 0.0
    %68 = vst [vmem:[#allocation2 + $0x190] sm:$0xff] 0.0
    %69 = vst [vmem:[#allocation2 + $0x198] sm:$0xff] 0.0
    %70 = vst [vmem:[#allocation2 + $0x1a0] sm:$0xff] 0.0
    %71 = vst [vmem:[#allocation2 + $0x1a8] sm:$0xff] 0.0
    %72 = vst [vmem:[#allocation2 + $0x1b0] sm:$0xff] 0.0
    %73 = vst [vmem:[#allocation2 + $0x1b8] sm:$0xff] 0.0
    %74 = vst [vmem:[#allocation2 + $0x1c0] sm:$0xff] 0.0
    %75 = vst [vmem:[#allocation2 + $0x1c8] sm:$0xff] 0.0
    %76 = vst [vmem:[#allocation2 + $0x1d0] sm:$0xff] 0.0
    %77 = vst [vmem:[#allocation2 + $0x1d8] sm:$0xff] 0.0
    %78 = vst [vmem:[#allocation2 + $0x1e0] sm:$0xff] 0.0
    %79 = vst [vmem:[#allocation2 + $0x1e8] sm:$0xff] 0.0
    %80 = vst [vmem:[#allocation2 + $0x1f0] sm:$0xff] 0.0
    %81 = vst [vmem:[#allocation2 + $0x1f8] sm:$0xff] 0.0
  $region17: #{_lambda_.4} parent=0 // pred_fallthru
    _
  %v82 = vld [vmem:[%s0] sm:$0xff]
  %v83 = vld [vmem:[%s0 + $0x8] sm:$0xff]
  %v84 = vld [vmem:[%s0 + $0x10] sm:$0xff]
  %v85 = vld [vmem:[%s0 + $0x18] sm:$0xff]
  %v86 = vld [vmem:[%s0 + $0x20] sm:$0xff]
  %v87 = vld [vmem:[%s0 + $0x28] sm:$0xff]
  %v88 = vld [vmem:[%s0 + $0x30] sm:$0xff]
  %v89 = vld [vmem:[%s0 + $0x38] sm:$0xff]
  %v90 = vld [vmem:[%s0 + $0x40] sm:$0xff]
  %v91 = vld [vmem:[%s0 + $0x48] sm:$0xff]
  %v92 = vld [vmem:[%s0 + $0x50] sm:$0xff]
  %v93 = vld [vmem:[%s0 + $0x58] sm:$0xff]
  %v94 = vld [vmem:[%s0 + $0x60] sm:$0xff]
  %v95 = vld [vmem:[%s0 + $0x68] sm:$0xff]
  %v96 = vld [vmem:[%s0 + $0x70] sm:$0xff]
  %v97 = vld [vmem:[%s0 + $0x78] sm:$0xff]
  %v98 = vld [vmem:[%s0 + $0x80] sm:$0xff]
  %v99 = vld [vmem:[%s0 + $0x88] sm:$0xff]
  %v100 = vld [vmem:[%s0 + $0x90] sm:$0xff]
  %v101 = vld [vmem:[%s0 + $0x98] sm:$0xff]
  %v102 = vld [vmem:[%s0 + $0xa0] sm:$0xff]
  %v103 = vld [vmem:[%s0 + $0xa8] sm:$0xff]
  %v104 = vld [vmem:[%s0 + $0xb0] sm:$0xff]
  %v105 = vld [vmem:[%s0 + $0xb8] sm:$0xff]
  %v106 = vld [vmem:[%s0 + $0xc0] sm:$0xff]
  %v107 = vld [vmem:[%s0 + $0xc8] sm:$0xff]
  %v108 = vld [vmem:[%s0 + $0xd0] sm:$0xff]
  %v109 = vld [vmem:[%s0 + $0xd8] sm:$0xff]
  %v110 = vld [vmem:[%s0 + $0xe0] sm:$0xff]
  %v111 = vld [vmem:[%s0 + $0xe8] sm:$0xff]
  %v112 = vld [vmem:[%s0 + $0xf0] sm:$0xff]
  %v113 = vld [vmem:[%s0 + $0xf8] sm:$0xff]
  %v114 = vld [vmem:[%s0 + $0x100] sm:$0xff]
  %v115 = vld [vmem:[%s0 + $0x108] sm:$0xff]
  %v116 = vld [vmem:[%s0 + $0x110] sm:$0xff]
  %v117 = vld [vmem:[%s0 + $0x118] sm:$0xff]
  %v118 = vld [vmem:[%s0 + $0x120] sm:$0xff]
  %v119 = vld [vmem:[%s0 + $0x128] sm:$0xff]
  %v120 = vld [vmem:[%s0 + $0x130] sm:$0xff]
  %v121 = vld [vmem:[%s0 + $0x138] sm:$0xff]
  %v122 = vld [vmem:[%s0 + $0x140] sm:$0xff]
  %v123 = vld [vmem:[%s0 + $0x148] sm:$0xff]
  %v124 = vld [vmem:[%s0 + $0x150] sm:$0xff]
  %v125 = vld [vmem:[%s0 + $0x158] sm:$0xff]
  %v126 = vld [vmem:[%s0 + $0x160] sm:$0xff]
  %v127 = vld [vmem:[%s0 + $0x168] sm:$0xff]
  %v128 = vld [vmem:[%s0 + $0x170] sm:$0xff]
  %v129 = vld [vmem:[%s0 + $0x178] sm:$0xff]
  %v130 = vld [vmem:[%s0 + $0x180] sm:$0xff]
  %v131 = vld [vmem:[%s0 + $0x188] sm:$0xff]
  %v132 = vld [vmem:[%s0 + $0x190] sm:$0xff]
  %v133 = vld [vmem:[%s0 + $0x198] sm:$0xff]
  %v134 = vld [vmem:[%s0 + $0x1a0] sm:$0xff]
  %v135 = vld [vmem:[%s0 + $0x1a8] sm:$0xff]
  %v136 = vld [vmem:[%s0 + $0x1b0] sm:$0xff]
  %v137 = vld [vmem:[%s0 + $0x1b8] sm:$0xff]
  %v138 = vld [vmem:[%s0 + $0x1c0] sm:$0xff]
  %v139 = vld [vmem:[%s0 + $0x1c8] sm:$0xff]
  %v140 = vld [vmem:[%s0 + $0x1d0] sm:$0xff]
  %v141 = vld [vmem:[%s0 + $0x1d8] sm:$0xff]
  %v142 = vld [vmem:[%s0 + $0x1e0] sm:$0xff]
  %v143 = vld [vmem:[%s0 + $0x1e8] sm:$0xff]
  %v144 = vld [vmem:[%s0 + $0x1f0] sm:$0xff]
  %v145 = vld [vmem:[%s0 + $0x1f8] sm:$0xff]
  %v146 = vld [vmem:[#allocation2] sm:$0xff]
  %v147 = vld [vmem:[#allocation2 + $0x8] sm:$0xff]
  %v148 = vld [vmem:[#allocation2 + $0x10] sm:$0xff]
  %v149 = vld [vmem:[#allocation2 + $0x18] sm:$0xff]
  %v150 = vld [vmem:[#allocation2 + $0x20] sm:$0xff]
  %v151 = vld [vmem:[#allocation2 + $0x28] sm:$0xff]
  %v152 = vld [vmem:[#allocation2 + $0x30] sm:$0xff]
  %v153 = vld [vmem:[#allocation2 + $0x38] sm:$0xff]
  %v154 = vld [vmem:[#allocation2 + $0x40] sm:$0xff]
  %v155 = vld [vmem:[#allocation2 + $0x48] sm:$0xff]
  %v156 = vld [vmem:[#allocation2 + $0x50] sm:$0xff]
  %v157 = vld [vmem:[#allocation2 + $0x58] sm:$0xff]
  %v158 = vld [vmem:[#allocation2 + $0x60] sm:$0xff]
  %v159 = vld [vmem:[#allocation2 + $0x68] sm:$0xff]
  %v160 = vld [vmem:[#allocation2 + $0x70] sm:$0xff]
  %v161 = vld [vmem:[#allocation2 + $0x78] sm:$0xff]
  %v162 = vld [vmem:[#allocation2 + $0x80] sm:$0xff]
  %v163 = vld [vmem:[#allocation2 + $0x88] sm:$0xff]
  %v164 = vld [vmem:[#allocation2 + $0x90] sm:$0xff]
  %v165 = vld [vmem:[#allocation2 + $0x98] sm:$0xff]
  %v166 = vld [vmem:[#allocation2 + $0xa0] sm:$0xff]
  %v167 = vld [vmem:[#allocation2 + $0xa8] sm:$0xff]
  %v168 = vld [vmem:[#allocation2 + $0xb0] sm:$0xff]
  %v169 = vld [vmem:[#allocation2 + $0xb8] sm:$0xff]
  %v170 = vld [vmem:[#allocation2 + $0xc0] sm:$0xff]
  %v171 = vld [vmem:[#allocation2 + $0xc8] sm:$0xff]
  %v172 = vld [vmem:[#allocation2 + $0xd0] sm:$0xff]
  %v173 = vld [vmem:[#allocation2 + $0xd8] sm:$0xff]
  %v174 = vld [vmem:[#allocation2 + $0xe0] sm:$0xff]
  %v175 = vld [vmem:[#allocation2 + $0xe8] sm:$0xff]
  %v176 = vld [vmem:[#allocation2 + $0xf0] sm:$0xff]
  %v177 = vld [vmem:[#allocation2 + $0xf8] sm:$0xff]
  %v178 = vld [vmem:[#allocation2 + $0x100] sm:$0xff]
  %v179 = vld [vmem:[#allocation2 + $0x108] sm:$0xff]
  %v180 = vld [vmem:[#allocation2 + $0x110] sm:$0xff]
  %v181 = vld [vmem:[#allocation2 + $0x118] sm:$0xff]
  %v182 = vld [vmem:[#allocation2 + $0x120] sm:$0xff]
  %v183 = vld [vmem:[#allocation2 + $0x128] sm:$0xff]
  %v184 = vld [vmem:[#allocation2 + $0x130] sm:$0xff]
  %v185 = vld [vmem:[#allocation2 + $0x138] sm:$0xff]
  %v186 = vld [vmem:[#allocation2 + $0x140] sm:$0xff]
  %v187 = vld [vmem:[#allocation2 + $0x148] sm:$0xff]
  %v188 = vld [vmem:[#allocation2 + $0x150] sm:$0xff]
  %v189 = vld [vmem:[#allocation2 + $0x158] sm:$0xff]
  %v190 = vld [vmem:[#allocation2 + $0x160] sm:$0xff]
  %v191 = vld [vmem:[#allocation2 + $0x168] sm:$0xff]
  %v192 = vld [vmem:[#allocation2 + $0x170] sm:$0xff]
  %v193 = vld [vmem:[#allocation2 + $0x178] sm:$0xff]
  %v194 = vld [vmem:[#allocation2 + $0x180] sm:$0xff]
  %v195 = vld [vmem:[#allocation2 + $0x188] sm:$0xff]
  %v196 = vld [vmem:[#allocation2 + $0x190] sm:$0xff]
  %v197 = vld [vmem:[#allocation2 + $0x198] sm:$0xff]
  %v198 = vld [vmem:[#allocation2 + $0x1a0] sm:$0xff]
  %v199 = vld [vmem:[#allocation2 + $0x1a8] sm:$0xff]
  %v200 = vld [vmem:[#allocation2 + $0x1b0] sm:$0xff]
  %v201 = vld [vmem:[#allocation2 + $0x1b8] sm:$0xff]
  %v202 = vld [vmem:[#allocation2 + $0x1c0] sm:$0xff]
  %v203 = vld [vmem:[#allocation2 + $0x1c8] sm:$0xff]
  %v204 = vld [vmem:[#allocation2 + $0x1d0] sm:$0xff]
  %v205 = vld [vmem:[#allocation2 + $0x1d8] sm:$0xff]
  %v206 = vld [vmem:[#allocation2 + $0x1e0] sm:$0xff]
  %v207 = vld [vmem:[#allocation2 + $0x1e8] sm:$0xff]
  %v208 = vld [vmem:[#allocation2 + $0x1f0] sm:$0xff]
  %v209 = vld [vmem:[#allocation2 + $0x1f8] sm:$0xff]
  %v210 = vpack.c.bf16 %v84, %v82
  %v211 = vpack.c.bf16 %v85, %v83
  %v212 = vpack.c.bf16 %v88, %v86
  %v213 = vpack.c.bf16 %v89, %v87
  %v214 = vpack.c.bf16 %v92, %v90
  %v215 = vpack.c.bf16 %v93, %v91
  %v216 = vpack.c.bf16 %v96, %v94
  %v217 = vpack.c.bf16 %v97, %v95
  %v218 = vpack.c.bf16 %v100, %v98
  %v219 = vpack.c.bf16 %v101, %v99
  %v220 = vpack.c.bf16 %v104, %v102
  %v221 = vpack.c.bf16 %v105, %v103
  %v222 = vpack.c.bf16 %v108, %v106
  %v223 = vpack.c.bf16 %v109, %v107
  %v224 = vpack.c.bf16 %v112, %v110
  %v225 = vpack.c.bf16 %v113, %v111
  %v226 = vpack.c.bf16 %v116, %v114
  %v227 = vpack.c.bf16 %v117, %v115
  %v228 = vpack.c.bf16 %v120, %v118
  %v229 = vpack.c.bf16 %v121, %v119
  %v230 = vpack.c.bf16 %v124, %v122
  %v231 = vpack.c.bf16 %v125, %v123
  %v232 = vpack.c.bf16 %v128, %v126
  %v233 = vpack.c.bf16 %v129, %v127
  %v234 = vpack.c.bf16 %v132, %v130
  %v235 = vpack.c.bf16 %v133, %v131
  %v236 = vpack.c.bf16 %v136, %v134
  %v237 = vpack.c.bf16 %v137, %v135
  %v238 = vpack.c.bf16 %v140, %v138
  %v239 = vpack.c.bf16 %v141, %v139
  %v240 = vpack.c.bf16 %v144, %v142
  %v241 = vpack.c.bf16 %v145, %v143
  %v242 = vld [vmem:[%s1] sm:$0xff]
  %v243 = vld [vmem:[%s1 + $0x8] sm:$0xff]
  %v244 = vld [vmem:[%s1 + $0x10] sm:$0xff]
  %v245 = vld [vmem:[%s1 + $0x18] sm:$0xff]
  %v246 = vld [vmem:[%s1 + $0x20] sm:$0xff]
  %v247 = vld [vmem:[%s1 + $0x28] sm:$0xff]
  %v248 = vld [vmem:[%s1 + $0x30] sm:$0xff]
  %v249 = vld [vmem:[%s1 + $0x38] sm:$0xff]
  %v250 = vld [vmem:[%s1 + $0x40] sm:$0xff]
  %v251 = vld [vmem:[%s1 + $0x48] sm:$0xff]
  %v252 = vld [vmem:[%s1 + $0x50] sm:$0xff]
  %v253 = vld [vmem:[%s1 + $0x58] sm:$0xff]
  %v254 = vld [vmem:[%s1 + $0x60] sm:$0xff]
  %v255 = vld [vmem:[%s1 + $0x68] sm:$0xff]
  %v256 = vld [vmem:[%s1 + $0x70] sm:$0xff]
  %v257 = vld [vmem:[%s1 + $0x78] sm:$0xff]
  %v258 = vld [vmem:[%s1 + $0x80] sm:$0xff]
  %v259 = vld [vmem:[%s1 + $0x88] sm:$0xff]
  %v260 = vld [vmem:[%s1 + $0x90] sm:$0xff]
  %v261 = vld [vmem:[%s1 + $0x98] sm:$0xff]
  %v262 = vld [vmem:[%s1 + $0xa0] sm:$0xff]
  %v263 = vld [vmem:[%s1 + $0xa8] sm:$0xff]
  %v264 = vld [vmem:[%s1 + $0xb0] sm:$0xff]
  %v265 = vld [vmem:[%s1 + $0xb8] sm:$0xff]
  %v266 = vld [vmem:[%s1 + $0xc0] sm:$0xff]
  %v267 = vld [vmem:[%s1 + $0xc8] sm:$0xff]
  %v268 = vld [vmem:[%s1 + $0xd0] sm:$0xff]
  %v269 = vld [vmem:[%s1 + $0xd8] sm:$0xff]
  %v270 = vld [vmem:[%s1 + $0xe0] sm:$0xff]
  %v271 = vld [vmem:[%s1 + $0xe8] sm:$0xff]
  %v272 = vld [vmem:[%s1 + $0xf0] sm:$0xff]
  %v273 = vld [vmem:[%s1 + $0xf8] sm:$0xff]
  %v274 = vld [vmem:[%s1 + $0x100] sm:$0xff]
  %v275 = vld [vmem:[%s1 + $0x108] sm:$0xff]
  %v276 = vld [vmem:[%s1 + $0x110] sm:$0xff]
  %v277 = vld [vmem:[%s1 + $0x118] sm:$0xff]
  %v278 = vld [vmem:[%s1 + $0x120] sm:$0xff]
  %v279 = vld [vmem:[%s1 + $0x128] sm:$0xff]
  %v280 = vld [vmem:[%s1 + $0x130] sm:$0xff]
  %v281 = vld [vmem:[%s1 + $0x138] sm:$0xff]
  %v282 = vld [vmem:[%s1 + $0x140] sm:$0xff]
  %v283 = vld [vmem:[%s1 + $0x148] sm:$0xff]
  %v284 = vld [vmem:[%s1 + $0x150] sm:$0xff]
  %v285 = vld [vmem:[%s1 + $0x158] sm:$0xff]
  %v286 = vld [vmem:[%s1 + $0x160] sm:$0xff]
  %v287 = vld [vmem:[%s1 + $0x168] sm:$0xff]
  %v288 = vld [vmem:[%s1 + $0x170] sm:$0xff]
  %v289 = vld [vmem:[%s1 + $0x178] sm:$0xff]
  %v290 = vld [vmem:[%s1 + $0x180] sm:$0xff]
  %v291 = vld [vmem:[%s1 + $0x188] sm:$0xff]
  %v292 = vld [vmem:[%s1 + $0x190] sm:$0xff]
  %v293 = vld [vmem:[%s1 + $0x198] sm:$0xff]
  %v294 = vld [vmem:[%s1 + $0x1a0] sm:$0xff]
  %v295 = vld [vmem:[%s1 + $0x1a8] sm:$0xff]
  %v296 = vld [vmem:[%s1 + $0x1b0] sm:$0xff]
  %v297 = vld [vmem:[%s1 + $0x1b8] sm:$0xff]
  %v298 = vld [vmem:[%s1 + $0x1c0] sm:$0xff]
  %v299 = vld [vmem:[%s1 + $0x1c8] sm:$0xff]
  %v300 = vld [vmem:[%s1 + $0x1d0] sm:$0xff]
  %v301 = vld [vmem:[%s1 + $0x1d8] sm:$0xff]
  %v302 = vld [vmem:[%s1 + $0x1e0] sm:$0xff]
  %v303 = vld [vmem:[%s1 + $0x1e8] sm:$0xff]
  %v304 = vld [vmem:[%s1 + $0x1f0] sm:$0xff]
  %v305 = vld [vmem:[%s1 + $0x1f8] sm:$0xff]
  %v306 = vpack.c.bf16 %v244, %v242
  %v307 = vpack.c.bf16 %v245, %v243
  %v308 = vpack.c.bf16 %v248, %v246
  %v309 = vpack.c.bf16 %v249, %v247
  %v310 = vpack.c.bf16 %v252, %v250
  %v311 = vpack.c.bf16 %v253, %v251
  %v312 = vpack.c.bf16 %v256, %v254
  %v313 = vpack.c.bf16 %v257, %v255
  %v314 = vpack.c.bf16 %v260, %v258
  %v315 = vpack.c.bf16 %v261, %v259
  %v316 = vpack.c.bf16 %v264, %v262
  %v317 = vpack.c.bf16 %v265, %v263
  %v318 = vpack.c.bf16 %v268, %v266
  %v319 = vpack.c.bf16 %v269, %v267
  %v320 = vpack.c.bf16 %v272, %v270
  %v321 = vpack.c.bf16 %v273, %v271
  %v322 = vpack.c.bf16 %v276, %v274
  %v323 = vpack.c.bf16 %v277, %v275
  %v324 = vpack.c.bf16 %v280, %v278
  %v325 = vpack.c.bf16 %v281, %v279
  %v326 = vpack.c.bf16 %v284, %v282
  %v327 = vpack.c.bf16 %v285, %v283
  %v328 = vpack.c.bf16 %v288, %v286
  %v329 = vpack.c.bf16 %v289, %v287
  %v330 = vpack.c.bf16 %v292, %v290
  %v331 = vpack.c.bf16 %v293, %v291
  %v332 = vpack.c.bf16 %v296, %v294
  %v333 = vpack.c.bf16 %v297, %v295
  %v334 = vpack.c.bf16 %v300, %v298
  %v335 = vpack.c.bf16 %v301, %v299
  %v336 = vpack.c.bf16 %v304, %v302
  %v337 = vpack.c.bf16 %v305, %v303
  %338 = vmatpush.bf16.msra.mxu0 %v320
  %339 = vmatpush.bf16.msra.mxu0 %v318
  %340 = vmatpush.bf16.msra.mxu0 %v316
  %341 = vmatpush.bf16.msra.mxu0 %v314
  %342 = vmatpush.bf16.msra.mxu0 %v312
  %343 = vmatpush.bf16.msra.mxu0 %v310
  %344 = vmatpush.bf16.msra.mxu0 %v308
  %345 = vmatpush.bf16.msra.mxu0 %v306
  %346 = vmatmul.bf16.gmra.mxu0 %v210
  %v347 = vpop.f32.mrf.mxu0
  %v348 = vadd.f32 0.0, %v347
  %v349 = vpop.f32.mrf.mxu0
  %v350 = vadd.f32 0.0, %v349
  %351 = vmatmul.bf16.gmra.mxu0 %v212
  %v352 = vpop.f32.mrf.mxu0
  %v353 = vadd.f32 0.0, %v352
  %v354 = vpop.f32.mrf.mxu0
  %v355 = vadd.f32 0.0, %v354
  %356 = vmatmul.bf16.gmra.mxu0 %v214
  %v357 = vpop.f32.mrf.mxu0
  %v358 = vadd.f32 0.0, %v357
  %v359 = vpop.f32.mrf.mxu0
  %v360 = vadd.f32 0.0, %v359
  %361 = vmatmul.bf16.gmra.mxu0 %v216
  %v362 = vpop.f32.mrf.mxu0
  %v363 = vadd.f32 0.0, %v362
  %v364 = vpop.f32.mrf.mxu0
  %v365 = vadd.f32 0.0, %v364
  %366 = vmatmul.bf16.gmra.mxu0 %v218
  %v367 = vpop.f32.mrf.mxu0
  %v368 = vadd.f32 0.0, %v367
  %v369 = vpop.f32.mrf.mxu0
  %v370 = vadd.f32 0.0, %v369
  %371 = vmatmul.bf16.gmra.mxu0 %v220
  %v372 = vpop.f32.mrf.mxu0
  %v373 = vadd.f32 0.0, %v372
  %v374 = vpop.f32.mrf.mxu0
  %v375 = vadd.f32 0.0, %v374
  %376 = vmatmul.bf16.gmra.mxu0 %v222
  %v377 = vpop.f32.mrf.mxu0
  %v378 = vadd.f32 0.0, %v377
  %v379 = vpop.f32.mrf.mxu0
  %v380 = vadd.f32 0.0, %v379
  %381 = vmatmul.bf16.gmra.mxu0 %v224
  %v382 = vpop.f32.mrf.mxu0
  %v383 = vadd.f32 0.0, %v382
  %v384 = vpop.f32.mrf.mxu0
  %v385 = vadd.f32 0.0, %v384
  %386 = vmatmul.bf16.gmra.mxu0 %v226
  %v387 = vpop.f32.mrf.mxu0
  %v388 = vadd.f32 0.0, %v387
  %v389 = vpop.f32.mrf.mxu0
  %v390 = vadd.f32 0.0, %v389
  %391 = vmatmul.bf16.gmra.mxu0 %v228
  %v392 = vpop.f32.mrf.mxu0
  %v393 = vadd.f32 0.0, %v392
  %v394 = vpop.f32.mrf.mxu0
  %v395 = vadd.f32 0.0, %v394
  %396 = vmatmul.bf16.gmra.mxu0 %v230
  %v397 = vpop.f32.mrf.mxu0
  %v398 = vadd.f32 0.0, %v397
  %v399 = vpop.f32.mrf.mxu0
  %v400 = vadd.f32 0.0, %v399
  %401 = vmatmul.bf16.gmra.mxu0 %v232
  %v402 = vpop.f32.mrf.mxu0
  %v403 = vadd.f32 0.0, %v402
  %v404 = vpop.f32.mrf.mxu0
  %v405 = vadd.f32 0.0, %v404
  %406 = vmatmul.bf16.gmra.mxu0 %v234
  %v407 = vpop.f32.mrf.mxu0
  %v408 = vadd.f32 0.0, %v407
  %v409 = vpop.f32.mrf.mxu0
  %v410 = vadd.f32 0.0, %v409
  %411 = vmatmul.bf16.gmra.mxu0 %v236
  %v412 = vpop.f32.mrf.mxu0
  %v413 = vadd.f32 0.0, %v412
  %v414 = vpop.f32.mrf.mxu0
  %v415 = vadd.f32 0.0, %v414
  %416 = vmatmul.bf16.gmra.mxu0 %v238
  %v417 = vpop.f32.mrf.mxu0
  %v418 = vadd.f32 0.0, %v417
  %v419 = vpop.f32.mrf.mxu0
  %v420 = vadd.f32 0.0, %v419
  %421 = vmatmul.bf16.gmra.mxu0 %v240
  %v422 = vpop.f32.mrf.mxu0
  %v423 = vadd.f32 0.0, %v422
  %v424 = vpop.f32.mrf.mxu0
  %v425 = vadd.f32 0.0, %v424
  %426 = vdwg.mxu0
  %427 = vmatpush.bf16.msra.mxu0 %v336
  %428 = vmatpush.bf16.msra.mxu0 %v334
  %429 = vmatpush.bf16.msra.mxu0 %v332
  %430 = vmatpush.bf16.msra.mxu0 %v330
  %431 = vmatpush.bf16.msra.mxu0 %v328
  %432 = vmatpush.bf16.msra.mxu0 %v326
  %433 = vmatpush.bf16.msra.mxu0 %v324
  %434 = vmatpush.bf16.msra.mxu0 %v322
  %435 = vmatmul.bf16.gmra.mxu0 %v211
  %v436 = vpop.f32.mrf.mxu0
  %v437 = vadd.f32 %v348, %v436
  %v438 = vpop.f32.mrf.mxu0
  %v439 = vadd.f32 %v350, %v438
  %440 = vmatmul.bf16.gmra.mxu0 %v213
  %v441 = vpop.f32.mrf.mxu0
  %v442 = vadd.f32 %v353, %v441
  %v443 = vpop.f32.mrf.mxu0
  %v444 = vadd.f32 %v355, %v443
  %445 = vmatmul.bf16.gmra.mxu0 %v215
  %v446 = vpop.f32.mrf.mxu0
  %v447 = vadd.f32 %v358, %v446
  %v448 = vpop.f32.mrf.mxu0
  %v449 = vadd.f32 %v360, %v448
  %450 = vmatmul.bf16.gmra.mxu0 %v217
  %v451 = vpop.f32.mrf.mxu0
  %v452 = vadd.f32 %v363, %v451
  %v453 = vpop.f32.mrf.mxu0
  %v454 = vadd.f32 %v365, %v453
  %455 = vmatmul.bf16.gmra.mxu0 %v219
  %v456 = vpop.f32.mrf.mxu0
  %v457 = vadd.f32 %v368, %v456
  %v458 = vpop.f32.mrf.mxu0
  %v459 = vadd.f32 %v370, %v458
  %460 = vmatmul.bf16.gmra.mxu0 %v221
  %v461 = vpop.f32.mrf.mxu0
  %v462 = vadd.f32 %v373, %v461
  %v463 = vpop.f32.mrf.mxu0
  %v464 = vadd.f32 %v375, %v463
  %465 = vmatmul.bf16.gmra.mxu0 %v223
  %v466 = vpop.f32.mrf.mxu0
  %v467 = vadd.f32 %v378, %v466
  %v468 = vpop.f32.mrf.mxu0
  %v469 = vadd.f32 %v380, %v468
  %470 = vmatmul.bf16.gmra.mxu0 %v225
  %v471 = vpop.f32.mrf.mxu0
  %v472 = vadd.f32 %v383, %v471
  %v473 = vpop.f32.mrf.mxu0
  %v474 = vadd.f32 %v385, %v473
  %475 = vmatmul.bf16.gmra.mxu0 %v227
  %v476 = vpop.f32.mrf.mxu0
  %v477 = vadd.f32 %v388, %v476
  %v478 = vpop.f32.mrf.mxu0
  %v479 = vadd.f32 %v390, %v478
  %480 = vmatmul.bf16.gmra.mxu0 %v229
  %v481 = vpop.f32.mrf.mxu0
  %v482 = vadd.f32 %v393, %v481
  %v483 = vpop.f32.mrf.mxu0
  %v484 = vadd.f32 %v395, %v483
  %485 = vmatmul.bf16.gmra.mxu0 %v231
  %v486 = vpop.f32.mrf.mxu0
  %v487 = vadd.f32 %v398, %v486
  %v488 = vpop.f32.mrf.mxu0
  %v489 = vadd.f32 %v400, %v488
  %490 = vmatmul.bf16.gmra.mxu0 %v233
  %v491 = vpop.f32.mrf.mxu0
  %v492 = vadd.f32 %v403, %v491
  %v493 = vpop.f32.mrf.mxu0
  %v494 = vadd.f32 %v405, %v493
  %495 = vmatmul.bf16.gmra.mxu0 %v235
  %v496 = vpop.f32.mrf.mxu0
  %v497 = vadd.f32 %v408, %v496
  %v498 = vpop.f32.mrf.mxu0
  %v499 = vadd.f32 %v410, %v498
  %500 = vmatmul.bf16.gmra.mxu0 %v237
  %v501 = vpop.f32.mrf.mxu0
  %v502 = vadd.f32 %v413, %v501
  %v503 = vpop.f32.mrf.mxu0
  %v504 = vadd.f32 %v415, %v503
  %505 = vmatmul.bf16.gmra.mxu0 %v239
  %v506 = vpop.f32.mrf.mxu0
  %v507 = vadd.f32 %v418, %v506
  %v508 = vpop.f32.mrf.mxu0
  %v509 = vadd.f32 %v420, %v508
  %510 = vmatmul.bf16.gmra.mxu0 %v241
  %v511 = vpop.f32.mrf.mxu0
  %v512 = vadd.f32 %v423, %v511
  %v513 = vpop.f32.mrf.mxu0
  %v514 = vadd.f32 %v425, %v513
  %515 = vdwg.mxu0
  %516 = vmatpush.bf16.msra.mxu0 %v321
  %517 = vmatpush.bf16.msra.mxu0 %v319
  %518 = vmatpush.bf16.msra.mxu0 %v317
  %519 = vmatpush.bf16.msra.mxu0 %v315
  %520 = vmatpush.bf16.msra.mxu0 %v313
  %521 = vmatpush.bf16.msra.mxu0 %v311
  %522 = vmatpush.bf16.msra.mxu0 %v309
  %523 = vmatpush.bf16.msra.mxu0 %v307
  %524 = vmatmul.bf16.gmra.mxu0 %v210
  %v525 = vpop.f32.mrf.mxu0
  %v526 = vadd.f32 0.0, %v525
  %v527 = vpop.f32.mrf.mxu0
  %v528 = vadd.f32 0.0, %v527
  %529 = vmatmul.bf16.gmra.mxu0 %v212
  %v530 = vpop.f32.mrf.mxu0
  %v531 = vadd.f32 0.0, %v530
  %v532 = vpop.f32.mrf.mxu0
  %v533 = vadd.f32 0.0, %v532
  %534 = vmatmul.bf16.gmra.mxu0 %v214
  %v535 = vpop.f32.mrf.mxu0
  %v536 = vadd.f32 0.0, %v535
  %v537 = vpop.f32.mrf.mxu0
  %v538 = vadd.f32 0.0, %v537
  %539 = vmatmul.bf16.gmra.mxu0 %v216
  %v540 = vpop.f32.mrf.mxu0
  %v541 = vadd.f32 0.0, %v540
  %v542 = vpop.f32.mrf.mxu0
  %v543 = vadd.f32 0.0, %v542
  %544 = vmatmul.bf16.gmra.mxu0 %v218
  %v545 = vpop.f32.mrf.mxu0
  %v546 = vadd.f32 0.0, %v545
  %v547 = vpop.f32.mrf.mxu0
  %v548 = vadd.f32 0.0, %v547
  %549 = vmatmul.bf16.gmra.mxu0 %v220
  %v550 = vpop.f32.mrf.mxu0
  %v551 = vadd.f32 0.0, %v550
  %v552 = vpop.f32.mrf.mxu0
  %v553 = vadd.f32 0.0, %v552
  %554 = vmatmul.bf16.gmra.mxu0 %v222
  %v555 = vpop.f32.mrf.mxu0
  %v556 = vadd.f32 0.0, %v555
  %v557 = vpop.f32.mrf.mxu0
  %v558 = vadd.f32 0.0, %v557
  %559 = vmatmul.bf16.gmra.mxu0 %v224
  %v560 = vpop.f32.mrf.mxu0
  %v561 = vadd.f32 0.0, %v560
  %v562 = vpop.f32.mrf.mxu0
  %v563 = vadd.f32 0.0, %v562
  %564 = vmatmul.bf16.gmra.mxu0 %v226
  %v565 = vpop.f32.mrf.mxu0
  %v566 = vadd.f32 0.0, %v565
  %v567 = vpop.f32.mrf.mxu0
  %v568 = vadd.f32 0.0, %v567
  %569 = vmatmul.bf16.gmra.mxu0 %v228
  %v570 = vpop.f32.mrf.mxu0
  %v571 = vadd.f32 0.0, %v570
  %v572 = vpop.f32.mrf.mxu0
  %v573 = vadd.f32 0.0, %v572
  %574 = vmatmul.bf16.gmra.mxu0 %v230
  %v575 = vpop.f32.mrf.mxu0
  %v576 = vadd.f32 0.0, %v575
  %v577 = vpop.f32.mrf.mxu0
  %v578 = vadd.f32 0.0, %v577
  %579 = vmatmul.bf16.gmra.mxu0 %v232
  %v580 = vpop.f32.mrf.mxu0
  %v581 = vadd.f32 0.0, %v580
  %v582 = vpop.f32.mrf.mxu0
  %v583 = vadd.f32 0.0, %v582
  %584 = vmatmul.bf16.gmra.mxu0 %v234
  %v585 = vpop.f32.mrf.mxu0
  %v586 = vadd.f32 0.0, %v585
  %v587 = vpop.f32.mrf.mxu0
  %v588 = vadd.f32 0.0, %v587
  %589 = vmatmul.bf16.gmra.mxu0 %v236
  %v590 = vpop.f32.mrf.mxu0
  %v591 = vadd.f32 0.0, %v590
  %v592 = vpop.f32.mrf.mxu0
  %v593 = vadd.f32 0.0, %v592
  %594 = vmatmul.bf16.gmra.mxu0 %v238
  %v595 = vpop.f32.mrf.mxu0
  %v596 = vadd.f32 0.0, %v595
  %v597 = vpop.f32.mrf.mxu0
  %v598 = vadd.f32 0.0, %v597
  %599 = vmatmul.bf16.gmra.mxu0 %v240
  %v600 = vpop.f32.mrf.mxu0
  %v601 = vadd.f32 0.0, %v600
  %v602 = vpop.f32.mrf.mxu0
  %v603 = vadd.f32 0.0, %v602
  %604 = vdwg.mxu0
  %605 = vmatpush.bf16.msra.mxu0 %v337
  %606 = vmatpush.bf16.msra.mxu0 %v335
  %607 = vmatpush.bf16.msra.mxu0 %v333
  %608 = vmatpush.bf16.msra.mxu0 %v331
  %609 = vmatpush.bf16.msra.mxu0 %v329
  %610 = vmatpush.bf16.msra.mxu0 %v327
  %611 = vmatpush.bf16.msra.mxu0 %v325
  %612 = vmatpush.bf16.msra.mxu0 %v323
  %613 = vmatmul.bf16.gmra.mxu0 %v211
  %v614 = vpop.f32.mrf.mxu0
  %v615 = vadd.f32 %v526, %v614
  %v616 = vpop.f32.mrf.mxu0
  %v617 = vadd.f32 %v528, %v616
  %618 = vmatmul.bf16.gmra.mxu0 %v213
  %v619 = vpop.f32.mrf.mxu0
  %v620 = vadd.f32 %v531, %v619
  %v621 = vpop.f32.mrf.mxu0
  %v622 = vadd.f32 %v533, %v621
  %623 = vmatmul.bf16.gmra.mxu0 %v215
  %v624 = vpop.f32.mrf.mxu0
  %v625 = vadd.f32 %v536, %v624
  %v626 = vpop.f32.mrf.mxu0
  %v627 = vadd.f32 %v538, %v626
  %628 = vmatmul.bf16.gmra.mxu0 %v217
  %v629 = vpop.f32.mrf.mxu0
  %v630 = vadd.f32 %v541, %v629
  %v631 = vpop.f32.mrf.mxu0
  %v632 = vadd.f32 %v543, %v631
  %633 = vmatmul.bf16.gmra.mxu0 %v219
  %v634 = vpop.f32.mrf.mxu0
  %v635 = vadd.f32 %v546, %v634
  %v636 = vpop.f32.mrf.mxu0
  %v637 = vadd.f32 %v548, %v636
  %638 = vmatmul.bf16.gmra.mxu0 %v221
  %v639 = vpop.f32.mrf.mxu0
  %v640 = vadd.f32 %v551, %v639
  %v641 = vpop.f32.mrf.mxu0
  %v642 = vadd.f32 %v553, %v641
  %643 = vmatmul.bf16.gmra.mxu0 %v223
  %v644 = vpop.f32.mrf.mxu0
  %v645 = vadd.f32 %v556, %v644
  %v646 = vpop.f32.mrf.mxu0
  %v647 = vadd.f32 %v558, %v646
  %648 = vmatmul.bf16.gmra.mxu0 %v225
  %v649 = vpop.f32.mrf.mxu0
  %v650 = vadd.f32 %v561, %v649
  %v651 = vpop.f32.mrf.mxu0
  %v652 = vadd.f32 %v563, %v651
  %653 = vmatmul.bf16.gmra.mxu0 %v227
  %v654 = vpop.f32.mrf.mxu0
  %v655 = vadd.f32 %v566, %v654
  %v656 = vpop.f32.mrf.mxu0
  %v657 = vadd.f32 %v568, %v656
  %658 = vmatmul.bf16.gmra.mxu0 %v229
  %v659 = vpop.f32.mrf.mxu0
  %v660 = vadd.f32 %v571, %v659
  %v661 = vpop.f32.mrf.mxu0
  %v662 = vadd.f32 %v573, %v661
  %663 = vmatmul.bf16.gmra.mxu0 %v231
  %v664 = vpop.f32.mrf.mxu0
  %v665 = vadd.f32 %v576, %v664
  %v666 = vpop.f32.mrf.mxu0
  %v667 = vadd.f32 %v578, %v666
  %668 = vmatmul.bf16.gmra.mxu0 %v233
  %v669 = vpop.f32.mrf.mxu0
  %v670 = vadd.f32 %v581, %v669
  %v671 = vpop.f32.mrf.mxu0
  %v672 = vadd.f32 %v583, %v671
  %673 = vmatmul.bf16.gmra.mxu0 %v235
  %v674 = vpop.f32.mrf.mxu0
  %v675 = vadd.f32 %v586, %v674
  %v676 = vpop.f32.mrf.mxu0
  %v677 = vadd.f32 %v588, %v676
  %678 = vmatmul.bf16.gmra.mxu0 %v237
  %v679 = vpop.f32.mrf.mxu0
  %v680 = vadd.f32 %v591, %v679
  %v681 = vpop.f32.mrf.mxu0
  %v682 = vadd.f32 %v593, %v681
  %683 = vmatmul.bf16.gmra.mxu0 %v239
  %v684 = vpop.f32.mrf.mxu0
  %v685 = vadd.f32 %v596, %v684
  %v686 = vpop.f32.mrf.mxu0
  %v687 = vadd.f32 %v598, %v686
  %688 = vmatmul.bf16.gmra.mxu0 %v241
  %v689 = vpop.f32.mrf.mxu0
  %v690 = vadd.f32 %v601, %v689
  %v691 = vpop.f32.mrf.mxu0
  %v692 = vadd.f32 %v603, %v691
  %693 = vdwg.mxu0
  %v694 = vadd.f32 %v146, %v437
  %v695 = vadd.f32 %v147, %v615
  %v696 = vadd.f32 %v148, %v439
  %v697 = vadd.f32 %v149, %v617
  %v698 = vadd.f32 %v150, %v442
  %v699 = vadd.f32 %v151, %v620
  %v700 = vadd.f32 %v152, %v444
  %v701 = vadd.f32 %v153, %v622
  %v702 = vadd.f32 %v154, %v447
  %v703 = vadd.f32 %v155, %v625
  %v704 = vadd.f32 %v156, %v449
  %v705 = vadd.f32 %v157, %v627
  %v706 = vadd.f32 %v158, %v452
  %v707 = vadd.f32 %v159, %v630
  %v708 = vadd.f32 %v160, %v454
  %v709 = vadd.f32 %v161, %v632
  %v710 = vadd.f32 %v162, %v457
  %v711 = vadd.f32 %v163, %v635
  %v712 = vadd.f32 %v164, %v459
  %v713 = vadd.f32 %v165, %v637
  %v714 = vadd.f32 %v166, %v462
  %v715 = vadd.f32 %v167, %v640
  %v716 = vadd.f32 %v168, %v464
  %v717 = vadd.f32 %v169, %v642
  %v718 = vadd.f32 %v170, %v467
  %v719 = vadd.f32 %v171, %v645
  %v720 = vadd.f32 %v172, %v469
  %v721 = vadd.f32 %v173, %v647
  %v722 = vadd.f32 %v174, %v472
  %v723 = vadd.f32 %v175, %v650
  %v724 = vadd.f32 %v176, %v474
  %v725 = vadd.f32 %v177, %v652
  %v726 = vadd.f32 %v178, %v477
  %v727 = vadd.f32 %v179, %v655
  %v728 = vadd.f32 %v180, %v479
  %v729 = vadd.f32 %v181, %v657
  %v730 = vadd.f32 %v182, %v482
  %v731 = vadd.f32 %v183, %v660
  %v732 = vadd.f32 %v184, %v484
  %v733 = vadd.f32 %v185, %v662
  %v734 = vadd.f32 %v186, %v487
  %v735 = vadd.f32 %v187, %v665
  %v736 = vadd.f32 %v188, %v489
  %v737 = vadd.f32 %v189, %v667
  %v738 = vadd.f32 %v190, %v492
  %v739 = vadd.f32 %v191, %v670
  %v740 = vadd.f32 %v192, %v494
  %v741 = vadd.f32 %v193, %v672
  %v742 = vadd.f32 %v194, %v497
  %v743 = vadd.f32 %v195, %v675
  %v744 = vadd.f32 %v196, %v499
  %v745 = vadd.f32 %v197, %v677
  %v746 = vadd.f32 %v198, %v502
  %v747 = vadd.f32 %v199, %v680
  %v748 = vadd.f32 %v200, %v504
  %v749 = vadd.f32 %v201, %v682
  %v750 = vadd.f32 %v202, %v507
  %v751 = vadd.f32 %v203, %v685
  %v752 = vadd.f32 %v204, %v509
  %v753 = vadd.f32 %v205, %v687
  %v754 = vadd.f32 %v206, %v512
  %v755 = vadd.f32 %v207, %v690
  %v756 = vadd.f32 %v208, %v514
  %v757 = vadd.f32 %v209, %v692
  %758 = vst [vmem:[#allocation2] sm:$0xff] %v694
  %759 = vst [vmem:[#allocation2 + $0x8] sm:$0xff] %v695
  %760 = vst [vmem:[#allocation2 + $0x10] sm:$0xff] %v696
  %761 = vst [vmem:[#allocation2 + $0x18] sm:$0xff] %v697
  %762 = vst [vmem:[#allocation2 + $0x20] sm:$0xff] %v698
  %763 = vst [vmem:[#allocation2 + $0x28] sm:$0xff] %v699
  %764 = vst [vmem:[#allocation2 + $0x30] sm:$0xff] %v700
  %765 = vst [vmem:[#allocation2 + $0x38] sm:$0xff] %v701
  %766 = vst [vmem:[#allocation2 + $0x40] sm:$0xff] %v702
  %767 = vst [vmem:[#allocation2 + $0x48] sm:$0xff] %v703
  %768 = vst [vmem:[#allocation2 + $0x50] sm:$0xff] %v704
  %769 = vst [vmem:[#allocation2 + $0x58] sm:$0xff] %v705
  %770 = vst [vmem:[#allocation2 + $0x60] sm:$0xff] %v706
  %771 = vst [vmem:[#allocation2 + $0x68] sm:$0xff] %v707
  %772 = vst [vmem:[#allocation2 + $0x70] sm:$0xff] %v708
  %773 = vst [vmem:[#allocation2 + $0x78] sm:$0xff] %v709
  %774 = vst [vmem:[#allocation2 + $0x80] sm:$0xff] %v710
  %775 = vst [vmem:[#allocation2 + $0x88] sm:$0xff] %v711
  %776 = vst [vmem:[#allocation2 + $0x90] sm:$0xff] %v712
  %777 = vst [vmem:[#allocation2 + $0x98] sm:$0xff] %v713
  %778 = vst [vmem:[#allocation2 + $0xa0] sm:$0xff] %v714
  %779 = vst [vmem:[#allocation2 + $0xa8] sm:$0xff] %v715
  %780 = vst [vmem:[#allocation2 + $0xb0] sm:$0xff] %v716
  %781 = vst [vmem:[#allocation2 + $0xb8] sm:$0xff] %v717
  %782 = vst [vmem:[#allocation2 + $0xc0] sm:$0xff] %v718
  %783 = vst [vmem:[#allocation2 + $0xc8] sm:$0xff] %v719
  %784 = vst [vmem:[#allocation2 + $0xd0] sm:$0xff] %v720
  %785 = vst [vmem:[#allocation2 + $0xd8] sm:$0xff] %v721
  %786 = vst [vmem:[#allocation2 + $0xe0] sm:$0xff] %v722
  %787 = vst [vmem:[#allocation2 + $0xe8] sm:$0xff] %v723
  %788 = vst [vmem:[#allocation2 + $0xf0] sm:$0xff] %v724
  %789 = vst [vmem:[#allocation2 + $0xf8] sm:$0xff] %v725
  %790 = vst [vmem:[#allocation2 + $0x100] sm:$0xff] %v726
  %791 = vst [vmem:[#allocation2 + $0x108] sm:$0xff] %v727
  %792 = vst [vmem:[#allocation2 + $0x110] sm:$0xff] %v728
  %793 = vst [vmem:[#allocation2 + $0x118] sm:$0xff] %v729
  %794 = vst [vmem:[#allocation2 + $0x120] sm:$0xff] %v730
  %795 = vst [vmem:[#allocation2 + $0x128] sm:$0xff] %v731
  %796 = vst [vmem:[#allocation2 + $0x130] sm:$0xff] %v732
  %797 = vst [vmem:[#allocation2 + $0x138] sm:$0xff] %v733
  %798 = vst [vmem:[#allocation2 + $0x140] sm:$0xff] %v734
  %799 = vst [vmem:[#allocation2 + $0x148] sm:$0xff] %v735
  %800 = vst [vmem:[#allocation2 + $0x150] sm:$0xff] %v736
  %801 = vst [vmem:[#allocation2 + $0x158] sm:$0xff] %v737
  %802 = vst [vmem:[#allocation2 + $0x160] sm:$0xff] %v738
  %803 = vst [vmem:[#allocation2 + $0x168] sm:$0xff] %v739
  %804 = vst [vmem:[#allocation2 + $0x170] sm:$0xff] %v740
  %805 = vst [vmem:[#allocation2 + $0x178] sm:$0xff] %v741
  %806 = vst [vmem:[#allocation2 + $0x180] sm:$0xff] %v742
  %807 = vst [vmem:[#allocation2 + $0x188] sm:$0xff] %v743
  %808 = vst [vmem:[#allocation2 + $0x190] sm:$0xff] %v744
  %809 = vst [vmem:[#allocation2 + $0x198] sm:$0xff] %v745
  %810 = vst [vmem:[#allocation2 + $0x1a0] sm:$0xff] %v746
  %811 = vst [vmem:[#allocation2 + $0x1a8] sm:$0xff] %v747
  %812 = vst [vmem:[#allocation2 + $0x1b0] sm:$0xff] %v748
  %813 = vst [vmem:[#allocation2 + $0x1b8] sm:$0xff] %v749
  %814 = vst [vmem:[#allocation2 + $0x1c0] sm:$0xff] %v750
  %815 = vst [vmem:[#allocation2 + $0x1c8] sm:$0xff] %v751
  %816 = vst [vmem:[#allocation2 + $0x1d0] sm:$0xff] %v752
  %817 = vst [vmem:[#allocation2 + $0x1d8] sm:$0xff] %v753
  %818 = vst [vmem:[#allocation2 + $0x1e0] sm:$0xff] %v754
  %819 = vst [vmem:[#allocation2 + $0x1e8] sm:$0xff] %v755
  %820 = vst [vmem:[#allocation2 + $0x1f0] sm:$0xff] %v756
  %821 = vst [vmem:[#allocation2 + $0x1f8] sm:$0xff] %v757
  // Predicated region
  $region18: #{_lambda_.4} parent=0 // pred_check
    %p822 = pneg %p14
  $region19: #{_lambda_.4} parent=0 // pred_check_branch
    %824 = sbr.rel (%p822) target = $region21
  $region20: #{_lambda_.4} parent=0 // pred_region
    %v825 = vld [vmem:[#allocation2] sm:$0xff]
    %v826 = vld [vmem:[#allocation2 + $0x8] sm:$0xff]
    %v827 = vld [vmem:[#allocation2 + $0x10] sm:$0xff]
    %v828 = vld [vmem:[#allocation2 + $0x18] sm:$0xff]
    %v829 = vld [vmem:[#allocation2 + $0x20] sm:$0xff]
    %v830 = vld [vmem:[#allocation2 + $0x28] sm:$0xff]
    %v831 = vld [vmem:[#allocation2 + $0x30] sm:$0xff]
    %v832 = vld [vmem:[#allocation2 + $0x38] sm:$0xff]
    %v833 = vld [vmem:[#allocation2 + $0x40] sm:$0xff]
    %v834 = vld [vmem:[#allocation2 + $0x48] sm:$0xff]
    %v835 = vld [vmem:[#allocation2 + $0x50] sm:$0xff]
    %v836 = vld [vmem:[#allocation2 + $0x58] sm:$0xff]
    %v837 = vld [vmem:[#allocation2 + $0x60] sm:$0xff]
    %v838 = vld [vmem:[#allocation2 + $0x68] sm:$0xff]
    %v839 = vld [vmem:[#allocation2 + $0x70] sm:$0xff]
    %v840 = vld [vmem:[#allocation2 + $0x78] sm:$0xff]
    %v841 = vld [vmem:[#allocation2 + $0x80] sm:$0xff]
    %v842 = vld [vmem:[#allocation2 + $0x88] sm:$0xff]
    %v843 = vld [vmem:[#allocation2 + $0x90] sm:$0xff]
    %v844 = vld [vmem:[#allocation2 + $0x98] sm:$0xff]
    %v845 = vld [vmem:[#allocation2 + $0xa0] sm:$0xff]
    %v846 = vld [vmem:[#allocation2 + $0xa8] sm:$0xff]
    %v847 = vld [vmem:[#allocation2 + $0xb0] sm:$0xff]
    %v848 = vld [vmem:[#allocation2 + $0xb8] sm:$0xff]
    %v849 = vld [vmem:[#allocation2 + $0xc0] sm:$0xff]
    %v850 = vld [vmem:[#allocation2 + $0xc8] sm:$0xff]
    %v851 = vld [vmem:[#allocation2 + $0xd0] sm:$0xff]
    %v852 = vld [vmem:[#allocation2 + $0xd8] sm:$0xff]
    %v853 = vld [vmem:[#allocation2 + $0xe0] sm:$0xff]
    %v854 = vld [vmem:[#allocation2 + $0xe8] sm:$0xff]
    %v855 = vld [vmem:[#allocation2 + $0xf0] sm:$0xff]
    %v856 = vld [vmem:[#allocation2 + $0xf8] sm:$0xff]
    %v857 = vld [vmem:[#allocation2 + $0x100] sm:$0xff]
    %v858 = vld [vmem:[#allocation2 + $0x108] sm:$0xff]
    %v859 = vld [vmem:[#allocation2 + $0x110] sm:$0xff]
    %v860 = vld [vmem:[#allocation2 + $0x118] sm:$0xff]
    %v861 = vld [vmem:[#allocation2 + $0x120] sm:$0xff]
    %v862 = vld [vmem:[#allocation2 + $0x128] sm:$0xff]
    %v863 = vld [vmem:[#allocation2 + $0x130] sm:$0xff]
    %v864 = vld [vmem:[#allocation2 + $0x138] sm:$0xff]
    %v865 = vld [vmem:[#allocation2 + $0x140] sm:$0xff]
    %v866 = vld [vmem:[#allocation2 + $0x148] sm:$0xff]
    %v867 = vld [vmem:[#allocation2 + $0x150] sm:$0xff]
    %v868 = vld [vmem:[#allocation2 + $0x158] sm:$0xff]
    %v869 = vld [vmem:[#allocation2 + $0x160] sm:$0xff]
    %v870 = vld [vmem:[#allocation2 + $0x168] sm:$0xff]
    %v871 = vld [vmem:[#allocation2 + $0x170] sm:$0xff]
    %v872 = vld [vmem:[#allocation2 + $0x178] sm:$0xff]
    %v873 = vld [vmem:[#allocation2 + $0x180] sm:$0xff]
    %v874 = vld [vmem:[#allocation2 + $0x188] sm:$0xff]
    %v875 = vld [vmem:[#allocation2 + $0x190] sm:$0xff]
    %v876 = vld [vmem:[#allocation2 + $0x198] sm:$0xff]
    %v877 = vld [vmem:[#allocation2 + $0x1a0] sm:$0xff]
    %v878 = vld [vmem:[#allocation2 + $0x1a8] sm:$0xff]
    %v879 = vld [vmem:[#allocation2 + $0x1b0] sm:$0xff]
    %v880 = vld [vmem:[#allocation2 + $0x1b8] sm:$0xff]
    %v881 = vld [vmem:[#allocation2 + $0x1c0] sm:$0xff]
    %v882 = vld [vmem:[#allocation2 + $0x1c8] sm:$0xff]
    %v883 = vld [vmem:[#allocation2 + $0x1d0] sm:$0xff]
    %v884 = vld [vmem:[#allocation2 + $0x1d8] sm:$0xff]
    %v885 = vld [vmem:[#allocation2 + $0x1e0] sm:$0xff]
    %v886 = vld [vmem:[#allocation2 + $0x1e8] sm:$0xff]
    %v887 = vld [vmem:[#allocation2 + $0x1f0] sm:$0xff]
    %v888 = vld [vmem:[#allocation2 + $0x1f8] sm:$0xff]
    %v889 = vld [vmem:[%s2] sm:$0x3]
    %v891 = vperm.slane %v889, 0
    %v892 = vperm.slane %v889, 1
    %v895 = vadd.f32 %v825, %v891
    %v896 = vadd.f32 %v826, %v892
    %v897 = vadd.f32 %v827, %v891
    %v898 = vadd.f32 %v828, %v892
    %v899 = vadd.f32 %v829, %v891
    %v900 = vadd.f32 %v830, %v892
    %v901 = vadd.f32 %v831, %v891
    %v902 = vadd.f32 %v832, %v892
    %v903 = vadd.f32 %v833, %v891
    %v904 = vadd.f32 %v834, %v892
    %v905 = vadd.f32 %v835, %v891
    %v906 = vadd.f32 %v836, %v892
    %v907 = vadd.f32 %v837, %v891
    %v908 = vadd.f32 %v838, %v892
    %v909 = vadd.f32 %v839, %v891
    %v910 = vadd.f32 %v840, %v892
    %v911 = vadd.f32 %v841, %v891
    %v912 = vadd.f32 %v842, %v892
    %v913 = vadd.f32 %v843, %v891
    %v914 = vadd.f32 %v844, %v892
    %v915 = vadd.f32 %v845, %v891
    %v916 = vadd.f32 %v846, %v892
    %v917 = vadd.f32 %v847, %v891
    %v918 = vadd.f32 %v848, %v892
    %v919 = vadd.f32 %v849, %v891
    %v920 = vadd.f32 %v850, %v892
    %v921 = vadd.f32 %v851, %v891
    %v922 = vadd.f32 %v852, %v892
    %v923 = vadd.f32 %v853, %v891
    %v924 = vadd.f32 %v854, %v892
    %v925 = vadd.f32 %v855, %v891
    %v926 = vadd.f32 %v856, %v892
    %v927 = vadd.f32 %v857, %v891
    %v928 = vadd.f32 %v858, %v892
    %v929 = vadd.f32 %v859, %v891
    %v930 = vadd.f32 %v860, %v892
    %v931 = vadd.f32 %v861, %v891
    %v932 = vadd.f32 %v862, %v892
    %v933 = vadd.f32 %v863, %v891
    %v934 = vadd.f32 %v864, %v892
    %v935 = vadd.f32 %v865, %v891
    %v936 = vadd.f32 %v866, %v892
    %v937 = vadd.f32 %v867, %v891
    %v938 = vadd.f32 %v868, %v892
    %v939 = vadd.f32 %v869, %v891
    %v940 = vadd.f32 %v870, %v892
    %v941 = vadd.f32 %v871, %v891
    %v942 = vadd.f32 %v872, %v892
    %v943 = vadd.f32 %v873, %v891
    %v944 = vadd.f32 %v874, %v892
    %v945 = vadd.f32 %v875, %v891
    %v946 = vadd.f32 %v876, %v892
    %v947 = vadd.f32 %v877, %v891
    %v948 = vadd.f32 %v878, %v892
    %v949 = vadd.f32 %v879, %v891
    %v950 = vadd.f32 %v880, %v892
    %v951 = vadd.f32 %v881, %v891
    %v952 = vadd.f32 %v882, %v892
    %v953 = vadd.f32 %v883, %v891
    %v954 = vadd.f32 %v884, %v892
    %v955 = vadd.f32 %v885, %v891
    %v956 = vadd.f32 %v886, %v892
    %v957 = vadd.f32 %v887, %v891
    %v958 = vadd.f32 %v888, %v892
    %v959 = vmax.f32 %v895, 0.0
    %v960 = vmax.f32 %v896, 0.0
    %v961 = vmax.f32 %v897, 0.0
    %v962 = vmax.f32 %v898, 0.0
    %v963 = vmax.f32 %v899, 0.0
    %v964 = vmax.f32 %v900, 0.0
    %v965 = vmax.f32 %v901, 0.0
    %v966 = vmax.f32 %v902, 0.0
    %v967 = vmax.f32 %v903, 0.0
    %v968 = vmax.f32 %v904, 0.0
    %v969 = vmax.f32 %v905, 0.0
    %v970 = vmax.f32 %v906, 0.0
    %v971 = vmax.f32 %v907, 0.0
    %v972 = vmax.f32 %v908, 0.0
    %v973 = vmax.f32 %v909, 0.0
    %v974 = vmax.f32 %v910, 0.0
    %v975 = vmax.f32 %v911, 0.0
    %v976 = vmax.f32 %v912, 0.0
    %v977 = vmax.f32 %v913, 0.0
    %v978 = vmax.f32 %v914, 0.0
    %v979 = vmax.f32 %v915, 0.0
    %v980 = vmax.f32 %v916, 0.0
    %v981 = vmax.f32 %v917, 0.0
    %v982 = vmax.f32 %v918, 0.0
    %v983 = vmax.f32 %v919, 0.0
    %v984 = vmax.f32 %v920, 0.0
    %v985 = vmax.f32 %v921, 0.0
    %v986 = vmax.f32 %v922, 0.0
    %v987 = vmax.f32 %v923, 0.0
    %v988 = vmax.f32 %v924, 0.0
    %v989 = vmax.f32 %v925, 0.0
    %v990 = vmax.f32 %v926, 0.0
    %v991 = vmax.f32 %v927, 0.0
    %v992 = vmax.f32 %v928, 0.0
    %v993 = vmax.f32 %v929, 0.0
    %v994 = vmax.f32 %v930, 0.0
    %v995 = vmax.f32 %v931, 0.0
    %v996 = vmax.f32 %v932, 0.0
    %v997 = vmax.f32 %v933, 0.0
    %v998 = vmax.f32 %v934, 0.0
    %v999 = vmax.f32 %v935, 0.0
    %v1000 = vmax.f32 %v936, 0.0
    %v1001 = vmax.f32 %v937, 0.0
    %v1002 = vmax.f32 %v938, 0.0
    %v1003 = vmax.f32 %v939, 0.0
    %v1004 = vmax.f32 %v940, 0.0
    %v1005 = vmax.f32 %v941, 0.0
    %v1006 = vmax.f32 %v942, 0.0
    %v1007 = vmax.f32 %v943, 0.0
    %v1008 = vmax.f32 %v944, 0.0
    %v1009 = vmax.f32 %v945, 0.0
    %v1010 = vmax.f32 %v946, 0.0
    %v1011 = vmax.f32 %v947, 0.0
    %v1012 = vmax.f32 %v948, 0.0
    %v1013 = vmax.f32 %v949, 0.0
    %v1014 = vmax.f32 %v950, 0.0
    %v1015 = vmax.f32 %v951, 0.0
    %v1016 = vmax.f32 %v952, 0.0
    %v1017 = vmax.f32 %v953, 0.0
    %v1018 = vmax.f32 %v954, 0.0
    %v1019 = vmax.f32 %v955, 0.0
    %v1020 = vmax.f32 %v956, 0.0
    %v1021 = vmax.f32 %v957, 0.0
    %v1022 = vmax.f32 %v958, 0.0
    %1023 = vst [vmem:[%s3] sm:$0xff] %v959
    %1024 = vst [vmem:[%s3 + $0x8] sm:$0xff] %v960
    %1025 = vst [vmem:[%s3 + $0x10] sm:$0xff] %v961
    %1026 = vst [vmem:[%s3 + $0x18] sm:$0xff] %v962
    %1027 = vst [vmem:[%s3 + $0x20] sm:$0xff] %v963
    %1028 = vst [vmem:[%s3 + $0x28] sm:$0xff] %v964
    %1029 = vst [vmem:[%s3 + $0x30] sm:$0xff] %v965
    %1030 = vst [vmem:[%s3 + $0x38] sm:$0xff] %v966
    %1031 = vst [vmem:[%s3 + $0x40] sm:$0xff] %v967
    %1032 = vst [vmem:[%s3 + $0x48] sm:$0xff] %v968
    %1033 = vst [vmem:[%s3 + $0x50] sm:$0xff] %v969
    %1034 = vst [vmem:[%s3 + $0x58] sm:$0xff] %v970
    %1035 = vst [vmem:[%s3 + $0x60] sm:$0xff] %v971
    %1036 = vst [vmem:[%s3 + $0x68] sm:$0xff] %v972
    %1037 = vst [vmem:[%s3 + $0x70] sm:$0xff] %v973
    %1038 = vst [vmem:[%s3 + $0x78] sm:$0xff] %v974
    %1039 = vst [vmem:[%s3 + $0x80] sm:$0xff] %v975
    %1040 = vst [vmem:[%s3 + $0x88] sm:$0xff] %v976
    %1041 = vst [vmem:[%s3 + $0x90] sm:$0xff] %v977
    %1042 = vst [vmem:[%s3 + $0x98] sm:$0xff] %v978
    %1043 = vst [vmem:[%s3 + $0xa0] sm:$0xff] %v979
    %1044 = vst [vmem:[%s3 + $0xa8] sm:$0xff] %v980
    %1045 = vst [vmem:[%s3 + $0xb0] sm:$0xff] %v981
    %1046 = vst [vmem:[%s3 + $0xb8] sm:$0xff] %v982
    %1047 = vst [vmem:[%s3 + $0xc0] sm:$0xff] %v983
    %1048 = vst [vmem:[%s3 + $0xc8] sm:$0xff] %v984
    %1049 = vst [vmem:[%s3 + $0xd0] sm:$0xff] %v985
    %1050 = vst [vmem:[%s3 + $0xd8] sm:$0xff] %v986
    %1051 = vst [vmem:[%s3 + $0xe0] sm:$0xff] %v987
    %1052 = vst [vmem:[%s3 + $0xe8] sm:$0xff] %v988
    %1053 = vst [vmem:[%s3 + $0xf0] sm:$0xff] %v989
    %1054 = vst [vmem:[%s3 + $0xf8] sm:$0xff] %v990
    %1055 = vst [vmem:[%s3 + $0x100] sm:$0xff] %v991
    %1056 = vst [vmem:[%s3 + $0x108] sm:$0xff] %v992
    %1057 = vst [vmem:[%s3 + $0x110] sm:$0xff] %v993
    %1058 = vst [vmem:[%s3 + $0x118] sm:$0xff] %v994
    %1059 = vst [vmem:[%s3 + $0x120] sm:$0xff] %v995
    %1060 = vst [vmem:[%s3 + $0x128] sm:$0xff] %v996
    %1061 = vst [vmem:[%s3 + $0x130] sm:$0xff] %v997
    %1062 = vst [vmem:[%s3 + $0x138] sm:$0xff] %v998
    %1063 = vst [vmem:[%s3 + $0x140] sm:$0xff] %v999
    %1064 = vst [vmem:[%s3 + $0x148] sm:$0xff] %v1000
    %1065 = vst [vmem:[%s3 + $0x150] sm:$0xff] %v1001
    %1066 = vst [vmem:[%s3 + $0x158] sm:$0xff] %v1002
    %1067 = vst [vmem:[%s3 + $0x160] sm:$0xff] %v1003
    %1068 = vst [vmem:[%s3 + $0x168] sm:$0xff] %v1004
    %1069 = vst [vmem:[%s3 + $0x170] sm:$0xff] %v1005
    %1070 = vst [vmem:[%s3 + $0x178] sm:$0xff] %v1006
    %1071 = vst [vmem:[%s3 + $0x180] sm:$0xff] %v1007
    %1072 = vst [vmem:[%s3 + $0x188] sm:$0xff] %v1008
    %1073 = vst [vmem:[%s3 + $0x190] sm:$0xff] %v1009
    %1074 = vst [vmem:[%s3 + $0x198] sm:$0xff] %v1010
    %1075 = vst [vmem:[%s3 + $0x1a0] sm:$0xff] %v1011
    %1076 = vst [vmem:[%s3 + $0x1a8] sm:$0xff] %v1012
    %1077 = vst [vmem:[%s3 + $0x1b0] sm:$0xff] %v1013
    %1078 = vst [vmem:[%s3 + $0x1b8] sm:$0xff] %v1014
    %1079 = vst [vmem:[%s3 + $0x1c0] sm:$0xff] %v1015
    %1080 = vst [vmem:[%s3 + $0x1c8] sm:$0xff] %v1016
    %1081 = vst [vmem:[%s3 + $0x1d0] sm:$0xff] %v1017
    %1082 = vst [vmem:[%s3 + $0x1d8] sm:$0xff] %v1018
    %1083 = vst [vmem:[%s3 + $0x1e0] sm:$0xff] %v1019
    %1084 = vst [vmem:[%s3 + $0x1e8] sm:$0xff] %v1020
    %1085 = vst [vmem:[%s3 + $0x1f0] sm:$0xff] %v1021
    %1086 = vst [vmem:[%s3 + $0x1f8] sm:$0xff] %v1022
  $region21: #{_lambda_.4} parent=0 // pred_fallthru
    _
  // Predicated region
  $region22: #{_lambda_.4} parent=0 // pred_check
    _
  $region23: #{_lambda_.4} parent=0 // pred_check_branch
    %1088 = sbr.rel (0) target = $region25
  $region24: #{_lambda_.4} parent=0 // pred_region
    _
  $region25: #{_lambda_.4} parent=0 // pred_fallthru
    _
  // Predicated region
  $region26: #{_lambda_.4} parent=0 // pred_check
    _
  $region27: #{_lambda_.4} parent=0 // pred_check_branch
    %1090 = sbr.rel (0) target = $region29
  $region28: #{_lambda_.4} parent=0 // pred_region
    _
  $region29: #{_lambda_.4} parent=0 // pred_fallthru
    _

// kernel: _lambda_.3
$region0: #{_lambda_.3}
  #allocation0 [shape = 'u32[]', space=smem, size = 0x4, offset = 0x4, fixed_abs, tag = 'smem constant byte address 0x4 - core index']
  #allocation1 [shape = 'u32[72,128]{1,0:T(1,128)}', space=vmem, size = 0x9000, scoped, tag = 'internal scratch']
  #allocation2 [shape = 'f32[256,256]{1,0:T(8,128)}', space=vmem, size = 0x40000, scoped, tag = 'scratch operand']
  %s0 = inlined_call_operand.hbm [shape: f32[256,128], index: 0, kind: input, shape index: {}]
  %s1 = inlined_call_operand.hbm [shape: f32[256,128], index: 1, kind: input, shape index: {}]
  %s2 = inlined_call_operand.vmem [shape: f32[128,256], index: 2, kind: input, shape index: {}]
  %s3 = inlined_call_operand.vmem [shape: f32[1,256], index: 3, kind: input, shape index: {}]
  %s4 = inlined_call_operand.vmem [shape: f32[256,256], index: 4, kind: output, shape index: {}]
  %s5 = sld [smem:[#allocation0]]
  $region42: #{_lambda_.3} parent=0
    _
  %s7 = ssub.s32 1, %s5
  %s8 = scalar_select 0, %s7, %s5
  $region1: #{_lambda_.3} parent=0
    #allocation3 [shape = 'u8[131072]{0}', space=vmem, size = 0x20000, scoped, tag = 'input window, operand 0, single buffered']
    #allocation4 [shape = 's32[1]{0}', space=sflag, size = 0x4, scoped, tag = 'scoped memory for _lambda_.3']
    #allocation5 [shape = 'u8[131072]{0}', space=vmem, size = 0x20000, scoped, tag = 'input window, operand 1, single buffered']
    #allocation6 [shape = 's32[1]{0}', space=sflag, size = 0x4, scoped, tag = 'scoped memory for _lambda_.3']
    %9 = vsyncpa [#allocation4], 0
    %10 = vsyncpa [#allocation6], 0
    // Predicated region
    $region2: #{_lambda_.3} parent=1 // pred_check
      _
    $region3: #{_lambda_.3} parent=1 // pred_check_branch
      %12 = sbr.rel (0) target = $region5
    $region4: #{_lambda_.3} parent=1 // pred_region
      %14 = vsyncadd [#allocation4], 0
      %s15 = sshll.u32 %s0, 4
      %s16 = int_to_ptr.hbm [resolvable:$true] %s15
      %s17 = sshll.u32 [#allocation3], 4
      %s18 = int_to_ptr.vmem [resolvable:$true] %s17
      %23 = dma.hbm_to_vmem [thread:$0]  %s16, 4096, %s18, [#allocation4], 128, 128, 8
    $region5: #{_lambda_.3} parent=1 // pred_fallthru
      _
    // Predicated region
    $region6: #{_lambda_.3} parent=1 // pred_check
      _
    $region7: #{_lambda_.3} parent=1 // pred_check_branch
      %25 = sbr.rel (0) target = $region9
    $region8: #{_lambda_.3} parent=1 // pred_region
      %27 = vsyncadd [#allocation6], 0
      %s28 = sshll.u32 %s1, 4
      %s29 = int_to_ptr.hbm [resolvable:$true] %s28
      %s30 = sshll.u32 [#allocation5], 4
      %s31 = int_to_ptr.vmem [resolvable:$true] %s30
      %36 = dma.hbm_to_vmem [thread:$0]  %s29, 4096, %s31, [#allocation6], 128, 128, 8
    $region9: #{_lambda_.3} parent=1 // pred_fallthru
      _
    // Predicated region
    $region10: #{_lambda_.3} parent=1 // pred_check
      _
    $region11: #{_lambda_.3} parent=1 // pred_check_branch
      %38 = sbr.rel (0) target = $region13
    $region12: #{_lambda_.3} parent=1 // pred_region
      _
    $region13: #{_lambda_.3} parent=1 // pred_fallthru
      _
    // Predicated region
    $region14: #{_lambda_.3} parent=1 // pred_check
      _
    $region15: #{_lambda_.3} parent=1 // pred_check_branch
      %40 = sbr.rel (0) target = $region17
    $region16: #{_lambda_.3} parent=1 // pred_region
      _
    $region17: #{_lambda_.3} parent=1 // pred_fallthru
      _
    // Predicated region
    $region18: #{_lambda_.3} parent=1 // pred_check
      _
    $region19: #{_lambda_.3} parent=1 // pred_check_branch
      %42 = sbr.rel (0) target = $region21
    $region20: #{_lambda_.3} parent=1 // pred_region
      %44 = dma.done [#allocation4], 4096
    $region21: #{_lambda_.3} parent=1 // pred_fallthru
      _
    // Predicated region
    $region22: #{_lambda_.3} parent=1 // pred_check
      _
    $region23: #{_lambda_.3} parent=1 // pred_check_branch
      %46 = sbr.rel (0) target = $region25
    $region24: #{_lambda_.3} parent=1 // pred_region
      %48 = dma.done [#allocation6], 4096
    $region25: #{_lambda_.3} parent=1 // pred_fallthru
      _
    %p49 = scmp.eq.s32.totalorder 0, 0
    // Predicated region
    $region26: #{_lambda_.3} parent=1 // pred_check
      %p50 = pneg %p49
    $region27: #{_lambda_.3} parent=1 // pred_check_branch
      %52 = sbr.rel (%p50) target = $region29
    $region28: #{_lambda_.3} parent=1 // pred_region
      %53 = vst [vmem:[#allocation2] sm:$0xff] 0.0
      %54 = vst [vmem:[#allocation2 + $0x8] sm:$0xff] 0.0
      %55 = vst [vmem:[#allocation2 + $0x10] sm:$0xff] 0.0
      %56 = vst [vmem:[#allocation2 + $0x18] sm:$0xff] 0.0
      %57 = vst [vmem:[#allocation2 + $0x20] sm:$0xff] 0.0
      %58 = vst [vmem:[#allocation2 + $0x28] sm:$0xff] 0.0
      %59 = vst [vmem:[#allocation2 + $0x30] sm:$0xff] 0.0
      %60 = vst [vmem:[#allocation2 + $0x38] sm:$0xff] 0.0
      %61 = vst [vmem:[#allocation2 + $0x40] sm:$0xff] 0.0
      %62 = vst [vmem:[#allocation2 + $0x48] sm:$0xff] 0.0
      %63 = vst [vmem:[#allocation2 + $0x50] sm:$0xff] 0.0
      %64 = vst [vmem:[#allocation2 + $0x58] sm:$0xff] 0.0
      %65 = vst [vmem:[#allocation2 + $0x60] sm:$0xff] 0.0
      %66 = vst [vmem:[#allocation2 + $0x68] sm:$0xff] 0.0
      %67 = vst [vmem:[#allocation2 + $0x70] sm:$0xff] 0.0
      %68 = vst [vmem:[#allocation2 + $0x78] sm:$0xff] 0.0
      %69 = vst [vmem:[#allocation2 + $0x80] sm:$0xff] 0.0
      %70 = vst [vmem:[#allocation2 + $0x88] sm:$0xff] 0.0
      %71 = vst [vmem:[#allocation2 + $0x90] sm:$0xff] 0.0
      %72 = vst [vmem:[#allocation2 + $0x98] sm:$0xff] 0.0
      %73 = vst [vmem:[#allocation2 + $0xa0] sm:$0xff] 0.0
      %74 = vst [vmem:[#allocation2 + $0xa8] sm:$0xff] 0.0
      %75 = vst [vmem:[#allocation2 + $0xb0] sm:$0xff] 0.0
      %76 = vst [vmem:[#allocation2 + $0xb8] sm:$0xff] 0.0
      %77 = vst [vmem:[#allocation2 + $0xc0] sm:$0xff] 0.0
      %78 = vst [vmem:[#allocation2 + $0xc8] sm:$0xff] 0.0
      %79 = vst [vmem:[#allocation2 + $0xd0] sm:$0xff] 0.0
      %80 = vst [vmem:[#allocation2 + $0xd8] sm:$0xff] 0.0
      %81 = vst [vmem:[#allocation2 + $0xe0] sm:$0xff] 0.0
      %82 = vst [vmem:[#allocation2 + $0xe8] sm:$0xff] 0.0
      %83 = vst [vmem:[#allocation2 + $0xf0] sm:$0xff] 0.0
      %84 = vst [vmem:[#allocation2 + $0xf8] sm:$0xff] 0.0
      %85 = vst [vmem:[#allocation2 + $0x100] sm:$0xff] 0.0
      %86 = vst [vmem:[#allocation2 + $0x108] sm:$0xff] 0.0
      %87 = vst [vmem:[#allocation2 + $0x110] sm:$0xff] 0.0
      %88 = vst [vmem:[#allocation2 + $0x118] sm:$0xff] 0.0
      %89 = vst [vmem:[#allocation2 + $0x120] sm:$0xff] 0.0
      %90 = vst [vmem:[#allocation2 + $0x128] sm:$0xff] 0.0
      %91 = vst [vmem:[#allocation2 + $0x130] sm:$0xff] 0.0
      %92 = vst [vmem:[#allocation2 + $0x138] sm:$0xff] 0.0
      %93 = vst [vmem:[#allocation2 + $0x140] sm:$0xff] 0.0
      %94 = vst [vmem:[#allocation2 + $0x148] sm:$0xff] 0.0
      %95 = vst [vmem:[#allocation2 + $0x150] sm:$0xff] 0.0
      %96 = vst [vmem:[#allocation2 + $0x158] sm:$0xff] 0.0
      %97 = vst [vmem:[#allocation2 + $0x160] sm:$0xff] 0.0
      %98 = vst [vmem:[#allocation2 + $0x168] sm:$0xff] 0.0
      %99 = vst [vmem:[#allocation2 + $0x170] sm:$0xff] 0.0
      %100 = vst [vmem:[#allocation2 + $0x178] sm:$0xff] 0.0
      %101 = vst [vmem:[#allocation2 + $0x180] sm:$0xff] 0.0
      %102 = vst [vmem:[#allocation2 + $0x188] sm:$0xff] 0.0
      %103 = vst [vmem:[#allocation2 + $0x190] sm:$0xff] 0.0
      %104 = vst [vmem:[#allocation2 + $0x198] sm:$0xff] 0.0
      %105 = vst [vmem:[#allocation2 + $0x1a0] sm:$0xff] 0.0
      %106 = vst [vmem:[#allocation2 + $0x1a8] sm:$0xff] 0.0
      %107 = vst [vmem:[#allocation2 + $0x1b0] sm:$0xff] 0.0
      %108 = vst [vmem:[#allocation2 + $0x1b8] sm:$0xff] 0.0
      %109 = vst [vmem:[#allocation2 + $0x1c0] sm:$0xff] 0.0
      %110 = vst [vmem:[#allocation2 + $0x1c8] sm:$0xff] 0.0
      %111 = vst [vmem:[#allocation2 + $0x1d0] sm:$0xff] 0.0
      %112 = vst [vmem:[#allocation2 + $0x1d8] sm:$0xff] 0.0
      %113 = vst [vmem:[#allocation2 + $0x1e0] sm:$0xff] 0.0
      %114 = vst [vmem:[#allocation2 + $0x1e8] sm:$0xff] 0.0
      %115 = vst [vmem:[#allocation2 + $0x1f0] sm:$0xff] 0.0
      %116 = vst [vmem:[#allocation2 + $0x1f8] sm:$0xff] 0.0
    $region29: #{_lambda_.3} parent=1 // pred_fallthru
      _
    %v117 = vld [vmem:[#allocation3] sm:$0xff]
    %v118 = vld [vmem:[#allocation3 + $0x8] sm:$0xff]
    %v119 = vld [vmem:[#allocation3 + $0x10] sm:$0xff]
    %v120 = vld [vmem:[#allocation3 + $0x18] sm:$0xff]
    %v121 = vld [vmem:[#allocation3 + $0x20] sm:$0xff]
    %v122 = vld [vmem:[#allocation3 + $0x28] sm:$0xff]
    %v123 = vld [vmem:[#allocation3 + $0x30] sm:$0xff]
    %v124 = vld [vmem:[#allocation3 + $0x38] sm:$0xff]
    %v125 = vld [vmem:[#allocation3 + $0x40] sm:$0xff]
    %v126 = vld [vmem:[#allocation3 + $0x48] sm:$0xff]
    %v127 = vld [vmem:[#allocation3 + $0x50] sm:$0xff]
    %v128 = vld [vmem:[#allocation3 + $0x58] sm:$0xff]
    %v129 = vld [vmem:[#allocation3 + $0x60] sm:$0xff]
    %v130 = vld [vmem:[#allocation3 + $0x68] sm:$0xff]
    %v131 = vld [vmem:[#allocation3 + $0x70] sm:$0xff]
    %v132 = vld [vmem:[#allocation3 + $0x78] sm:$0xff]
    %v133 = vld [vmem:[#allocation3 + $0x80] sm:$0xff]
    %v134 = vld [vmem:[#allocation3 + $0x88] sm:$0xff]
    %v135 = vld [vmem:[#allocation3 + $0x90] sm:$0xff]
    %v136 = vld [vmem:[#allocation3 + $0x98] sm:$0xff]
    %v137 = vld [vmem:[#allocation3 + $0xa0] sm:$0xff]
    %v138 = vld [vmem:[#allocation3 + $0xa8] sm:$0xff]
    %v139 = vld [vmem:[#allocation3 + $0xb0] sm:$0xff]
    %v140 = vld [vmem:[#allocation3 + $0xb8] sm:$0xff]
    %v141 = vld [vmem:[#allocation3 + $0xc0] sm:$0xff]
    %v142 = vld [vmem:[#allocation3 + $0xc8] sm:$0xff]
    %v143 = vld [vmem:[#allocation3 + $0xd0] sm:$0xff]
    %v144 = vld [vmem:[#allocation3 + $0xd8] sm:$0xff]
    %v145 = vld [vmem:[#allocation3 + $0xe0] sm:$0xff]
    %v146 = vld [vmem:[#allocation3 + $0xe8] sm:$0xff]
    %v147 = vld [vmem:[#allocation3 + $0xf0] sm:$0xff]
    %v148 = vld [vmem:[#allocation3 + $0xf8] sm:$0xff]
    %v149 = vld [vmem:[#allocation5] sm:$0xff]
    %v150 = vld [vmem:[#allocation5 + $0x8] sm:$0xff]
    %v151 = vld [vmem:[#allocation5 + $0x10] sm:$0xff]
    %v152 = vld [vmem:[#allocation5 + $0x18] sm:$0xff]
    %v153 = vld [vmem:[#allocation5 + $0x20] sm:$0xff]
    %v154 = vld [vmem:[#allocation5 + $0x28] sm:$0xff]
    %v155 = vld [vmem:[#allocation5 + $0x30] sm:$0xff]
    %v156 = vld [vmem:[#allocation5 + $0x38] sm:$0xff]
    %v157 = vld [vmem:[#allocation5 + $0x40] sm:$0xff]
    %v158 = vld [vmem:[#allocation5 + $0x48] sm:$0xff]
    %v159 = vld [vmem:[#allocation5 + $0x50] sm:$0xff]
    %v160 = vld [vmem:[#allocation5 + $0x58] sm:$0xff]
    %v161 = vld [vmem:[#allocation5 + $0x60] sm:$0xff]
    %v162 = vld [vmem:[#allocation5 + $0x68] sm:$0xff]
    %v163 = vld [vmem:[#allocation5 + $0x70] sm:$0xff]
    %v164 = vld [vmem:[#allocation5 + $0x78] sm:$0xff]
    %v165 = vld [vmem:[#allocation5 + $0x80] sm:$0xff]
    %v166 = vld [vmem:[#allocation5 + $0x88] sm:$0xff]
    %v167 = vld [vmem:[#allocation5 + $0x90] sm:$0xff]
    %v168 = vld [vmem:[#allocation5 + $0x98] sm:$0xff]
    %v169 = vld [vmem:[#allocation5 + $0xa0] sm:$0xff]
    %v170 = vld [vmem:[#allocation5 + $0xa8] sm:$0xff]
    %v171 = vld [vmem:[#allocation5 + $0xb0] sm:$0xff]
    %v172 = vld [vmem:[#allocation5 + $0xb8] sm:$0xff]
    %v173 = vld [vmem:[#allocation5 + $0xc0] sm:$0xff]
    %v174 = vld [vmem:[#allocation5 + $0xc8] sm:$0xff]
    %v175 = vld [vmem:[#allocation5 + $0xd0] sm:$0xff]
    %v176 = vld [vmem:[#allocation5 + $0xd8] sm:$0xff]
    %v177 = vld [vmem:[#allocation5 + $0xe0] sm:$0xff]
    %v178 = vld [vmem:[#allocation5 + $0xe8] sm:$0xff]
    %v179 = vld [vmem:[#allocation5 + $0xf0] sm:$0xff]
    %v180 = vld [vmem:[#allocation5 + $0xf8] sm:$0xff]
    %v181 = vmul.f32 %v117, %v149
    %v182 = vmul.f32 %v118, %v150
    %v183 = vmul.f32 %v119, %v151
    %v184 = vmul.f32 %v120, %v152
    %v185 = vmul.f32 %v121, %v153
    %v186 = vmul.f32 %v122, %v154
    %v187 = vmul.f32 %v123, %v155
    %v188 = vmul.f32 %v124, %v156
    %v189 = vmul.f32 %v125, %v157
    %v190 = vmul.f32 %v126, %v158
    %v191 = vmul.f32 %v127, %v159
    %v192 = vmul.f32 %v128, %v160
    %v193 = vmul.f32 %v129, %v161
    %v194 = vmul.f32 %v130, %v162
    %v195 = vmul.f32 %v131, %v163
    %v196 = vmul.f32 %v132, %v164
    %v197 = vmul.f32 %v133, %v165
    %v198 = vmul.f32 %v134, %v166
    %v199 = vmul.f32 %v135, %v167
    %v200 = vmul.f32 %v136, %v168
    %v201 = vmul.f32 %v137, %v169
    %v202 = vmul.f32 %v138, %v170
    %v203 = vmul.f32 %v139, %v171
    %v204 = vmul.f32 %v140, %v172
    %v205 = vmul.f32 %v141, %v173
    %v206 = vmul.f32 %v142, %v174
    %v207 = vmul.f32 %v143, %v175
    %v208 = vmul.f32 %v144, %v176
    %v209 = vmul.f32 %v145, %v177
    %v210 = vmul.f32 %v146, %v178
    %v211 = vmul.f32 %v147, %v179
    %v212 = vmul.f32 %v148, %v180
    %v213 = vld [vmem:[#allocation2] sm:$0xff]
    %v214 = vld [vmem:[#allocation2 + $0x8] sm:$0xff]
    %v215 = vld [vmem:[#allocation2 + $0x10] sm:$0xff]
    %v216 = vld [vmem:[#allocation2 + $0x18] sm:$0xff]
    %v217 = vld [vmem:[#allocation2 + $0x20] sm:$0xff]
    %v218 = vld [vmem:[#allocation2 + $0x28] sm:$0xff]
    %v219 = vld [vmem:[#allocation2 + $0x30] sm:$0xff]
    %v220 = vld [vmem:[#allocation2 + $0x38] sm:$0xff]
    %v221 = vld [vmem:[#allocation2 + $0x40] sm:$0xff]
    %v222 = vld [vmem:[#allocation2 + $0x48] sm:$0xff]
    %v223 = vld [vmem:[#allocation2 + $0x50] sm:$0xff]
    %v224 = vld [vmem:[#allocation2 + $0x58] sm:$0xff]
    %v225 = vld [vmem:[#allocation2 + $0x60] sm:$0xff]
    %v226 = vld [vmem:[#allocation2 + $0x68] sm:$0xff]
    %v227 = vld [vmem:[#allocation2 + $0x70] sm:$0xff]
    %v228 = vld [vmem:[#allocation2 + $0x78] sm:$0xff]
    %v229 = vld [vmem:[#allocation2 + $0x80] sm:$0xff]
    %v230 = vld [vmem:[#allocation2 + $0x88] sm:$0xff]
    %v231 = vld [vmem:[#allocation2 + $0x90] sm:$0xff]
    %v232 = vld [vmem:[#allocation2 + $0x98] sm:$0xff]
    %v233 = vld [vmem:[#allocation2 + $0xa0] sm:$0xff]
    %v234 = vld [vmem:[#allocation2 + $0xa8] sm:$0xff]
    %v235 = vld [vmem:[#allocation2 + $0xb0] sm:$0xff]
    %v236 = vld [vmem:[#allocation2 + $0xb8] sm:$0xff]
    %v237 = vld [vmem:[#allocation2 + $0xc0] sm:$0xff]
    %v238 = vld [vmem:[#allocation2 + $0xc8] sm:$0xff]
    %v239 = vld [vmem:[#allocation2 + $0xd0] sm:$0xff]
    %v240 = vld [vmem:[#allocation2 + $0xd8] sm:$0xff]
    %v241 = vld [vmem:[#allocation2 + $0xe0] sm:$0xff]
    %v242 = vld [vmem:[#allocation2 + $0xe8] sm:$0xff]
    %v243 = vld [vmem:[#allocation2 + $0xf0] sm:$0xff]
    %v244 = vld [vmem:[#allocation2 + $0xf8] sm:$0xff]
    %v245 = vld [vmem:[#allocation2 + $0x100] sm:$0xff]
    %v246 = vld [vmem:[#allocation2 + $0x108] sm:$0xff]
    %v247 = vld [vmem:[#allocation2 + $0x110] sm:$0xff]
    %v248 = vld [vmem:[#allocation2 + $0x118] sm:$0xff]
    %v249 = vld [vmem:[#allocation2 + $0x120] sm:$0xff]
    %v250 = vld [vmem:[#allocation2 + $0x128] sm:$0xff]
    %v251 = vld [vmem:[#allocation2 + $0x130] sm:$0xff]
    %v252 = vld [vmem:[#allocation2 + $0x138] sm:$0xff]
    %v253 = vld [vmem:[#allocation2 + $0x140] sm:$0xff]
    %v254 = vld [vmem:[#allocation2 + $0x148] sm:$0xff]
    %v255 = vld [vmem:[#allocation2 + $0x150] sm:$0xff]
    %v256 = vld [vmem:[#allocation2 + $0x158] sm:$0xff]
    %v257 = vld [vmem:[#allocation2 + $0x160] sm:$0xff]
    %v258 = vld [vmem:[#allocation2 + $0x168] sm:$0xff]
    %v259 = vld [vmem:[#allocation2 + $0x170] sm:$0xff]
    %v260 = vld [vmem:[#allocation2 + $0x178] sm:$0xff]
    %v261 = vld [vmem:[#allocation2 + $0x180] sm:$0xff]
    %v262 = vld [vmem:[#allocation2 + $0x188] sm:$0xff]
    %v263 = vld [vmem:[#allocation2 + $0x190] sm:$0xff]
    %v264 = vld [vmem:[#allocation2 + $0x198] sm:$0xff]
    %v265 = vld [vmem:[#allocation2 + $0x1a0] sm:$0xff]
    %v266 = vld [vmem:[#allocation2 + $0x1a8] sm:$0xff]
    %v267 = vld [vmem:[#allocation2 + $0x1b0] sm:$0xff]
    %v268 = vld [vmem:[#allocation2 + $0x1b8] sm:$0xff]
    %v269 = vld [vmem:[#allocation2 + $0x1c0] sm:$0xff]
    %v270 = vld [vmem:[#allocation2 + $0x1c8] sm:$0xff]
    %v271 = vld [vmem:[#allocation2 + $0x1d0] sm:$0xff]
    %v272 = vld [vmem:[#allocation2 + $0x1d8] sm:$0xff]
    %v273 = vld [vmem:[#allocation2 + $0x1e0] sm:$0xff]
    %v274 = vld [vmem:[#allocation2 + $0x1e8] sm:$0xff]
    %v275 = vld [vmem:[#allocation2 + $0x1f0] sm:$0xff]
    %v276 = vld [vmem:[#allocation2 + $0x1f8] sm:$0xff]
    %v277 = vpack.c.bf16 %v182, %v181
    %v278 = vpack.c.bf16 %v184, %v183
    %v279 = vpack.c.bf16 %v186, %v185
    %v280 = vpack.c.bf16 %v188, %v187
    %v281 = vpack.c.bf16 %v190, %v189
    %v282 = vpack.c.bf16 %v192, %v191
    %v283 = vpack.c.bf16 %v194, %v193
    %v284 = vpack.c.bf16 %v196, %v195
    %v285 = vpack.c.bf16 %v198, %v197
    %v286 = vpack.c.bf16 %v200, %v199
    %v287 = vpack.c.bf16 %v202, %v201
    %v288 = vpack.c.bf16 %v204, %v203
    %v289 = vpack.c.bf16 %v206, %v205
    %v290 = vpack.c.bf16 %v208, %v207
    %v291 = vpack.c.bf16 %v210, %v209
    %v292 = vpack.c.bf16 %v212, %v211
    %v293 = vld [vmem:[%s2] sm:$0xff]
    %v294 = vld [vmem:[%s2 + $0x8] sm:$0xff]
    %v295 = vld [vmem:[%s2 + $0x10] sm:$0xff]
    %v296 = vld [vmem:[%s2 + $0x18] sm:$0xff]
    %v297 = vld [vmem:[%s2 + $0x20] sm:$0xff]
    %v298 = vld [vmem:[%s2 + $0x28] sm:$0xff]
    %v299 = vld [vmem:[%s2 + $0x30] sm:$0xff]
    %v300 = vld [vmem:[%s2 + $0x38] sm:$0xff]
    %v301 = vld [vmem:[%s2 + $0x40] sm:$0xff]
    %v302 = vld [vmem:[%s2 + $0x48] sm:$0xff]
    %v303 = vld [vmem:[%s2 + $0x50] sm:$0xff]
    %v304 = vld [vmem:[%s2 + $0x58] sm:$0xff]
    %v305 = vld [vmem:[%s2 + $0x60] sm:$0xff]
    %v306 = vld [vmem:[%s2 + $0x68] sm:$0xff]
    %v307 = vld [vmem:[%s2 + $0x70] sm:$0xff]
    %v308 = vld [vmem:[%s2 + $0x78] sm:$0xff]
    %v309 = vld [vmem:[%s2 + $0x80] sm:$0xff]
    %v310 = vld [vmem:[%s2 + $0x88] sm:$0xff]
    %v311 = vld [vmem:[%s2 + $0x90] sm:$0xff]
    %v312 = vld [vmem:[%s2 + $0x98] sm:$0xff]
    %v313 = vld [vmem:[%s2 + $0xa0] sm:$0xff]
    %v314 = vld [vmem:[%s2 + $0xa8] sm:$0xff]
    %v315 = vld [vmem:[%s2 + $0xb0] sm:$0xff]
    %v316 = vld [vmem:[%s2 + $0xb8] sm:$0xff]
    %v317 = vld [vmem:[%s2 + $0xc0] sm:$0xff]
    %v318 = vld [vmem:[%s2 + $0xc8] sm:$0xff]
    %v319 = vld [vmem:[%s2 + $0xd0] sm:$0xff]
    %v320 = vld [vmem:[%s2 + $0xd8] sm:$0xff]
    %v321 = vld [vmem:[%s2 + $0xe0] sm:$0xff]
    %v322 = vld [vmem:[%s2 + $0xe8] sm:$0xff]
    %v323 = vld [vmem:[%s2 + $0xf0] sm:$0xff]
    %v324 = vld [vmem:[%s2 + $0xf8] sm:$0xff]
    %v325 = vpack.c.bf16 %v295, %v293
    %v326 = vpack.c.bf16 %v296, %v294
    %v327 = vpack.c.bf16 %v299, %v297
    %v328 = vpack.c.bf16 %v300, %v298
    %v329 = vpack.c.bf16 %v303, %v301
    %v330 = vpack.c.bf16 %v304, %v302
    %v331 = vpack.c.bf16 %v307, %v305
    %v332 = vpack.c.bf16 %v308, %v306
    %v333 = vpack.c.bf16 %v311, %v309
    %v334 = vpack.c.bf16 %v312, %v310
    %v335 = vpack.c.bf16 %v315, %v313
    %v336 = vpack.c.bf16 %v316, %v314
    %v337 = vpack.c.bf16 %v319, %v317
    %v338 = vpack.c.bf16 %v320, %v318
    %v339 = vpack.c.bf16 %v323, %v321
    %v340 = vpack.c.bf16 %v324, %v322
    %341 = vmatpush.bf16.msra.mxu0 %v339
    %342 = vmatpush.bf16.msra.mxu0 %v337
    %343 = vmatpush.bf16.msra.mxu0 %v335
    %344 = vmatpush.bf16.msra.mxu0 %v333
    %345 = vmatpush.bf16.msra.mxu0 %v331
    %346 = vmatpush.bf16.msra.mxu0 %v329
    %347 = vmatpush.bf16.msra.mxu0 %v327
    %348 = vmatpush.bf16.msra.mxu0 %v325
    %349 = vmatmul.bf16.gmra.mxu0 %v277
    %v350 = vpop.f32.mrf.mxu0
    %v351 = vadd.f32 0.0, %v350
    %v352 = vpop.f32.mrf.mxu0
    %v353 = vadd.f32 0.0, %v352
    %354 = vmatmul.bf16.gmra.mxu0 %v278
    %v355 = vpop.f32.mrf.mxu0
    %v356 = vadd.f32 0.0, %v355
    %v357 = vpop.f32.mrf.mxu0
    %v358 = vadd.f32 0.0, %v357
    %359 = vmatmul.bf16.gmra.mxu0 %v279
    %v360 = vpop.f32.mrf.mxu0
    %v361 = vadd.f32 0.0, %v360
    %v362 = vpop.f32.mrf.mxu0
    %v363 = vadd.f32 0.0, %v362
    %364 = vmatmul.bf16.gmra.mxu0 %v280
    %v365 = vpop.f32.mrf.mxu0
    %v366 = vadd.f32 0.0, %v365
    %v367 = vpop.f32.mrf.mxu0
    %v368 = vadd.f32 0.0, %v367
    %369 = vmatmul.bf16.gmra.mxu0 %v281
    %v370 = vpop.f32.mrf.mxu0
    %v371 = vadd.f32 0.0, %v370
    %v372 = vpop.f32.mrf.mxu0
    %v373 = vadd.f32 0.0, %v372
    %374 = vmatmul.bf16.gmra.mxu0 %v282
    %v375 = vpop.f32.mrf.mxu0
    %v376 = vadd.f32 0.0, %v375
    %v377 = vpop.f32.mrf.mxu0
    %v378 = vadd.f32 0.0, %v377
    %379 = vmatmul.bf16.gmra.mxu0 %v283
    %v380 = vpop.f32.mrf.mxu0
    %v381 = vadd.f32 0.0, %v380
    %v382 = vpop.f32.mrf.mxu0
    %v383 = vadd.f32 0.0, %v382
    %384 = vmatmul.bf16.gmra.mxu0 %v284
    %v385 = vpop.f32.mrf.mxu0
    %v386 = vadd.f32 0.0, %v385
    %v387 = vpop.f32.mrf.mxu0
    %v388 = vadd.f32 0.0, %v387
    %389 = vmatmul.bf16.gmra.mxu0 %v285
    %v390 = vpop.f32.mrf.mxu0
    %v391 = vadd.f32 0.0, %v390
    %v392 = vpop.f32.mrf.mxu0
    %v393 = vadd.f32 0.0, %v392
    %394 = vmatmul.bf16.gmra.mxu0 %v286
    %v395 = vpop.f32.mrf.mxu0
    %v396 = vadd.f32 0.0, %v395
    %v397 = vpop.f32.mrf.mxu0
    %v398 = vadd.f32 0.0, %v397
    %399 = vmatmul.bf16.gmra.mxu0 %v287
    %v400 = vpop.f32.mrf.mxu0
    %v401 = vadd.f32 0.0, %v400
    %v402 = vpop.f32.mrf.mxu0
    %v403 = vadd.f32 0.0, %v402
    %404 = vmatmul.bf16.gmra.mxu0 %v288
    %v405 = vpop.f32.mrf.mxu0
    %v406 = vadd.f32 0.0, %v405
    %v407 = vpop.f32.mrf.mxu0
    %v408 = vadd.f32 0.0, %v407
    %409 = vmatmul.bf16.gmra.mxu0 %v289
    %v410 = vpop.f32.mrf.mxu0
    %v411 = vadd.f32 0.0, %v410
    %v412 = vpop.f32.mrf.mxu0
    %v413 = vadd.f32 0.0, %v412
    %414 = vmatmul.bf16.gmra.mxu0 %v290
    %v415 = vpop.f32.mrf.mxu0
    %v416 = vadd.f32 0.0, %v415
    %v417 = vpop.f32.mrf.mxu0
    %v418 = vadd.f32 0.0, %v417
    %419 = vmatmul.bf16.gmra.mxu0 %v291
    %v420 = vpop.f32.mrf.mxu0
    %v421 = vadd.f32 0.0, %v420
    %v422 = vpop.f32.mrf.mxu0
    %v423 = vadd.f32 0.0, %v422
    %424 = vmatmul.bf16.gmra.mxu0 %v292
    %v425 = vpop.f32.mrf.mxu0
    %v426 = vadd.f32 0.0, %v425
    %v427 = vpop.f32.mrf.mxu0
    %v428 = vadd.f32 0.0, %v427
    %429 = vdwg.mxu0
    %430 = vmatpush.bf16.msra.mxu0 %v340
    %431 = vmatpush.bf16.msra.mxu0 %v338
    %432 = vmatpush.bf16.msra.mxu0 %v336
    %433 = vmatpush.bf16.msra.mxu0 %v334
    %434 = vmatpush.bf16.msra.mxu0 %v332
    %435 = vmatpush.bf16.msra.mxu0 %v330
    %436 = vmatpush.bf16.msra.mxu0 %v328
    %437 = vmatpush.bf16.msra.mxu0 %v326
    %438 = vmatmul.bf16.gmra.mxu0 %v277
    %v439 = vpop.f32.mrf.mxu0
    %v440 = vadd.f32 0.0, %v439
    %v441 = vpop.f32.mrf.mxu0
    %v442 = vadd.f32 0.0, %v441
    %443 = vmatmul.bf16.gmra.mxu0 %v278
    %v444 = vpop.f32.mrf.mxu0
    %v445 = vadd.f32 0.0, %v444
    %v446 = vpop.f32.mrf.mxu0
    %v447 = vadd.f32 0.0, %v446
    %448 = vmatmul.bf16.gmra.mxu0 %v279
    %v449 = vpop.f32.mrf.mxu0
    %v450 = vadd.f32 0.0, %v449
    %v451 = vpop.f32.mrf.mxu0
    %v452 = vadd.f32 0.0, %v451
    %453 = vmatmul.bf16.gmra.mxu0 %v280
    %v454 = vpop.f32.mrf.mxu0
    %v455 = vadd.f32 0.0, %v454
    %v456 = vpop.f32.mrf.mxu0
    %v457 = vadd.f32 0.0, %v456
    %458 = vmatmul.bf16.gmra.mxu0 %v281
    %v459 = vpop.f32.mrf.mxu0
    %v460 = vadd.f32 0.0, %v459
    %v461 = vpop.f32.mrf.mxu0
    %v462 = vadd.f32 0.0, %v461
    %463 = vmatmul.bf16.gmra.mxu0 %v282
    %v464 = vpop.f32.mrf.mxu0
    %v465 = vadd.f32 0.0, %v464
    %v466 = vpop.f32.mrf.mxu0
    %v467 = vadd.f32 0.0, %v466
    %468 = vmatmul.bf16.gmra.mxu0 %v283
    %v469 = vpop.f32.mrf.mxu0
    %v470 = vadd.f32 0.0, %v469
    %v471 = vpop.f32.mrf.mxu0
    %v472 = vadd.f32 0.0, %v471
    %473 = vmatmul.bf16.gmra.mxu0 %v284
    %v474 = vpop.f32.mrf.mxu0
    %v475 = vadd.f32 0.0, %v474
    %v476 = vpop.f32.mrf.mxu0
    %v477 = vadd.f32 0.0, %v476
    %478 = vmatmul.bf16.gmra.mxu0 %v285
    %v479 = vpop.f32.mrf.mxu0
    %v480 = vadd.f32 0.0, %v479
    %v481 = vpop.f32.mrf.mxu0
    %v482 = vadd.f32 0.0, %v481
    %483 = vmatmul.bf16.gmra.mxu0 %v286
    %v484 = vpop.f32.mrf.mxu0
    %v485 = vadd.f32 0.0, %v484
    %v486 = vpop.f32.mrf.mxu0
    %v487 = vadd.f32 0.0, %v486
    %488 = vmatmul.bf16.gmra.mxu0 %v287
    %v489 = vpop.f32.mrf.mxu0
    %v490 = vadd.f32 0.0, %v489
    %v491 = vpop.f32.mrf.mxu0
    %v492 = vadd.f32 0.0, %v491
    %493 = vmatmul.bf16.gmra.mxu0 %v288
    %v494 = vpop.f32.mrf.mxu0
    %v495 = vadd.f32 0.0, %v494
    %v496 = vpop.f32.mrf.mxu0
    %v497 = vadd.f32 0.0, %v496
    %498 = vmatmul.bf16.gmra.mxu0 %v289
    %v499 = vpop.f32.mrf.mxu0
    %v500 = vadd.f32 0.0, %v499
    %v501 = vpop.f32.mrf.mxu0
    %v502 = vadd.f32 0.0, %v501
    %503 = vmatmul.bf16.gmra.mxu0 %v290
    %v504 = vpop.f32.mrf.mxu0
    %v505 = vadd.f32 0.0, %v504
    %v506 = vpop.f32.mrf.mxu0
    %v507 = vadd.f32 0.0, %v506
    %508 = vmatmul.bf16.gmra.mxu0 %v291
    %v509 = vpop.f32.mrf.mxu0
    %v510 = vadd.f32 0.0, %v509
    %v511 = vpop.f32.mrf.mxu0
    %v512 = vadd.f32 0.0, %v511
    %513 = vmatmul.bf16.gmra.mxu0 %v292
    %v514 = vpop.f32.mrf.mxu0
    %v515 = vadd.f32 0.0, %v514
    %v516 = vpop.f32.mrf.mxu0
    %v517 = vadd.f32 0.0, %v516
    %518 = vdwg.mxu0
    %v519 = vadd.f32 %v213, %v351
    %v520 = vadd.f32 %v214, %v440
    %v521 = vadd.f32 %v215, %v353
    %v522 = vadd.f32 %v216, %v442
    %v523 = vadd.f32 %v217, %v356
    %v524 = vadd.f32 %v218, %v445
    %v525 = vadd.f32 %v219, %v358
    %v526 = vadd.f32 %v220, %v447
    %v527 = vadd.f32 %v221, %v361
    %v528 = vadd.f32 %v222, %v450
    %v529 = vadd.f32 %v223, %v363
    %v530 = vadd.f32 %v224, %v452
    %v531 = vadd.f32 %v225, %v366
    %v532 = vadd.f32 %v226, %v455
    %v533 = vadd.f32 %v227, %v368
    %v534 = vadd.f32 %v228, %v457
    %v535 = vadd.f32 %v229, %v371
    %v536 = vadd.f32 %v230, %v460
    %v537 = vadd.f32 %v231, %v373
    %v538 = vadd.f32 %v232, %v462
    %v539 = vadd.f32 %v233, %v376
    %v540 = vadd.f32 %v234, %v465
    %v541 = vadd.f32 %v235, %v378
    %v542 = vadd.f32 %v236, %v467
    %v543 = vadd.f32 %v237, %v381
    %v544 = vadd.f32 %v238, %v470
    %v545 = vadd.f32 %v239, %v383
    %v546 = vadd.f32 %v240, %v472
    %v547 = vadd.f32 %v241, %v386
    %v548 = vadd.f32 %v242, %v475
    %v549 = vadd.f32 %v243, %v388
    %v550 = vadd.f32 %v244, %v477
    %v551 = vadd.f32 %v245, %v391
    %v552 = vadd.f32 %v246, %v480
    %v553 = vadd.f32 %v247, %v393
    %v554 = vadd.f32 %v248, %v482
    %v555 = vadd.f32 %v249, %v396
    %v556 = vadd.f32 %v250, %v485
    %v557 = vadd.f32 %v251, %v398
    %v558 = vadd.f32 %v252, %v487
    %v559 = vadd.f32 %v253, %v401
    %v560 = vadd.f32 %v254, %v490
    %v561 = vadd.f32 %v255, %v403
    %v562 = vadd.f32 %v256, %v492
    %v563 = vadd.f32 %v257, %v406
    %v564 = vadd.f32 %v258, %v495
    %v565 = vadd.f32 %v259, %v408
    %v566 = vadd.f32 %v260, %v497
    %v567 = vadd.f32 %v261, %v411
    %v568 = vadd.f32 %v262, %v500
    %v569 = vadd.f32 %v263, %v413
    %v570 = vadd.f32 %v264, %v502
    %v571 = vadd.f32 %v265, %v416
    %v572 = vadd.f32 %v266, %v505
    %v573 = vadd.f32 %v267, %v418
    %v574 = vadd.f32 %v268, %v507
    %v575 = vadd.f32 %v269, %v421
    %v576 = vadd.f32 %v270, %v510
    %v577 = vadd.f32 %v271, %v423
    %v578 = vadd.f32 %v272, %v512
    %v579 = vadd.f32 %v273, %v426
    %v580 = vadd.f32 %v274, %v515
    %v581 = vadd.f32 %v275, %v428
    %v582 = vadd.f32 %v276, %v517
    %583 = vst [vmem:[#allocation2] sm:$0xff] %v519
    %584 = vst [vmem:[#allocation2 + $0x8] sm:$0xff] %v520
    %585 = vst [vmem:[#allocation2 + $0x10] sm:$0xff] %v521
    %586 = vst [vmem:[#allocation2 + $0x18] sm:$0xff] %v522
    %587 = vst [vmem:[#allocation2 + $0x20] sm:$0xff] %v523
    %588 = vst [vmem:[#allocation2 + $0x28] sm:$0xff] %v524
    %589 = vst [vmem:[#allocation2 + $0x30] sm:$0xff] %v525
    %590 = vst [vmem:[#allocation2 + $0x38] sm:$0xff] %v526
    %591 = vst [vmem:[#allocation2 + $0x40] sm:$0xff] %v527
    %592 = vst [vmem:[#allocation2 + $0x48] sm:$0xff] %v528
    %593 = vst [vmem:[#allocation2 + $0x50] sm:$0xff] %v529
    %594 = vst [vmem:[#allocation2 + $0x58] sm:$0xff] %v530
    %595 = vst [vmem:[#allocation2 + $0x60] sm:$0xff] %v531
    %596 = vst [vmem:[#allocation2 + $0x68] sm:$0xff] %v532
    %597 = vst [vmem:[#allocation2 + $0x70] sm:$0xff] %v533
    %598 = vst [vmem:[#allocation2 + $0x78] sm:$0xff] %v534
    %599 = vst [vmem:[#allocation2 + $0x80] sm:$0xff] %v535
    %600 = vst [vmem:[#allocation2 + $0x88] sm:$0xff] %v536
    %601 = vst [vmem:[#allocation2 + $0x90] sm:$0xff] %v537
    %602 = vst [vmem:[#allocation2 + $0x98] sm:$0xff] %v538
    %603 = vst [vmem:[#allocation2 + $0xa0] sm:$0xff] %v539
    %604 = vst [vmem:[#allocation2 + $0xa8] sm:$0xff] %v540
    %605 = vst [vmem:[#allocation2 + $0xb0] sm:$0xff] %v541
    %606 = vst [vmem:[#allocation2 + $0xb8] sm:$0xff] %v542
    %607 = vst [vmem:[#allocation2 + $0xc0] sm:$0xff] %v543
    %608 = vst [vmem:[#allocation2 + $0xc8] sm:$0xff] %v544
    %609 = vst [vmem:[#allocation2 + $0xd0] sm:$0xff] %v545
    %610 = vst [vmem:[#allocation2 + $0xd8] sm:$0xff] %v546
    %611 = vst [vmem:[#allocation2 + $0xe0] sm:$0xff] %v547
    %612 = vst [vmem:[#allocation2 + $0xe8] sm:$0xff] %v548
    %613 = vst [vmem:[#allocation2 + $0xf0] sm:$0xff] %v549
    %614 = vst [vmem:[#allocation2 + $0xf8] sm:$0xff] %v550
    %615 = vst [vmem:[#allocation2 + $0x100] sm:$0xff] %v551
    %616 = vst [vmem:[#allocation2 + $0x108] sm:$0xff] %v552
    %617 = vst [vmem:[#allocation2 + $0x110] sm:$0xff] %v553
    %618 = vst [vmem:[#allocation2 + $0x118] sm:$0xff] %v554
    %619 = vst [vmem:[#allocation2 + $0x120] sm:$0xff] %v555
    %620 = vst [vmem:[#allocation2 + $0x128] sm:$0xff] %v556
    %621 = vst [vmem:[#allocation2 + $0x130] sm:$0xff] %v557
    %622 = vst [vmem:[#allocation2 + $0x138] sm:$0xff] %v558
    %623 = vst [vmem:[#allocation2 + $0x140] sm:$0xff] %v559
    %624 = vst [vmem:[#allocation2 + $0x148] sm:$0xff] %v560
    %625 = vst [vmem:[#allocation2 + $0x150] sm:$0xff] %v561
    %626 = vst [vmem:[#allocation2 + $0x158] sm:$0xff] %v562
    %627 = vst [vmem:[#allocation2 + $0x160] sm:$0xff] %v563
    %628 = vst [vmem:[#allocation2 + $0x168] sm:$0xff] %v564
    %629 = vst [vmem:[#allocation2 + $0x170] sm:$0xff] %v565
    %630 = vst [vmem:[#allocation2 + $0x178] sm:$0xff] %v566
    %631 = vst [vmem:[#allocation2 + $0x180] sm:$0xff] %v567
    %632 = vst [vmem:[#allocation2 + $0x188] sm:$0xff] %v568
    %633 = vst [vmem:[#allocation2 + $0x190] sm:$0xff] %v569
    %634 = vst [vmem:[#allocation2 + $0x198] sm:$0xff] %v570
    %635 = vst [vmem:[#allocation2 + $0x1a0] sm:$0xff] %v571
    %636 = vst [vmem:[#allocation2 + $0x1a8] sm:$0xff] %v572
    %637 = vst [vmem:[#allocation2 + $0x1b0] sm:$0xff] %v573
    %638 = vst [vmem:[#allocation2 + $0x1b8] sm:$0xff] %v574
    %639 = vst [vmem:[#allocation2 + $0x1c0] sm:$0xff] %v575
    %640 = vst [vmem:[#allocation2 + $0x1c8] sm:$0xff] %v576
    %641 = vst [vmem:[#allocation2 + $0x1d0] sm:$0xff] %v577
    %642 = vst [vmem:[#allocation2 + $0x1d8] sm:$0xff] %v578
    %643 = vst [vmem:[#allocation2 + $0x1e0] sm:$0xff] %v579
    %644 = vst [vmem:[#allocation2 + $0x1e8] sm:$0xff] %v580
    %645 = vst [vmem:[#allocation2 + $0x1f0] sm:$0xff] %v581
    %646 = vst [vmem:[#allocation2 + $0x1f8] sm:$0xff] %v582
    // Predicated region
    $region30: #{_lambda_.3} parent=1 // pred_check
      %p647 = pneg %p49
    $region31: #{_lambda_.3} parent=1 // pred_check_branch
      %649 = sbr.rel (%p647) target = $region33
    $region32: #{_lambda_.3} parent=1 // pred_region
      %v650 = vld [vmem:[#allocation2] sm:$0xff]
      %v651 = vld [vmem:[#allocation2 + $0x8] sm:$0xff]
      %v652 = vld [vmem:[#allocation2 + $0x10] sm:$0xff]
      %v653 = vld [vmem:[#allocation2 + $0x18] sm:$0xff]
      %v654 = vld [vmem:[#allocation2 + $0x20] sm:$0xff]
      %v655 = vld [vmem:[#allocation2 + $0x28] sm:$0xff]
      %v656 = vld [vmem:[#allocation2 + $0x30] sm:$0xff]
      %v657 = vld [vmem:[#allocation2 + $0x38] sm:$0xff]
      %v658 = vld [vmem:[#allocation2 + $0x40] sm:$0xff]
      %v659 = vld [vmem:[#allocation2 + $0x48] sm:$0xff]
      %v660 = vld [vmem:[#allocation2 + $0x50] sm:$0xff]
      %v661 = vld [vmem:[#allocation2 + $0x58] sm:$0xff]
      %v662 = vld [vmem:[#allocation2 + $0x60] sm:$0xff]
      %v663 = vld [vmem:[#allocation2 + $0x68] sm:$0xff]
      %v664 = vld [vmem:[#allocation2 + $0x70] sm:$0xff]
      %v665 = vld [vmem:[#allocation2 + $0x78] sm:$0xff]
      %v666 = vld [vmem:[#allocation2 + $0x80] sm:$0xff]
      %v667 = vld [vmem:[#allocation2 + $0x88] sm:$0xff]
      %v668 = vld [vmem:[#allocation2 + $0x90] sm:$0xff]
      %v669 = vld [vmem:[#allocation2 + $0x98] sm:$0xff]
      %v670 = vld [vmem:[#allocation2 + $0xa0] sm:$0xff]
      %v671 = vld [vmem:[#allocation2 + $0xa8] sm:$0xff]
      %v672 = vld [vmem:[#allocation2 + $0xb0] sm:$0xff]
      %v673 = vld [vmem:[#allocation2 + $0xb8] sm:$0xff]
      %v674 = vld [vmem:[#allocation2 + $0xc0] sm:$0xff]
      %v675 = vld [vmem:[#allocation2 + $0xc8] sm:$0xff]
      %v676 = vld [vmem:[#allocation2 + $0xd0] sm:$0xff]
      %v677 = vld [vmem:[#allocation2 + $0xd8] sm:$0xff]
      %v678 = vld [vmem:[#allocation2 + $0xe0] sm:$0xff]
      %v679 = vld [vmem:[#allocation2 + $0xe8] sm:$0xff]
      %v680 = vld [vmem:[#allocation2 + $0xf0] sm:$0xff]
      %v681 = vld [vmem:[#allocation2 + $0xf8] sm:$0xff]
      %v682 = vld [vmem:[#allocation2 + $0x100] sm:$0xff]
      %v683 = vld [vmem:[#allocation2 + $0x108] sm:$0xff]
      %v684 = vld [vmem:[#allocation2 + $0x110] sm:$0xff]
      %v685 = vld [vmem:[#allocation2 + $0x118] sm:$0xff]
      %v686 = vld [vmem:[#allocation2 + $0x120] sm:$0xff]
      %v687 = vld [vmem:[#allocation2 + $0x128] sm:$0xff]
      %v688 = vld [vmem:[#allocation2 + $0x130] sm:$0xff]
      %v689 = vld [vmem:[#allocation2 + $0x138] sm:$0xff]
      %v690 = vld [vmem:[#allocation2 + $0x140] sm:$0xff]
      %v691 = vld [vmem:[#allocation2 + $0x148] sm:$0xff]
      %v692 = vld [vmem:[#allocation2 + $0x150] sm:$0xff]
      %v693 = vld [vmem:[#allocation2 + $0x158] sm:$0xff]
      %v694 = vld [vmem:[#allocation2 + $0x160] sm:$0xff]
      %v695 = vld [vmem:[#allocation2 + $0x168] sm:$0xff]
      %v696 = vld [vmem:[#allocation2 + $0x170] sm:$0xff]
      %v697 = vld [vmem:[#allocation2 + $0x178] sm:$0xff]
      %v698 = vld [vmem:[#allocation2 + $0x180] sm:$0xff]
      %v699 = vld [vmem:[#allocation2 + $0x188] sm:$0xff]
      %v700 = vld [vmem:[#allocation2 + $0x190] sm:$0xff]
      %v701 = vld [vmem:[#allocation2 + $0x198] sm:$0xff]
      %v702 = vld [vmem:[#allocation2 + $0x1a0] sm:$0xff]
      %v703 = vld [vmem:[#allocation2 + $0x1a8] sm:$0xff]
      %v704 = vld [vmem:[#allocation2 + $0x1b0] sm:$0xff]
      %v705 = vld [vmem:[#allocation2 + $0x1b8] sm:$0xff]
      %v706 = vld [vmem:[#allocation2 + $0x1c0] sm:$0xff]
      %v707 = vld [vmem:[#allocation2 + $0x1c8] sm:$0xff]
      %v708 = vld [vmem:[#allocation2 + $0x1d0] sm:$0xff]
      %v709 = vld [vmem:[#allocation2 + $0x1d8] sm:$0xff]
      %v710 = vld [vmem:[#allocation2 + $0x1e0] sm:$0xff]
      %v711 = vld [vmem:[#allocation2 + $0x1e8] sm:$0xff]
      %v712 = vld [vmem:[#allocation2 + $0x1f0] sm:$0xff]
      %v713 = vld [vmem:[#allocation2 + $0x1f8] sm:$0xff]
      %v714 = vld [vmem:[%s3] sm:$0x3]
      %v716 = vperm.slane %v714, 0
      %v717 = vperm.slane %v714, 1
      %v720 = vadd.f32 %v650, %v716
      %v721 = vadd.f32 %v651, %v717
      %v722 = vadd.f32 %v652, %v716
      %v723 = vadd.f32 %v653, %v717
      %v724 = vadd.f32 %v654, %v716
      %v725 = vadd.f32 %v655, %v717
      %v726 = vadd.f32 %v656, %v716
      %v727 = vadd.f32 %v657, %v717
      %v728 = vadd.f32 %v658, %v716
      %v729 = vadd.f32 %v659, %v717
      %v730 = vadd.f32 %v660, %v716
      %v731 = vadd.f32 %v661, %v717
      %v732 = vadd.f32 %v662, %v716
      %v733 = vadd.f32 %v663, %v717
      %v734 = vadd.f32 %v664, %v716
      %v735 = vadd.f32 %v665, %v717
      %v736 = vadd.f32 %v666, %v716
      %v737 = vadd.f32 %v667, %v717
      %v738 = vadd.f32 %v668, %v716
      %v739 = vadd.f32 %v669, %v717
      %v740 = vadd.f32 %v670, %v716
      %v741 = vadd.f32 %v671, %v717
      %v742 = vadd.f32 %v672, %v716
      %v743 = vadd.f32 %v673, %v717
      %v744 = vadd.f32 %v674, %v716
      %v745 = vadd.f32 %v675, %v717
      %v746 = vadd.f32 %v676, %v716
      %v747 = vadd.f32 %v677, %v717
      %v748 = vadd.f32 %v678, %v716
      %v749 = vadd.f32 %v679, %v717
      %v750 = vadd.f32 %v680, %v716
      %v751 = vadd.f32 %v681, %v717
      %v752 = vadd.f32 %v682, %v716
      %v753 = vadd.f32 %v683, %v717
      %v754 = vadd.f32 %v684, %v716
      %v755 = vadd.f32 %v685, %v717
      %v756 = vadd.f32 %v686, %v716
      %v757 = vadd.f32 %v687, %v717
      %v758 = vadd.f32 %v688, %v716
      %v759 = vadd.f32 %v689, %v717
      %v760 = vadd.f32 %v690, %v716
      %v761 = vadd.f32 %v691, %v717
      %v762 = vadd.f32 %v692, %v716
      %v763 = vadd.f32 %v693, %v717
      %v764 = vadd.f32 %v694, %v716
      %v765 = vadd.f32 %v695, %v717
      %v766 = vadd.f32 %v696, %v716
      %v767 = vadd.f32 %v697, %v717
      %v768 = vadd.f32 %v698, %v716
      %v769 = vadd.f32 %v699, %v717
      %v770 = vadd.f32 %v700, %v716
      %v771 = vadd.f32 %v701, %v717
      %v772 = vadd.f32 %v702, %v716
      %v773 = vadd.f32 %v703, %v717
      %v774 = vadd.f32 %v704, %v716
      %v775 = vadd.f32 %v705, %v717
      %v776 = vadd.f32 %v706, %v716
      %v777 = vadd.f32 %v707, %v717
      %v778 = vadd.f32 %v708, %v716
      %v779 = vadd.f32 %v709, %v717
      %v780 = vadd.f32 %v710, %v716
      %v781 = vadd.f32 %v711, %v717
      %v782 = vadd.f32 %v712, %v716
      %v783 = vadd.f32 %v713, %v717
      %v784 = vmax.f32 %v720, 0.0
      %v785 = vmax.f32 %v721, 0.0
      %v786 = vmax.f32 %v722, 0.0
      %v787 = vmax.f32 %v723, 0.0
      %v788 = vmax.f32 %v724, 0.0
      %v789 = vmax.f32 %v725, 0.0
      %v790 = vmax.f32 %v726, 0.0
      %v791 = vmax.f32 %v727, 0.0
      %v792 = vmax.f32 %v728, 0.0
      %v793 = vmax.f32 %v729, 0.0
      %v794 = vmax.f32 %v730, 0.0
      %v795 = vmax.f32 %v731, 0.0
      %v796 = vmax.f32 %v732, 0.0
      %v797 = vmax.f32 %v733, 0.0
      %v798 = vmax.f32 %v734, 0.0
      %v799 = vmax.f32 %v735, 0.0
      %v800 = vmax.f32 %v736, 0.0
      %v801 = vmax.f32 %v737, 0.0
      %v802 = vmax.f32 %v738, 0.0
      %v803 = vmax.f32 %v739, 0.0
      %v804 = vmax.f32 %v740, 0.0
      %v805 = vmax.f32 %v741, 0.0
      %v806 = vmax.f32 %v742, 0.0
      %v807 = vmax.f32 %v743, 0.0
      %v808 = vmax.f32 %v744, 0.0
      %v809 = vmax.f32 %v745, 0.0
      %v810 = vmax.f32 %v746, 0.0
      %v811 = vmax.f32 %v747, 0.0
      %v812 = vmax.f32 %v748, 0.0
      %v813 = vmax.f32 %v749, 0.0
      %v814 = vmax.f32 %v750, 0.0
      %v815 = vmax.f32 %v751, 0.0
      %v816 = vmax.f32 %v752, 0.0
      %v817 = vmax.f32 %v753, 0.0
      %v818 = vmax.f32 %v754, 0.0
      %v819 = vmax.f32 %v755, 0.0
      %v820 = vmax.f32 %v756, 0.0
      %v821 = vmax.f32 %v757, 0.0
      %v822 = vmax.f32 %v758, 0.0
      %v823 = vmax.f32 %v759, 0.0
      %v824 = vmax.f32 %v760, 0.0
      %v825 = vmax.f32 %v761, 0.0
      %v826 = vmax.f32 %v762, 0.0
      %v827 = vmax.f32 %v763, 0.0
      %v828 = vmax.f32 %v764, 0.0
      %v829 = vmax.f32 %v765, 0.0
      %v830 = vmax.f32 %v766, 0.0
      %v831 = vmax.f32 %v767, 0.0
      %v832 = vmax.f32 %v768, 0.0
      %v833 = vmax.f32 %v769, 0.0
      %v834 = vmax.f32 %v770, 0.0
      %v835 = vmax.f32 %v771, 0.0
      %v836 = vmax.f32 %v772, 0.0
      %v837 = vmax.f32 %v773, 0.0
      %v838 = vmax.f32 %v774, 0.0
      %v839 = vmax.f32 %v775, 0.0
      %v840 = vmax.f32 %v776, 0.0
      %v841 = vmax.f32 %v777, 0.0
      %v842 = vmax.f32 %v778, 0.0
      %v843 = vmax.f32 %v779, 0.0
      %v844 = vmax.f32 %v780, 0.0
      %v845 = vmax.f32 %v781, 0.0
      %v846 = vmax.f32 %v782, 0.0
      %v847 = vmax.f32 %v783, 0.0
      %848 = vst [vmem:[%s4] sm:$0xff] %v784
      %849 = vst [vmem:[%s4 + $0x8] sm:$0xff] %v785
      %850 = vst [vmem:[%s4 + $0x10] sm:$0xff] %v786
      %851 = vst [vmem:[%s4 + $0x18] sm:$0xff] %v787
      %852 = vst [vmem:[%s4 + $0x20] sm:$0xff] %v788
      %853 = vst [vmem:[%s4 + $0x28] sm:$0xff] %v789
      %854 = vst [vmem:[%s4 + $0x30] sm:$0xff] %v790
      %855 = vst [vmem:[%s4 + $0x38] sm:$0xff] %v791
      %856 = vst [vmem:[%s4 + $0x40] sm:$0xff] %v792
      %857 = vst [vmem:[%s4 + $0x48] sm:$0xff] %v793
      %858 = vst [vmem:[%s4 + $0x50] sm:$0xff] %v794
      %859 = vst [vmem:[%s4 + $0x58] sm:$0xff] %v795
      %860 = vst [vmem:[%s4 + $0x60] sm:$0xff] %v796
      %861 = vst [vmem:[%s4 + $0x68] sm:$0xff] %v797
      %862 = vst [vmem:[%s4 + $0x70] sm:$0xff] %v798
      %863 = vst [vmem:[%s4 + $0x78] sm:$0xff] %v799
      %864 = vst [vmem:[%s4 + $0x80] sm:$0xff] %v800
      %865 = vst [vmem:[%s4 + $0x88] sm:$0xff] %v801
      %866 = vst [vmem:[%s4 + $0x90] sm:$0xff] %v802
      %867 = vst [vmem:[%s4 + $0x98] sm:$0xff] %v803
      %868 = vst [vmem:[%s4 + $0xa0] sm:$0xff] %v804
      %869 = vst [vmem:[%s4 + $0xa8] sm:$0xff] %v805
      %870 = vst [vmem:[%s4 + $0xb0] sm:$0xff] %v806
      %871 = vst [vmem:[%s4 + $0xb8] sm:$0xff] %v807
      %872 = vst [vmem:[%s4 + $0xc0] sm:$0xff] %v808
      %873 = vst [vmem:[%s4 + $0xc8] sm:$0xff] %v809
      %874 = vst [vmem:[%s4 + $0xd0] sm:$0xff] %v810
      %875 = vst [vmem:[%s4 + $0xd8] sm:$0xff] %v811
      %876 = vst [vmem:[%s4 + $0xe0] sm:$0xff] %v812
      %877 = vst [vmem:[%s4 + $0xe8] sm:$0xff] %v813
      %878 = vst [vmem:[%s4 + $0xf0] sm:$0xff] %v814
      %879 = vst [vmem:[%s4 + $0xf8] sm:$0xff] %v815
      %880 = vst [vmem:[%s4 + $0x100] sm:$0xff] %v816
      %881 = vst [vmem:[%s4 + $0x108] sm:$0xff] %v817
      %882 = vst [vmem:[%s4 + $0x110] sm:$0xff] %v818
      %883 = vst [vmem:[%s4 + $0x118] sm:$0xff] %v819
      %884 = vst [vmem:[%s4 + $0x120] sm:$0xff] %v820
      %885 = vst [vmem:[%s4 + $0x128] sm:$0xff] %v821
      %886 = vst [vmem:[%s4 + $0x130] sm:$0xff] %v822
      %887 = vst [vmem:[%s4 + $0x138] sm:$0xff] %v823
      %888 = vst [vmem:[%s4 + $0x140] sm:$0xff] %v824
      %889 = vst [vmem:[%s4 + $0x148] sm:$0xff] %v825
      %890 = vst [vmem:[%s4 + $0x150] sm:$0xff] %v826
      %891 = vst [vmem:[%s4 + $0x158] sm:$0xff] %v827
      %892 = vst [vmem:[%s4 + $0x160] sm:$0xff] %v828
      %893 = vst [vmem:[%s4 + $0x168] sm:$0xff] %v829
      %894 = vst [vmem:[%s4 + $0x170] sm:$0xff] %v830
      %895 = vst [vmem:[%s4 + $0x178] sm:$0xff] %v831
      %896 = vst [vmem:[%s4 + $0x180] sm:$0xff] %v832
      %897 = vst [vmem:[%s4 + $0x188] sm:$0xff] %v833
      %898 = vst [vmem:[%s4 + $0x190] sm:$0xff] %v834
      %899 = vst [vmem:[%s4 + $0x198] sm:$0xff] %v835
      %900 = vst [vmem:[%s4 + $0x1a0] sm:$0xff] %v836
      %901 = vst [vmem:[%s4 + $0x1a8] sm:$0xff] %v837
      %902 = vst [vmem:[%s4 + $0x1b0] sm:$0xff] %v838
      %903 = vst [vmem:[%s4 + $0x1b8] sm:$0xff] %v839
      %904 = vst [vmem:[%s4 + $0x1c0] sm:$0xff] %v840
      %905 = vst [vmem:[%s4 + $0x1c8] sm:$0xff] %v841
      %906 = vst [vmem:[%s4 + $0x1d0] sm:$0xff] %v842
      %907 = vst [vmem:[%s4 + $0x1d8] sm:$0xff] %v843
      %908 = vst [vmem:[%s4 + $0x1e0] sm:$0xff] %v844
      %909 = vst [vmem:[%s4 + $0x1e8] sm:$0xff] %v845
      %910 = vst [vmem:[%s4 + $0x1f0] sm:$0xff] %v846
      %911 = vst [vmem:[%s4 + $0x1f8] sm:$0xff] %v847
    $region33: #{_lambda_.3} parent=1 // pred_fallthru
      _
    // Predicated region
    $region34: #{_lambda_.3} parent=1 // pred_check
      _
    $region35: #{_lambda_.3} parent=1 // pred_check_branch
      %913 = sbr.rel (0) target = $region37
    $region36: #{_lambda_.3} parent=1 // pred_region
      _
    $region37: #{_lambda_.3} parent=1 // pred_fallthru
      _
    // Predicated region
    $region38: #{_lambda_.3} parent=1 // pred_check
      _
    $region39: #{_lambda_.3} parent=1 // pred_check_branch
      %915 = sbr.rel (0) target = $region41
    $region40: #{_lambda_.3} parent=1 // pred_region
      _
    $region41: #{_lambda_.3} parent=1 // pred_fallthru
      _
    %916 = vsyncpa [#allocation4], 1
    %917 = vsyncpa [#allocation6], 1

</llo_original>
